<compile_context>
chip_gen: v7x
topology: tpu7x:2x2x1
jax: 0.10.0
libtpu: 0.0.40
codegen_flags: <defaults>
</compile_context>

<pallas_src>
import math

import numpy as np
import jax
import jax.numpy as jnp
from jax.experimental import pallas as pl
from jax.experimental.pallas import tpu as pltpu

LN_EPS = 1e-5  # PyTorch nn.LayerNorm default eps

# ---------------- problem configuration (matches the module __init__) --------
MODALITY_ORDER = ("rna", "meth")
MODALITY_LATENT_DIMS = {"rna": 16, "meth": 16}
NUM_GENES = 16               # num_nodes / num_genes
GRAPH_FEATURE_DIM = 8
GENE_EMBEDDING_DIM = 8
PATIENT_EMBEDDING_DIM = 16
BATCH = 2
NUM_EDGES = 40

NMOD = len(MODALITY_ORDER)
G4 = GENE_EMBEDDING_DIM * 4                              # 32
G2 = GENE_EMBEDDING_DIM * 2                              # 16
TOTAL_LATENT = sum(MODALITY_LATENT_DIMS.values())        # 32
ENC_INTER = max(16, MODALITY_LATENT_DIMS[MODALITY_ORDER[0]] // 2)   # 16
COMB_DIM = TOTAL_LATENT + GENE_EMBEDDING_DIM             # 40
GC_I1 = (COMB_DIM + PATIENT_EMBEDDING_DIM) // 2          # 28
GC_I2 = PATIENT_EMBEDDING_DIM * 2                        # 32
AGG_I = (PATIENT_EMBEDDING_DIM + PATIENT_EMBEDDING_DIM) // 2        # 16
PD_I = PATIENT_EMBEDDING_DIM * 2                         # 32
REC_I = (COMB_DIM + TOTAL_LATENT) // 2                   # 36
BG = BATCH * NUM_GENES                                   # 32

SLAB_COLS = 128                                          # lane-dense slabs


def _round8(n):
    return ((n + 7) // 8) * 8


# ------------------------- static slab layouts --------------------------------
# name -> (rows, cols)  (param pieces, kernel-ready / pre-fused shapes)
_PARAM_SHAPES = (
    ("conv1_W", GRAPH_FEATURE_DIM, G4), ("conv1_b", 1, G4),
    ("norm1_g", 1, G4), ("norm1_b", 1, G4),
    ("conv2_W", G4, G2), ("conv2_b", 1, G2), ("norm2_g", 1, G2), ("norm2_b", 1, G2),
    ("convo_W", G2, G2), ("convo_b", 1, G2),
    ("enc_EW1", NMOD, NMOD * ENC_INTER), ("enc_b1", 1, NMOD * ENC_INTER),
    ("enc_g1", 1, NMOD * ENC_INTER), ("enc_be1", 1, NMOD * ENC_INTER),
    ("blk_lnM", NMOD * ENC_INTER, NMOD * ENC_INTER),
    ("enc_W2bd", NMOD * ENC_INTER, TOTAL_LATENT), ("enc_b2", 1, TOTAL_LATENT),
    ("gc_W1a", TOTAL_LATENT, GC_I1), ("gc_W1b", GENE_EMBEDDING_DIM, GC_I1),
    ("gc_b1", 1, GC_I1), ("gc_g1", 1, GC_I1), ("gc_be1", 1, GC_I1),
    ("gc_W2", GC_I1, GC_I2), ("gc_b2", 1, GC_I2), ("gc_g2", 1, GC_I2), ("gc_be2", 1, GC_I2),
    ("gc_W3", GC_I2, PATIENT_EMBEDDING_DIM), ("gc_b3", 1, PATIENT_EMBEDDING_DIM),
    ("pool", BATCH, BG),
    ("pa_W1", PATIENT_EMBEDDING_DIM, AGG_I), ("pa_b1", 1, AGG_I),
    ("pa_W2", AGG_I, PATIENT_EMBEDDING_DIM), ("pa_b2", 1, PATIENT_EMBEDDING_DIM),
    ("pd_W1", PATIENT_EMBEDDING_DIM, PD_I), ("pd_b1", 1, PD_I),
    ("pd_g1", 1, PD_I), ("pd_be1", 1, PD_I),
    ("pd_W2", PD_I, TOTAL_LATENT), ("pd_b2", 1, TOTAL_LATENT),
    ("rep_zg", BG, NUM_GENES), ("rep_ctx", BG, BATCH),
    ("rm_W1a", TOTAL_LATENT, REC_I), ("rm_W1b", GENE_EMBEDDING_DIM, REC_I),
    ("rm_b1", 1, REC_I), ("rm_g1", 1, REC_I), ("rm_be1", 1, REC_I),
    ("rm_W2", REC_I, TOTAL_LATENT), ("rm_b2", 1, TOTAL_LATENT),
    ("dec_W1bd", TOTAL_LATENT, NMOD * ENC_INTER), ("dec_b1", 1, NMOD * ENC_INTER),
    ("dec_g1", 1, NMOD * ENC_INTER), ("dec_be1", 1, NMOD * ENC_INTER),
    ("dec_W2bd", NMOD * ENC_INTER, NMOD), ("dec_b2", 1, NMOD),
)

_DATA_SHAPES = (
    ("a_hat", NUM_GENES, NUM_GENES),
    ("graph_x", NUM_GENES, GRAPH_FEATURE_DIM),
    ("omics", BG, NMOD),
)


def _build_layout(shapes):
    layout, rows = {}, 0
    for name, r, c in shapes:
        layout[name] = (rows, r, c)        # (row offset, rows, cols); 8-aligned rows
        rows += _round8(r)
    return layout, _round8(rows)


PARAM_LAYOUT, PARAM_ROWS = _build_layout(_PARAM_SHAPES)
DATA_LAYOUT, DATA_ROWS = _build_layout(_DATA_SHAPES)


def _build_out_cols():
    cols, c = {}, 0
    for name, w in (("omics", NMOD), ("adj", NUM_GENES), ("zp", PATIENT_EMBEDDING_DIM),
                    ("mu", GENE_EMBEDDING_DIM), ("lv", GENE_EMBEDDING_DIM)):
        cols[name] = (c, w)
        c += _round8(w)
    assert c <= SLAB_COLS
    return cols


OUT_COLS = _build_out_cols()
OUT_ROWS = _round8(max(BG, NUM_GENES, BATCH))             # 32


# ------------------------------ fused kernel ---------------------------------
def _joint_fwd_kernel(data_ref, par_ref, out_ref):
    def mm(a, b):
        return jnp.dot(a, b, preferred_element_type=jnp.float32)

    def relu(t):
        return jnp.maximum(t, 0.0)

    def ln(y, g, b):
        m = jnp.mean(y, axis=-1, keepdims=True)
        v = jnp.mean((y - m) ** 2, axis=-1, keepdims=True)
        return (y - m) * jax.lax.rsqrt(v + LN_EPS) * g + b

    def blk_ln(y, blockM, g, b):
        # per-modality LayerNorm over disjoint column blocks, via block-mean matmul
        m = mm(y, blockM)
        v = mm((y - m) ** 2, blockM)
        return (y - m) * jax.lax.rsqrt(v + LN_EPS) * g + b

    def P(name):
        r0, r, c = PARAM_LAYOUT[name]
        return par_ref[r0:r0 + r, :c]

    def D(name):
        r0, r, c = DATA_LAYOUT[name]
        return data_ref[r0:r0 + r, :c]

    a_hat = D("a_hat")                                   # (G, G) gcn-normalized adj
    x = D("graph_x")                                     # (G, F)
    omics = D("omics")                                   # (B*G, NMOD)

    # --- InteractionGraphAutoencoder.encode (eval: dropout=id, z_gene=mu) ---
    # TODO(synk): training-mode Dropout / Gaussian reparameterization noise omitted.
    h = ln(relu(mm(a_hat, mm(x, P("conv1_W"))) + P("conv1_b")),
           P("norm1_g"), P("norm1_b"))
    h = ln(relu(mm(a_hat, mm(h, P("conv2_W"))) + P("conv2_b")),
           P("norm2_g"), P("norm2_b"))
    go = mm(a_hat, mm(h, P("convo_W"))) + P("convo_b")   # (G, 2*ged)
    mu = go[:, :GENE_EMBEDDING_DIM]
    log_var = go[:, GENE_EMBEDDING_DIM:2 * GENE_EMBEDDING_DIM]
    z_gene = mu

    # adjacency reconstruction logits z_gene @ z_gene.T (no transpose needed)
    adj = jax.lax.dot_general(z_gene, z_gene, (((1,), (1,)), ((), ())),
                              preferred_element_type=jnp.float32)

    # --- OmicsProcessor.encode (modalities vectorized) ---
    blockM = P("blk_lnM")
    h1 = blk_ln(relu(mm(omics, P("enc_EW1")) + P("enc_b1")),
                blockM, P("enc_g1"), P("enc_be1"))        # (B*G, NMOD*inter)
    lat = relu(mm(h1, P("enc_W2bd")) + P("enc_b2"))       # (B*G, total_latent)

    zg_exp = mm(P("rep_zg"), z_gene)                      # (B*G, ged) z_gene tiled per batch

    # gene combiner; [lat | zg] concat folded into split-K matmul
    h = ln(relu(mm(lat, P("gc_W1a")) + mm(zg_exp, P("gc_W1b")) + P("gc_b1")),
           P("gc_g1"), P("gc_be1"))
    h = ln(relu(mm(h, P("gc_W2")) + P("gc_b2")), P("gc_g2"), P("gc_be2"))
    gene_reps = relu(mm(h, P("gc_W3")) + P("gc_b3"))      # (B*G, P)

    # mean over genes per patient as pooling matmul  (gene_masks=None path only)
    agg = mm(P("pool"), gene_reps)                        # (B, P)
    z_p = mm(relu(mm(agg, P("pa_W1")) + P("pa_b1")), P("pa_W2")) + P("pa_b2")

    # --- OmicsProcessor.decode ---
    ctx = mm(ln(relu(mm(z_p, P("pd_W1")) + P("pd_b1")), P("pd_g1"), P("pd_be1")),
             P("pd_W2")) + P("pd_b2")                     # (B, total_latent)
    ctx_exp = mm(P("rep_ctx"), ctx)                       # (B*G, total_latent)

    rec = ln(relu(mm(ctx_exp, P("rm_W1a")) + mm(zg_exp, P("rm_W1b")) + P("rm_b1")),
             P("rm_g1"), P("rm_be1"))
    rec = mm(rec, P("rm_W2")) + P("rm_b2")                # (B*G, total_latent)

    d1 = blk_ln(relu(mm(rec, P("dec_W1bd")) + P("dec_b1")),
                blockM, P("dec_g1"), P("dec_be1"))        # (B*G, NMOD*inter)
    omics_rec = jax.nn.sigmoid(mm(d1, P("dec_W2bd")) + P("dec_b2"))   # (B*G, NMOD)

    # --- single lane-dense output slab ---
    out_ref[...] = jnp.zeros(out_ref.shape, out_ref.dtype)
    c0, w = OUT_COLS["omics"]
    out_ref[0:BG, c0:c0 + w] = omics_rec
    c0, w = OUT_COLS["adj"]
    out_ref[0:NUM_GENES, c0:c0 + w] = adj
    c0, w = OUT_COLS["zp"]
    out_ref[0:BATCH, c0:c0 + w] = z_p
    c0, w = OUT_COLS["mu"]
    out_ref[0:NUM_GENES, c0:c0 + w] = mu
    c0, w = OUT_COLS["lv"]
    out_ref[0:NUM_GENES, c0:c0 + w] = log_var


# ------------------------------- GCN adjacency --------------------------------
def build_gcn_norm_adj(edge_index, num_nodes, edge_weight=None):
    """Dense PyG gcn_norm adjacency: D^{-1/2}(A + I)D^{-1/2}.  Hoisted out of the
    fused forward (computed once; plain-JAX glue)."""
    src, dst = edge_index[0], edge_index[1]
    if edge_weight is None:
        edge_weight = jnp.ones(src.shape[0], jnp.float32)
    A = jnp.zeros((num_nodes, num_nodes), jnp.float32)
    A = A.at[dst, src].add(edge_weight)                   # aggregate at target
    A = A + jnp.eye(num_nodes, dtype=jnp.float32)         # self loops, weight 1
    deg = A.sum(axis=1)
    dinv = jnp.where(deg > 0, jax.lax.rsqrt(deg), 0.0)
    return A * dinv[:, None] * dinv[None, :]


# ---------------------------- parameter init / packing ------------------------
def _init_linear(key, fan_in, fan_out):
    kw, kb = jax.random.split(key)
    bound = 1.0 / math.sqrt(fan_in)
    W = jax.random.uniform(kw, (fan_in, fan_out), jnp.float32, -bound, bound)
    b = jax.random.uniform(kb, (1, fan_out), jnp.float32, -bound, bound)
    return np.asarray(W), np.asarray(b)


def _ln_init(d):
    return np.ones((1, d), np.float32), np.zeros((1, d), np.float32)


def init_param_slab(key):
    """Initialize all module parameters and pack them into ONE (PARAM_ROWS, 128)
    f32 slab (kernel-ready shapes; per-modality MLPs expanded / block-diagonal;
    pooling & broadcast-selector matrices baked in)."""
    keys = iter(jax.random.split(key, 64))
    P = {}

    # graph autoencoder
    P["conv1_W"], P["conv1_b"] = _init_linear(next(keys), GRAPH_FEATURE_DIM, G4)
    P["norm1_g"], P["norm1_b"] = _ln_init(G4)
    P["conv2_W"], P["conv2_b"] = _init_linear(next(keys), G4, G2)
    P["norm2_g"], P["norm2_b"] = _ln_init(G2)
    P["convo_W"], P["convo_b"] = _init_linear(next(keys), G2, G2)

    # modality encoders (expanded W1, block-diagonal W2; modality column order
    # matches MODALITY_ORDER and the omics input's last dim)
    EW1 = np.zeros((NMOD, NMOD * ENC_INTER), np.float32)
    b1 = np.zeros((1, NMOD * ENC_INTER), np.float32)
    g1, be1 = _ln_init(NMOD * ENC_INTER)
    W2bd = np.zeros((NMOD * ENC_INTER, TOTAL_LATENT), np.float32)
    b2 = np.zeros((1, TOTAL_LATENT), np.float32)
    col = 0
    for m, mod in enumerate(MODALITY_ORDER):
        ld = MODALITY_LATENT_DIMS[mod]
        W1m, b1m = _init_linear(next(keys), 1, ENC_INTER)
        W2m, b2m = _init_linear(next(keys), ENC_INTER, ld)
        EW1[m, m * ENC_INTER:(m + 1) * ENC_INTER] = W1m[0]
        b1[0, m * ENC_INTER:(m + 1) * ENC_INTER] = b1m[0]
        W2bd[m * ENC_INTER:(m + 1) * ENC_INTER, col:col + ld] = W2m
        b2[0, col:col + ld] = b2m[0]
        col += ld
    P["enc_EW1"], P["enc_b1"], P["enc_g1"], P["enc_be1"] = EW1, b1, g1, be1
    P["enc_W2bd"], P["enc_b2"] = W2bd, b2

    # block-mean matrix for per-modality LayerNorm (same block structure is used
    # by encoder and decoder since all intermediate dims == ENC_INTER)
    blkM = np.zeros((NMOD * ENC_INTER, NMOD * ENC_INTER), np.float32)
    for m in range(NMOD):
        blkM[m * ENC_INTER:(m + 1) * ENC_INTER,
             m * ENC_INTER:(m + 1) * ENC_INTER] = 1.0 / ENC_INTER
    P["blk_lnM"] = blkM

    # gene combiner (first Linear split along its K dim: [latent | z_gene])
    W1, P["gc_b1"] = _init_linear(next(keys), COMB_DIM, GC_I1)
    P["gc_W1a"], P["gc_W1b"] = W1[:TOTAL_LATENT], W1[TOTAL_LATENT:]
    P["gc_g1"], P["gc_be1"] = _ln_init(GC_I1)
    P["gc_W2"], P["gc_b2"] = _init_linear(next(keys), GC_I1, GC_I2)
    P["gc_g2"], P["gc_be2"] = _ln_init(GC_I2)
    P["gc_W3"], P["gc_b3"] = _init_linear(next(keys), GC_I2, PATIENT_EMBEDDING_DIM)

    # pooling / broadcast selector matrices (batch-major flattening b*G + g)
    pool = np.zeros((BATCH, BG), np.float32)
    rep_zg = np.zeros((BG, NUM_GENES), np.float32)
    rep_ctx = np.zeros((BG, BATCH), np.float32)
    for b in range(BATCH):
        pool[b, b * NUM_GENES:(b + 1) * NUM_GENES] = 1.0 / NUM_GENES
        for g in range(NUM_GENES):
            rep_zg[b * NUM_GENES + g, g] = 1.0
            rep_ctx[b * NUM_GENES + g, b] = 1.0
    P["pool"], P["rep_zg"], P["rep_ctx"] = pool, rep_zg, rep_ctx

    # patient aggregator / patient decoder / reconstruction MLP
    P["pa_W1"], P["pa_b1"] = _init_linear(next(keys), PATIENT_EMBEDDING_DIM, AGG_I)
    P["pa_W2"], P["pa_b2"] = _init_linear(next(keys), AGG_I, PATIENT_EMBEDDING_DIM)
    P["pd_W1"], P["pd_b1"] = _init_linear(next(keys), PATIENT_EMBEDDING_DIM, PD_I)
    P["pd_g1"], P["pd_be1"] = _ln_init(PD_I)
    P["pd_W2"], P["pd_b2"] = _init_linear(next(keys), PD_I, TOTAL_LATENT)
    W1, P["rm_b1"] = _init_linear(next(keys), COMB_DIM, REC_I)
    P["rm_W1a"], P["rm_W1b"] = W1[:TOTAL_LATENT], W1[TOTAL_LATENT:]
    P["rm_g1"], P["rm_be1"] = _ln_init(REC_I)
    P["rm_W2"], P["rm_b2"] = _init_linear(next(keys), REC_I, TOTAL_LATENT)

    # modality decoders (block-diagonal first linear; Linear(inter,1) columns stacked)
    dW1bd = np.zeros((TOTAL_LATENT, NMOD * ENC_INTER), np.float32)
    db1 = np.zeros((1, NMOD * ENC_INTER), np.float32)
    dg1, dbe1 = _ln_init(NMOD * ENC_INTER)
    dW2bd = np.zeros((NMOD * ENC_INTER, NMOD), np.float32)
    db2 = np.zeros((1, NMOD), np.float32)
    row = 0
    for m, mod in enumerate(MODALITY_ORDER):
        ld = MODALITY_LATENT_DIMS[mod]
        inter = max(16, ld // 2)
        assert inter == ENC_INTER
        W1m, b1m = _init_linear(next(keys), ld, inter)
        W2m, b2m = _init_linear(next(keys), inter, 1)
        dW1bd[row:row + ld, m * inter:(m + 1) * inter] = W1m
        db1[0, m * inter:(m + 1) * inter] = b1m[0]
        dW2bd[m * inter:(m + 1) * inter, m] = W2m[:, 0]
        db2[0, m] = b2m[0, 0]
        row += ld
    P["dec_W1bd"], P["dec_b1"], P["dec_g1"], P["dec_be1"] = dW1bd, db1, dg1, dbe1
    P["dec_W2bd"], P["dec_b2"] = dW2bd, db2

    # pack everything into one lane-dense slab
    slab = np.zeros((PARAM_ROWS, SLAB_COLS), np.float32)
    for name, r, c in _PARAM_SHAPES:
        r0, rr, cc = PARAM_LAYOUT[name]
        arr = np.asarray(P[name], np.float32)
        assert arr.shape == (r, c), (name, arr.shape, (r, c))
        slab[r0:r0 + rr, :cc] = arr
    return jnp.asarray(slab)


# ------------------------------ fused forward ---------------------------------
def _pack_data(a_hat, graph_x, omics_flat):
    slab = jnp.zeros((DATA_ROWS, SLAB_COLS), jnp.float32)
    for name, arr in (("a_hat", a_hat), ("graph_x", graph_x), ("omics", omics_flat)):
        r0, r, c = DATA_LAYOUT[name]
        slab = slab.at[r0:r0 + r, :c].set(arr.astype(jnp.float32))
    return slab


@jax.jit
def joint_autoencoder_forward(param_slab, a_hat, graph_x, omics_x):
    B, G, M = omics_x.shape
    assert (B, G, M) == (BATCH, NUM_GENES, NMOD)
    data_slab = _pack_data(a_hat, graph_x, omics_x.reshape(B * G, M))

    out_slab = pl.pallas_call(
        _joint_fwd_kernel,
        out_shape=jax.ShapeDtypeStruct((OUT_ROWS, SLAB_COLS), jnp.float32),
        in_specs=[pl.BlockSpec(memory_space=pltpu.MemorySpace.VMEM),
                  pl.BlockSpec(memory_space=pltpu.MemorySpace.VMEM)],
        out_specs=pl.BlockSpec(memory_space=pltpu.MemorySpace.VMEM),
    )(data_slab, param_slab)

    c0, w = OUT_COLS["omics"]
    omics_rec = out_slab[:B * G, c0:c0 + w].reshape(B, G, M)
    c0, w = OUT_COLS["adj"]
    adj_rec = out_slab[:G, c0:c0 + w]
    c0, w = OUT_COLS["zp"]
    z_p = out_slab[:B, c0:c0 + w]
    c0, w = OUT_COLS["mu"]
    mu = out_slab[:G, c0:c0 + w]
    c0, w = OUT_COLS["lv"]
    log_var = out_slab[:G, c0:c0 + w]
    z_gene = mu                                  # eval-mode reparameterize = mu
    return omics_rec, adj_rec, z_p, z_gene, mu, log_var


# ---------------------------------- main ---------------------------------------
if __name__ == "__main__":
    key = jax.random.PRNGKey(0)
    k1, k2, k3, k4, kp = jax.random.split(key, 5)

    graph_x = jax.random.normal(k1, (NUM_GENES, GRAPH_FEATURE_DIM), jnp.float32)
    src = jax.random.randint(k2, (NUM_EDGES,), 0, NUM_GENES)
    dst = jax.random.randint(k3, (NUM_EDGES,), 0, NUM_GENES)
    graph_edge_index = jnp.stack([src, dst])                     # (2, E)
    omics_x_structured = jax.random.uniform(
        k4, (BATCH, NUM_GENES, NMOD), jnp.float32)

    param_slab = init_param_slab(kp)
    # normalized adjacency precomputed once (hoisted out of the fused forward)
    a_hat = build_gcn_norm_adj(graph_edge_index, NUM_GENES)

    outs = jax.block_until_ready(
        joint_autoencoder_forward(param_slab, a_hat, graph_x, omics_x_structured))

    omics_rec, adj_rec, z_p, z_gene, mu, log_var = outs
    assert omics_rec.shape == (BATCH, NUM_GENES, NMOD)
    assert adj_rec.shape == (NUM_GENES, NUM_GENES)
    assert z_p.shape == (BATCH, PATIENT_EMBEDDING_DIM)
    assert z_gene.shape == (NUM_GENES, GENE_EMBEDDING_DIM)
    assert mu.shape == (NUM_GENES, GENE_EMBEDDING_DIM)
    assert log_var.shape == (NUM_GENES, GENE_EMBEDDING_DIM)
    for o in outs:
        assert bool(jnp.all(jnp.isfinite(o)))
    assert bool(jnp.all((omics_rec >= 0.0) & (omics_rec <= 1.0)))

    print("KERNEL_OK")
</pallas_src>

<mosaic_0001>
module attributes {stable_mosaic.version = 11 : i64} {
  func.func @_joint_fwd_kernel(%arg0: memref<64x128xf32, #tpu.memory_space<vmem>>, %arg1: memref<784x128xf32, #tpu.memory_space<vmem>>, %arg2: memref<32x128xf32, #tpu.memory_space<vmem>>) attributes {dimension_semantics = [], scalar_prefetch = 0 : i64, scratch_operands = 0 : i64, tpu.core_type = #tpu.core_type<tc>} {
    %c0 = arith.constant 0 : index
    %c0_0 = arith.constant 0 : index
    %0 = vector.load %arg0[%c0, %c0_0] : memref<64x128xf32, #tpu.memory_space<vmem>>, vector<16x16xf32>
    %c16 = arith.constant 16 : index
    %c0_1 = arith.constant 0 : index
    %1 = vector.load %arg0[%c16, %c0_1] : memref<64x128xf32, #tpu.memory_space<vmem>>, vector<16x8xf32>
    %c32 = arith.constant 32 : index
    %c0_2 = arith.constant 0 : index
    %2 = vector.load %arg0[%c32, %c0_2] : memref<64x128xf32, #tpu.memory_space<vmem>>, vector<32x2xf32>
    %c0_3 = arith.constant 0 : index
    %c0_4 = arith.constant 0 : index
    %3 = vector.load %arg1[%c0_3, %c0_4] : memref<784x128xf32, #tpu.memory_space<vmem>>, vector<8x32xf32>
    %cst = arith.constant dense<0.000000e+00> : vector<16x32xf32>
    %4 = tpu.matmul %1, %3, %cst {dimension_numbers = #tpu.dot_dimension_numbers<[1], [0], [0], [1], [0, 0, 1, 1], [], []>} : vector<16x8xf32>, vector<8x32xf32>, vector<16x32xf32> -> vector<16x32xf32>
    %cst_5 = arith.constant dense<0.000000e+00> : vector<16x32xf32>
    %5 = tpu.matmul %0, %4, %cst_5 {dimension_numbers = #tpu.dot_dimension_numbers<[1], [0], [0], [1], [0, 0, 1, 1], [], []>} : vector<16x16xf32>, vector<16x32xf32>, vector<16x32xf32> -> vector<16x32xf32>
    %c8 = arith.constant 8 : index
    %c0_6 = arith.constant 0 : index
    %6 = vector.load %arg1[%c8, %c0_6] : memref<784x128xf32, #tpu.memory_space<vmem>>, vector<1x32xf32>
    %7 = vector.broadcast %6 : vector<1x32xf32> to vector<16x32xf32>
    %8 = arith.addf %5, %7 : vector<16x32xf32>
    %cst_7 = arith.constant 0.000000e+00 : f32
    %9 = vector.broadcast %cst_7 : f32 to vector<16x32xf32>
    %10 = arith.maximumf %8, %9 : vector<16x32xf32>
    %c16_8 = arith.constant 16 : index
    %c0_9 = arith.constant 0 : index
    %11 = vector.load %arg1[%c16_8, %c0_9] : memref<784x128xf32, #tpu.memory_space<vmem>>, vector<1x32xf32>
    %c24 = arith.constant 24 : index
    %c0_10 = arith.constant 0 : index
    %12 = vector.load %arg1[%c24, %c0_10] : memref<784x128xf32, #tpu.memory_space<vmem>>, vector<1x32xf32>
    %cst_11 = arith.constant dense<0.000000e+00> : vector<16xf32>
    %13 = vector.multi_reduction <add>, %10, %cst_11 [1] : vector<16x32xf32> to vector<16xf32>
    %14 = vector.shape_cast %13 : vector<16xf32> to vector<16x1xf32>
    %cst_12 = arith.constant 3.200000e+01 : f32
    %15 = vector.broadcast %cst_12 : f32 to vector<16x1xf32>
    %16 = arith.divf %14, %15 : vector<16x1xf32>
    %17 = vector.broadcast %16 : vector<16x1xf32> to vector<16x32xf32>
    %18 = arith.subf %10, %17 : vector<16x32xf32>
    %19 = arith.mulf %18, %18 : vector<16x32xf32>
    %cst_13 = arith.constant dense<0.000000e+00> : vector<16xf32>
    %20 = vector.multi_reduction <add>, %19, %cst_13 [1] : vector<16x32xf32> to vector<16xf32>
    %21 = vector.shape_cast %20 : vector<16xf32> to vector<16x1xf32>
    %cst_14 = arith.constant 3.200000e+01 : f32
    %22 = vector.broadcast %cst_14 : f32 to vector<16x1xf32>
    %23 = arith.divf %21, %22 : vector<16x1xf32>
    %24 = vector.broadcast %16 : vector<16x1xf32> to vector<16x32xf32>
    %25 = arith.subf %10, %24 : vector<16x32xf32>
    %cst_15 = arith.constant 9.99999974E-6 : f32
    %26 = vector.broadcast %cst_15 : f32 to vector<16x1xf32>
    %27 = arith.addf %23, %26 : vector<16x1xf32>
    %28 = math.rsqrt %27 : vector<16x1xf32>
    %29 = vector.broadcast %28 : vector<16x1xf32> to vector<16x32xf32>
    %30 = arith.mulf %25, %29 : vector<16x32xf32>
    %31 = vector.broadcast %11 : vector<1x32xf32> to vector<16x32xf32>
    %32 = arith.mulf %30, %31 : vector<16x32xf32>
    %33 = vector.broadcast %12 : vector<1x32xf32> to vector<16x32xf32>
    %34 = arith.addf %32, %33 : vector<16x32xf32>
    %c32_16 = arith.constant 32 : index
    %c0_17 = arith.constant 0 : index
    %35 = vector.load %arg1[%c32_16, %c0_17] : memref<784x128xf32, #tpu.memory_space<vmem>>, vector<32x16xf32>
    %cst_18 = arith.constant dense<0.000000e+00> : vector<16x16xf32>
    %36 = tpu.matmul %34, %35, %cst_18 {dimension_numbers = #tpu.dot_dimension_numbers<[1], [0], [0], [1], [0, 0, 1, 1], [], []>} : vector<16x32xf32>, vector<32x16xf32>, vector<16x16xf32> -> vector<16x16xf32>
    %cst_19 = arith.constant dense<0.000000e+00> : vector<16x16xf32>
    %37 = tpu.matmul %0, %36, %cst_19 {dimension_numbers = #tpu.dot_dimension_numbers<[1], [0], [0], [1], [0, 0, 1, 1], [], []>} : vector<16x16xf32>, vector<16x16xf32>, vector<16x16xf32> -> vector<16x16xf32>
    %c64 = arith.constant 64 : index
    %c0_20 = arith.constant 0 : index
    %38 = vector.load %arg1[%c64, %c0_20] : memref<784x128xf32, #tpu.memory_space<vmem>>, vector<1x16xf32>
    %39 = vector.broadcast %38 : vector<1x16xf32> to vector<16x16xf32>
    %40 = arith.addf %37, %39 : vector<16x16xf32>
    %cst_21 = arith.constant 0.000000e+00 : f32
    %41 = vector.broadcast %cst_21 : f32 to vector<16x16xf32>
    %42 = arith.maximumf %40, %41 : vector<16x16xf32>
    %c72 = arith.constant 72 : index
    %c0_22 = arith.constant 0 : index
    %43 = vector.load %arg1[%c72, %c0_22] : memref<784x128xf32, #tpu.memory_space<vmem>>, vector<1x16xf32>
    %c80 = arith.constant 80 : index
    %c0_23 = arith.constant 0 : index
    %44 = vector.load %arg1[%c80, %c0_23] : memref<784x128xf32, #tpu.memory_space<vmem>>, vector<1x16xf32>
    %cst_24 = arith.constant dense<0.000000e+00> : vector<16xf32>
    %45 = vector.multi_reduction <add>, %42, %cst_24 [1] : vector<16x16xf32> to vector<16xf32>
    %46 = vector.shape_cast %45 : vector<16xf32> to vector<16x1xf32>
    %cst_25 = arith.constant 1.600000e+01 : f32
    %47 = vector.broadcast %cst_25 : f32 to vector<16x1xf32>
    %48 = arith.divf %46, %47 : vector<16x1xf32>
    %49 = vector.broadcast %48 : vector<16x1xf32> to vector<16x16xf32>
    %50 = arith.subf %42, %49 : vector<16x16xf32>
    %51 = arith.mulf %50, %50 : vector<16x16xf32>
    %cst_26 = arith.constant dense<0.000000e+00> : vector<16xf32>
    %52 = vector.multi_reduction <add>, %51, %cst_26 [1] : vector<16x16xf32> to vector<16xf32>
    %53 = vector.shape_cast %52 : vector<16xf32> to vector<16x1xf32>
    %cst_27 = arith.constant 1.600000e+01 : f32
    %54 = vector.broadcast %cst_27 : f32 to vector<16x1xf32>
    %55 = arith.divf %53, %54 : vector<16x1xf32>
    %56 = vector.broadcast %48 : vector<16x1xf32> to vector<16x16xf32>
    %57 = arith.subf %42, %56 : vector<16x16xf32>
    %cst_28 = arith.constant 9.99999974E-6 : f32
    %58 = vector.broadcast %cst_28 : f32 to vector<16x1xf32>
    %59 = arith.addf %55, %58 : vector<16x1xf32>
    %60 = math.rsqrt %59 : vector<16x1xf32>
    %61 = vector.broadcast %60 : vector<16x1xf32> to vector<16x16xf32>
    %62 = arith.mulf %57, %61 : vector<16x16xf32>
    %63 = vector.broadcast %43 : vector<1x16xf32> to vector<16x16xf32>
    %64 = arith.mulf %62, %63 : vector<16x16xf32>
    %65 = vector.broadcast %44 : vector<1x16xf32> to vector<16x16xf32>
    %66 = arith.addf %64, %65 : vector<16x16xf32>
    %c88 = arith.constant 88 : index
    %c0_29 = arith.constant 0 : index
    %67 = vector.load %arg1[%c88, %c0_29] : memref<784x128xf32, #tpu.memory_space<vmem>>, vector<16x16xf32>
    %cst_30 = arith.constant dense<0.000000e+00> : vector<16x16xf32>
    %68 = tpu.matmul %66, %67, %cst_30 {dimension_numbers = #tpu.dot_dimension_numbers<[1], [0], [0], [1], [0, 0, 1, 1], [], []>} : vector<16x16xf32>, vector<16x16xf32>, vector<16x16xf32> -> vector<16x16xf32>
    %cst_31 = arith.constant dense<0.000000e+00> : vector<16x16xf32>
    %69 = tpu.matmul %0, %68, %cst_31 {dimension_numbers = #tpu.dot_dimension_numbers<[1], [0], [0], [1], [0, 0, 1, 1], [], []>} : vector<16x16xf32>, vector<16x16xf32>, vector<16x16xf32> -> vector<16x16xf32>
    %c104 = arith.constant 104 : index
    %c0_32 = arith.constant 0 : index
    %70 = vector.load %arg1[%c104, %c0_32] : memref<784x128xf32, #tpu.memory_space<vmem>>, vector<1x16xf32>
    %71 = vector.broadcast %70 : vector<1x16xf32> to vector<16x16xf32>
    %72 = arith.addf %69, %71 : vector<16x16xf32>
    %73 = vector.extract_strided_slice %72 {offsets = [0, 0], sizes = [16, 8], strides = [1, 1]} : vector<16x16xf32> to vector<16x8xf32>
    %74 = vector.extract_strided_slice %72 {offsets = [0, 8], sizes = [16, 8], strides = [1, 1]} : vector<16x16xf32> to vector<16x8xf32>
    %cst_33 = arith.constant dense<0.000000e+00> : vector<16x16xf32>
    %75 = tpu.matmul %73, %73, %cst_33 {dimension_numbers = #tpu.dot_dimension_numbers<[1], [1], [0], [0], [0, 0, 1, 0], [], []>} : vector<16x8xf32>, vector<16x8xf32>, vector<16x16xf32> -> vector<16x16xf32>
    %c144 = arith.constant 144 : index
    %c0_34 = arith.constant 0 : index
    %76 = vector.load %arg1[%c144, %c0_34] : memref<784x128xf32, #tpu.memory_space<vmem>>, vector<32x32xf32>
    %c112 = arith.constant 112 : index
    %c0_35 = arith.constant 0 : index
    %77 = vector.load %arg1[%c112, %c0_35] : memref<784x128xf32, #tpu.memory_space<vmem>>, vector<2x32xf32>
    %cst_36 = arith.constant dense<0.000000e+00> : vector<32x32xf32>
    %78 = tpu.matmul %2, %77, %cst_36 {dimension_numbers = #tpu.dot_dimension_numbers<[1], [0], [0], [1], [0, 0, 1, 1], [], []>} : vector<32x2xf32>, vector<2x32xf32>, vector<32x32xf32> -> vector<32x32xf32>
    %c120 = arith.constant 120 : index
    %c0_37 = arith.constant 0 : index
    %79 = vector.load %arg1[%c120, %c0_37] : memref<784x128xf32, #tpu.memory_space<vmem>>, vector<1x32xf32>
    %80 = vector.broadcast %79 : vector<1x32xf32> to vector<32x32xf32>
    %81 = arith.addf %78, %80 : vector<32x32xf32>
    %cst_38 = arith.constant 0.000000e+00 : f32
    %82 = vector.broadcast %cst_38 : f32 to vector<32x32xf32>
    %83 = arith.maximumf %81, %82 : vector<32x32xf32>
    %c128 = arith.constant 128 : index
    %c0_39 = arith.constant 0 : index
    %84 = vector.load %arg1[%c128, %c0_39] : memref<784x128xf32, #tpu.memory_space<vmem>>, vector<1x32xf32>
    %c136 = arith.constant 136 : index
    %c0_40 = arith.constant 0 : index
    %85 = vector.load %arg1[%c136, %c0_40] : memref<784x128xf32, #tpu.memory_space<vmem>>, vector<1x32xf32>
    %cst_41 = arith.constant dense<0.000000e+00> : vector<32x32xf32>
    %86 = tpu.matmul %83, %76, %cst_41 {dimension_numbers = #tpu.dot_dimension_numbers<[1], [0], [0], [1], [0, 0, 1, 1], [], []>} : vector<32x32xf32>, vector<32x32xf32>, vector<32x32xf32> -> vector<32x32xf32>
    %87 = arith.subf %83, %86 : vector<32x32xf32>
    %88 = arith.mulf %87, %87 : vector<32x32xf32>
    %cst_42 = arith.constant dense<0.000000e+00> : vector<32x32xf32>
    %89 = tpu.matmul %88, %76, %cst_42 {dimension_numbers = #tpu.dot_dimension_numbers<[1], [0], [0], [1], [0, 0, 1, 1], [], []>} : vector<32x32xf32>, vector<32x32xf32>, vector<32x32xf32> -> vector<32x32xf32>
    %90 = arith.subf %83, %86 : vector<32x32xf32>
    %cst_43 = arith.constant 9.99999974E-6 : f32
    %91 = vector.broadcast %cst_43 : f32 to vector<32x32xf32>
    %92 = arith.addf %89, %91 : vector<32x32xf32>
    %93 = math.rsqrt %92 : vector<32x32xf32>
    %94 = arith.mulf %90, %93 : vector<32x32xf32>
    %95 = vector.broadcast %84 : vector<1x32xf32> to vector<32x32xf32>
    %96 = arith.mulf %94, %95 : vector<32x32xf32>
    %97 = vector.broadcast %85 : vector<1x32xf32> to vector<32x32xf32>
    %98 = arith.addf %96, %97 : vector<32x32xf32>
    %c176 = arith.constant 176 : index
    %c0_44 = arith.constant 0 : index
    %99 = vector.load %arg1[%c176, %c0_44] : memref<784x128xf32, #tpu.memory_space<vmem>>, vector<32x32xf32>
    %cst_45 = arith.constant dense<0.000000e+00> : vector<32x32xf32>
    %100 = tpu.matmul %98, %99, %cst_45 {dimension_numbers = #tpu.dot_dimension_numbers<[1], [0], [0], [1], [0, 0, 1, 1], [], []>} : vector<32x32xf32>, vector<32x32xf32>, vector<32x32xf32> -> vector<32x32xf32>
    %c208 = arith.constant 208 : index
    %c0_46 = arith.constant 0 : index
    %101 = vector.load %arg1[%c208, %c0_46] : memref<784x128xf32, #tpu.memory_space<vmem>>, vector<1x32xf32>
    %102 = vector.broadcast %101 : vector<1x32xf32> to vector<32x32xf32>
    %103 = arith.addf %100, %102 : vector<32x32xf32>
    %cst_47 = arith.constant 0.000000e+00 : f32
    %104 = vector.broadcast %cst_47 : f32 to vector<32x32xf32>
    %105 = arith.maximumf %103, %104 : vector<32x32xf32>
    %c512 = arith.constant 512 : index
    %c0_48 = arith.constant 0 : index
    %106 = vector.load %arg1[%c512, %c0_48] : memref<784x128xf32, #tpu.memory_space<vmem>>, vector<32x16xf32>
    %cst_49 = arith.constant dense<0.000000e+00> : vector<32x8xf32>
    %107 = tpu.matmul %106, %73, %cst_49 {dimension_numbers = #tpu.dot_dimension_numbers<[1], [0], [0], [1], [0, 0, 1, 1], [], []>} : vector<32x16xf32>, vector<16x8xf32>, vector<32x8xf32> -> vector<32x8xf32>
    %c216 = arith.constant 216 : index
    %c0_50 = arith.constant 0 : index
    %108 = vector.load %arg1[%c216, %c0_50] : memref<784x128xf32, #tpu.memory_space<vmem>>, vector<32x28xf32>
    %cst_51 = arith.constant dense<0.000000e+00> : vector<32x28xf32>
    %109 = tpu.matmul %105, %108, %cst_51 {dimension_numbers = #tpu.dot_dimension_numbers<[1], [0], [0], [1], [0, 0, 1, 1], [], []>} : vector<32x32xf32>, vector<32x28xf32>, vector<32x28xf32> -> vector<32x28xf32>
    %c248 = arith.constant 248 : index
    %c0_52 = arith.constant 0 : index
    %110 = vector.load %arg1[%c248, %c0_52] : memref<784x128xf32, #tpu.memory_space<vmem>>, vector<8x28xf32>
    %cst_53 = arith.constant dense<0.000000e+00> : vector<32x28xf32>
    %111 = tpu.matmul %107, %110, %cst_53 {dimension_numbers = #tpu.dot_dimension_numbers<[1], [0], [0], [1], [0, 0, 1, 1], [], []>} : vector<32x8xf32>, vector<8x28xf32>, vector<32x28xf32> -> vector<32x28xf32>
    %112 = arith.addf %109, %111 : vector<32x28xf32>
    %c256 = arith.constant 256 : index
    %c0_54 = arith.constant 0 : index
    %113 = vector.load %arg1[%c256, %c0_54] : memref<784x128xf32, #tpu.memory_space<vmem>>, vector<1x28xf32>
    %114 = vector.broadcast %113 : vector<1x28xf32> to vector<32x28xf32>
    %115 = arith.addf %112, %114 : vector<32x28xf32>
    %cst_55 = arith.constant 0.000000e+00 : f32
    %116 = vector.broadcast %cst_55 : f32 to vector<32x28xf32>
    %117 = arith.maximumf %115, %116 : vector<32x28xf32>
    %c264 = arith.constant 264 : index
    %c0_56 = arith.constant 0 : index
    %118 = vector.load %arg1[%c264, %c0_56] : memref<784x128xf32, #tpu.memory_space<vmem>>, vector<1x28xf32>
    %c272 = arith.constant 272 : index
    %c0_57 = arith.constant 0 : index
    %119 = vector.load %arg1[%c272, %c0_57] : memref<784x128xf32, #tpu.memory_space<vmem>>, vector<1x28xf32>
    %cst_58 = arith.constant dense<0.000000e+00> : vector<32xf32>
    %120 = vector.multi_reduction <add>, %117, %cst_58 [1] : vector<32x28xf32> to vector<32xf32>
    %121 = vector.shape_cast %120 : vector<32xf32> to vector<32x1xf32>
    %cst_59 = arith.constant 2.800000e+01 : f32
    %122 = vector.broadcast %cst_59 : f32 to vector<32x1xf32>
    %123 = arith.divf %121, %122 : vector<32x1xf32>
    %124 = vector.broadcast %123 : vector<32x1xf32> to vector<32x28xf32>
    %125 = arith.subf %117, %124 : vector<32x28xf32>
    %126 = arith.mulf %125, %125 : vector<32x28xf32>
    %cst_60 = arith.constant dense<0.000000e+00> : vector<32xf32>
    %127 = vector.multi_reduction <add>, %126, %cst_60 [1] : vector<32x28xf32> to vector<32xf32>
    %128 = vector.shape_cast %127 : vector<32xf32> to vector<32x1xf32>
    %cst_61 = arith.constant 2.800000e+01 : f32
    %129 = vector.broadcast %cst_61 : f32 to vector<32x1xf32>
    %130 = arith.divf %128, %129 : vector<32x1xf32>
    %131 = vector.broadcast %123 : vector<32x1xf32> to vector<32x28xf32>
    %132 = arith.subf %117, %131 : vector<32x28xf32>
    %cst_62 = arith.constant 9.99999974E-6 : f32
    %133 = vector.broadcast %cst_62 : f32 to vector<32x1xf32>
    %134 = arith.addf %130, %133 : vector<32x1xf32>
    %135 = math.rsqrt %134 : vector<32x1xf32>
    %136 = vector.broadcast %135 : vector<32x1xf32> to vector<32x28xf32>
    %137 = arith.mulf %132, %136 : vector<32x28xf32>
    %138 = vector.broadcast %118 : vector<1x28xf32> to vector<32x28xf32>
    %139 = arith.mulf %137, %138 : vector<32x28xf32>
    %140 = vector.broadcast %119 : vector<1x28xf32> to vector<32x28xf32>
    %141 = arith.addf %139, %140 : vector<32x28xf32>
    %c280 = arith.constant 280 : index
    %c0_63 = arith.constant 0 : index
    %142 = vector.load %arg1[%c280, %c0_63] : memref<784x128xf32, #tpu.memory_space<vmem>>, vector<28x32xf32>
    %cst_64 = arith.constant dense<0.000000e+00> : vector<32x32xf32>
    %143 = tpu.matmul %141, %142, %cst_64 {dimension_numbers = #tpu.dot_dimension_numbers<[1], [0], [0], [1], [0, 0, 1, 1], [], []>} : vector<32x28xf32>, vector<28x32xf32>, vector<32x32xf32> -> vector<32x32xf32>
    %c312 = arith.constant 312 : index
    %c0_65 = arith.constant 0 : index
    %144 = vector.load %arg1[%c312, %c0_65] : memref<784x128xf32, #tpu.memory_space<vmem>>, vector<1x32xf32>
    %145 = vector.broadcast %144 : vector<1x32xf32> to vector<32x32xf32>
    %146 = arith.addf %143, %145 : vector<32x32xf32>
    %cst_66 = arith.constant 0.000000e+00 : f32
    %147 = vector.broadcast %cst_66 : f32 to vector<32x32xf32>
    %148 = arith.maximumf %146, %147 : vector<32x32xf32>
    %c320 = arith.constant 320 : index
    %c0_67 = arith.constant 0 : index
    %149 = vector.load %arg1[%c320, %c0_67] : memref<784x128xf32, #tpu.memory_space<vmem>>, vector<1x32xf32>
    %c328 = arith.constant 328 : index
    %c0_68 = arith.constant 0 : index
    %150 = vector.load %arg1[%c328, %c0_68] : memref<784x128xf32, #tpu.memory_space<vmem>>, vector<1x32xf32>
    %cst_69 = arith.constant dense<0.000000e+00> : vector<32xf32>
    %151 = vector.multi_reduction <add>, %148, %cst_69 [1] : vector<32x32xf32> to vector<32xf32>
    %152 = vector.shape_cast %151 : vector<32xf32> to vector<32x1xf32>
    %cst_70 = arith.constant 3.200000e+01 : f32
    %153 = vector.broadcast %cst_70 : f32 to vector<32x1xf32>
    %154 = arith.divf %152, %153 : vector<32x1xf32>
    %155 = vector.broadcast %154 : vector<32x1xf32> to vector<32x32xf32>
    %156 = arith.subf %148, %155 : vector<32x32xf32>
    %157 = arith.mulf %156, %156 : vector<32x32xf32>
    %cst_71 = arith.constant dense<0.000000e+00> : vector<32xf32>
    %158 = vector.multi_reduction <add>, %157, %cst_71 [1] : vector<32x32xf32> to vector<32xf32>
    %159 = vector.shape_cast %158 : vector<32xf32> to vector<32x1xf32>
    %cst_72 = arith.constant 3.200000e+01 : f32
    %160 = vector.broadcast %cst_72 : f32 to vector<32x1xf32>
    %161 = arith.divf %159, %160 : vector<32x1xf32>
    %162 = vector.broadcast %154 : vector<32x1xf32> to vector<32x32xf32>
    %163 = arith.subf %148, %162 : vector<32x32xf32>
    %cst_73 = arith.constant 9.99999974E-6 : f32
    %164 = vector.broadcast %cst_73 : f32 to vector<32x1xf32>
    %165 = arith.addf %161, %164 : vector<32x1xf32>
    %166 = math.rsqrt %165 : vector<32x1xf32>
    %167 = vector.broadcast %166 : vector<32x1xf32> to vector<32x32xf32>
    %168 = arith.mulf %163, %167 : vector<32x32xf32>
    %169 = vector.broadcast %149 : vector<1x32xf32> to vector<32x32xf32>
    %170 = arith.mulf %168, %169 : vector<32x32xf32>
    %171 = vector.broadcast %150 : vector<1x32xf32> to vector<32x32xf32>
    %172 = arith.addf %170, %171 : vector<32x32xf32>
    %c336 = arith.constant 336 : index
    %c0_74 = arith.constant 0 : index
    %173 = vector.load %arg1[%c336, %c0_74] : memref<784x128xf32, #tpu.memory_space<vmem>>, vector<32x16xf32>
    %cst_75 = arith.constant dense<0.000000e+00> : vector<32x16xf32>
    %174 = tpu.matmul %172, %173, %cst_75 {dimension_numbers = #tpu.dot_dimension_numbers<[1], [0], [0], [1], [0, 0, 1, 1], [], []>} : vector<32x32xf32>, vector<32x16xf32>, vector<32x16xf32> -> vector<32x16xf32>
    %c368 = arith.constant 368 : index
    %c0_76 = arith.constant 0 : index
    %175 = vector.load %arg1[%c368, %c0_76] : memref<784x128xf32, #tpu.memory_space<vmem>>, vector<1x16xf32>
    %176 = vector.broadcast %175 : vector<1x16xf32> to vector<32x16xf32>
    %177 = arith.addf %174, %176 : vector<32x16xf32>
    %cst_77 = arith.constant 0.000000e+00 : f32
    %178 = vector.broadcast %cst_77 : f32 to vector<32x16xf32>
    %179 = arith.maximumf %177, %178 : vector<32x16xf32>
    %c376 = arith.constant 376 : index
    %c0_78 = arith.constant 0 : index
    %180 = vector.load %arg1[%c376, %c0_78] : memref<784x128xf32, #tpu.memory_space<vmem>>, vector<2x32xf32>
    %cst_79 = arith.constant dense<0.000000e+00> : vector<2x16xf32>
    %181 = tpu.matmul %180, %179, %cst_79 {dimension_numbers = #tpu.dot_dimension_numbers<[1], [0], [0], [1], [0, 0, 1, 1], [], []>} : vector<2x32xf32>, vector<32x16xf32>, vector<2x16xf32> -> vector<2x16xf32>
    %c384 = arith.constant 384 : index
    %c0_80 = arith.constant 0 : index
    %182 = vector.load %arg1[%c384, %c0_80] : memref<784x128xf32, #tpu.memory_space<vmem>>, vector<16x16xf32>
    %cst_81 = arith.constant dense<0.000000e+00> : vector<2x16xf32>
    %183 = tpu.matmul %181, %182, %cst_81 {dimension_numbers = #tpu.dot_dimension_numbers<[1], [0], [0], [1], [0, 0, 1, 1], [], []>} : vector<2x16xf32>, vector<16x16xf32>, vector<2x16xf32> -> vector<2x16xf32>
    %c400 = arith.constant 400 : index
    %c0_82 = arith.constant 0 : index
    %184 = vector.load %arg1[%c400, %c0_82] : memref<784x128xf32, #tpu.memory_space<vmem>>, vector<1x16xf32>
    %185 = vector.broadcast %184 : vector<1x16xf32> to vector<2x16xf32>
    %186 = arith.addf %183, %185 : vector<2x16xf32>
    %cst_83 = arith.constant 0.000000e+00 : f32
    %187 = vector.broadcast %cst_83 : f32 to vector<2x16xf32>
    %188 = arith.maximumf %186, %187 : vector<2x16xf32>
    %c408 = arith.constant 408 : index
    %c0_84 = arith.constant 0 : index
    %189 = vector.load %arg1[%c408, %c0_84] : memref<784x128xf32, #tpu.memory_space<vmem>>, vector<16x16xf32>
    %cst_85 = arith.constant dense<0.000000e+00> : vector<2x16xf32>
    %190 = tpu.matmul %188, %189, %cst_85 {dimension_numbers = #tpu.dot_dimension_numbers<[1], [0], [0], [1], [0, 0, 1, 1], [], []>} : vector<2x16xf32>, vector<16x16xf32>, vector<2x16xf32> -> vector<2x16xf32>
    %c424 = arith.constant 424 : index
    %c0_86 = arith.constant 0 : index
    %191 = vector.load %arg1[%c424, %c0_86] : memref<784x128xf32, #tpu.memory_space<vmem>>, vector<1x16xf32>
    %192 = vector.broadcast %191 : vector<1x16xf32> to vector<2x16xf32>
    %193 = arith.addf %190, %192 : vector<2x16xf32>
    %c432 = arith.constant 432 : index
    %c0_87 = arith.constant 0 : index
    %194 = vector.load %arg1[%c432, %c0_87] : memref<784x128xf32, #tpu.memory_space<vmem>>, vector<16x32xf32>
    %cst_88 = arith.constant dense<0.000000e+00> : vector<2x32xf32>
    %195 = tpu.matmul %193, %194, %cst_88 {dimension_numbers = #tpu.dot_dimension_numbers<[1], [0], [0], [1], [0, 0, 1, 1], [], []>} : vector<2x16xf32>, vector<16x32xf32>, vector<2x32xf32> -> vector<2x32xf32>
    %c448 = arith.constant 448 : index
    %c0_89 = arith.constant 0 : index
    %196 = vector.load %arg1[%c448, %c0_89] : memref<784x128xf32, #tpu.memory_space<vmem>>, vector<1x32xf32>
    %197 = vector.broadcast %196 : vector<1x32xf32> to vector<2x32xf32>
    %198 = arith.addf %195, %197 : vector<2x32xf32>
    %cst_90 = arith.constant 0.000000e+00 : f32
    %199 = vector.broadcast %cst_90 : f32 to vector<2x32xf32>
    %200 = arith.maximumf %198, %199 : vector<2x32xf32>
    %c456 = arith.constant 456 : index
    %c0_91 = arith.constant 0 : index
    %201 = vector.load %arg1[%c456, %c0_91] : memref<784x128xf32, #tpu.memory_space<vmem>>, vector<1x32xf32>
    %c464 = arith.constant 464 : index
    %c0_92 = arith.constant 0 : index
    %202 = vector.load %arg1[%c464, %c0_92] : memref<784x128xf32, #tpu.memory_space<vmem>>, vector<1x32xf32>
    %cst_93 = arith.constant dense<0.000000e+00> : vector<2xf32>
    %203 = vector.multi_reduction <add>, %200, %cst_93 [1] : vector<2x32xf32> to vector<2xf32>
    %204 = vector.shape_cast %203 : vector<2xf32> to vector<2x1xf32>
    %cst_94 = arith.constant 3.200000e+01 : f32
    %205 = vector.broadcast %cst_94 : f32 to vector<2x1xf32>
    %206 = arith.divf %204, %205 : vector<2x1xf32>
    %207 = vector.broadcast %206 : vector<2x1xf32> to vector<2x32xf32>
    %208 = arith.subf %200, %207 : vector<2x32xf32>
    %209 = arith.mulf %208, %208 : vector<2x32xf32>
    %cst_95 = arith.constant dense<0.000000e+00> : vector<2xf32>
    %210 = vector.multi_reduction <add>, %209, %cst_95 [1] : vector<2x32xf32> to vector<2xf32>
    %211 = vector.shape_cast %210 : vector<2xf32> to vector<2x1xf32>
    %cst_96 = arith.constant 3.200000e+01 : f32
    %212 = vector.broadcast %cst_96 : f32 to vector<2x1xf32>
    %213 = arith.divf %211, %212 : vector<2x1xf32>
    %214 = vector.broadcast %206 : vector<2x1xf32> to vector<2x32xf32>
    %215 = arith.subf %200, %214 : vector<2x32xf32>
    %cst_97 = arith.constant 9.99999974E-6 : f32
    %216 = vector.broadcast %cst_97 : f32 to vector<2x1xf32>
    %217 = arith.addf %213, %216 : vector<2x1xf32>
    %218 = math.rsqrt %217 : vector<2x1xf32>
    %219 = vector.broadcast %218 : vector<2x1xf32> to vector<2x32xf32>
    %220 = arith.mulf %215, %219 : vector<2x32xf32>
    %221 = vector.broadcast %201 : vector<1x32xf32> to vector<2x32xf32>
    %222 = arith.mulf %220, %221 : vector<2x32xf32>
    %223 = vector.broadcast %202 : vector<1x32xf32> to vector<2x32xf32>
    %224 = arith.addf %222, %223 : vector<2x32xf32>
    %c472 = arith.constant 472 : index
    %c0_98 = arith.constant 0 : index
    %225 = vector.load %arg1[%c472, %c0_98] : memref<784x128xf32, #tpu.memory_space<vmem>>, vector<32x32xf32>
    %cst_99 = arith.constant dense<0.000000e+00> : vector<2x32xf32>
    %226 = tpu.matmul %224, %225, %cst_99 {dimension_numbers = #tpu.dot_dimension_numbers<[1], [0], [0], [1], [0, 0, 1, 1], [], []>} : vector<2x32xf32>, vector<32x32xf32>, vector<2x32xf32> -> vector<2x32xf32>
    %c504 = arith.constant 504 : index
    %c0_100 = arith.constant 0 : index
    %227 = vector.load %arg1[%c504, %c0_100] : memref<784x128xf32, #tpu.memory_space<vmem>>, vector<1x32xf32>
    %228 = vector.broadcast %227 : vector<1x32xf32> to vector<2x32xf32>
    %229 = arith.addf %226, %228 : vector<2x32xf32>
    %c544 = arith.constant 544 : index
    %c0_101 = arith.constant 0 : index
    %230 = vector.load %arg1[%c544, %c0_101] : memref<784x128xf32, #tpu.memory_space<vmem>>, vector<32x2xf32>
    %cst_102 = arith.constant dense<0.000000e+00> : vector<32x32xf32>
    %231 = tpu.matmul %230, %229, %cst_102 {dimension_numbers = #tpu.dot_dimension_numbers<[1], [0], [0], [1], [0, 0, 1, 1], [], []>} : vector<32x2xf32>, vector<2x32xf32>, vector<32x32xf32> -> vector<32x32xf32>
    %c576 = arith.constant 576 : index
    %c0_103 = arith.constant 0 : index
    %232 = vector.load %arg1[%c576, %c0_103] : memref<784x128xf32, #tpu.memory_space<vmem>>, vector<32x36xf32>
    %cst_104 = arith.constant dense<0.000000e+00> : vector<32x36xf32>
    %233 = tpu.matmul %231, %232, %cst_104 {dimension_numbers = #tpu.dot_dimension_numbers<[1], [0], [0], [1], [0, 0, 1, 1], [], []>} : vector<32x32xf32>, vector<32x36xf32>, vector<32x36xf32> -> vector<32x36xf32>
    %c608 = arith.constant 608 : index
    %c0_105 = arith.constant 0 : index
    %234 = vector.load %arg1[%c608, %c0_105] : memref<784x128xf32, #tpu.memory_space<vmem>>, vector<8x36xf32>
    %cst_106 = arith.constant dense<0.000000e+00> : vector<32x36xf32>
    %235 = tpu.matmul %107, %234, %cst_106 {dimension_numbers = #tpu.dot_dimension_numbers<[1], [0], [0], [1], [0, 0, 1, 1], [], []>} : vector<32x8xf32>, vector<8x36xf32>, vector<32x36xf32> -> vector<32x36xf32>
    %236 = arith.addf %233, %235 : vector<32x36xf32>
    %c616 = arith.constant 616 : index
    %c0_107 = arith.constant 0 : index
    %237 = vector.load %arg1[%c616, %c0_107] : memref<784x128xf32, #tpu.memory_space<vmem>>, vector<1x36xf32>
    %238 = vector.broadcast %237 : vector<1x36xf32> to vector<32x36xf32>
    %239 = arith.addf %236, %238 : vector<32x36xf32>
    %cst_108 = arith.constant 0.000000e+00 : f32
    %240 = vector.broadcast %cst_108 : f32 to vector<32x36xf32>
    %241 = arith.maximumf %239, %240 : vector<32x36xf32>
    %c624 = arith.constant 624 : index
    %c0_109 = arith.constant 0 : index
    %242 = vector.load %arg1[%c624, %c0_109] : memref<784x128xf32, #tpu.memory_space<vmem>>, vector<1x36xf32>
    %c632 = arith.constant 632 : index
    %c0_110 = arith.constant 0 : index
    %243 = vector.load %arg1[%c632, %c0_110] : memref<784x128xf32, #tpu.memory_space<vmem>>, vector<1x36xf32>
    %cst_111 = arith.constant dense<0.000000e+00> : vector<32xf32>
    %244 = vector.multi_reduction <add>, %241, %cst_111 [1] : vector<32x36xf32> to vector<32xf32>
    %245 = vector.shape_cast %244 : vector<32xf32> to vector<32x1xf32>
    %cst_112 = arith.constant 3.600000e+01 : f32
    %246 = vector.broadcast %cst_112 : f32 to vector<32x1xf32>
    %247 = arith.divf %245, %246 : vector<32x1xf32>
    %248 = vector.broadcast %247 : vector<32x1xf32> to vector<32x36xf32>
    %249 = arith.subf %241, %248 : vector<32x36xf32>
    %250 = arith.mulf %249, %249 : vector<32x36xf32>
    %cst_113 = arith.constant dense<0.000000e+00> : vector<32xf32>
    %251 = vector.multi_reduction <add>, %250, %cst_113 [1] : vector<32x36xf32> to vector<32xf32>
    %252 = vector.shape_cast %251 : vector<32xf32> to vector<32x1xf32>
    %cst_114 = arith.constant 3.600000e+01 : f32
    %253 = vector.broadcast %cst_114 : f32 to vector<32x1xf32>
    %254 = arith.divf %252, %253 : vector<32x1xf32>
    %255 = vector.broadcast %247 : vector<32x1xf32> to vector<32x36xf32>
    %256 = arith.subf %241, %255 : vector<32x36xf32>
    %cst_115 = arith.constant 9.99999974E-6 : f32
    %257 = vector.broadcast %cst_115 : f32 to vector<32x1xf32>
    %258 = arith.addf %254, %257 : vector<32x1xf32>
    %259 = math.rsqrt %258 : vector<32x1xf32>
    %260 = vector.broadcast %259 : vector<32x1xf32> to vector<32x36xf32>
    %261 = arith.mulf %256, %260 : vector<32x36xf32>
    %262 = vector.broadcast %242 : vector<1x36xf32> to vector<32x36xf32>
    %263 = arith.mulf %261, %262 : vector<32x36xf32>
    %264 = vector.broadcast %243 : vector<1x36xf32> to vector<32x36xf32>
    %265 = arith.addf %263, %264 : vector<32x36xf32>
    %c640 = arith.constant 640 : index
    %c0_116 = arith.constant 0 : index
    %266 = vector.load %arg1[%c640, %c0_116] : memref<784x128xf32, #tpu.memory_space<vmem>>, vector<36x32xf32>
    %cst_117 = arith.constant dense<0.000000e+00> : vector<32x32xf32>
    %267 = tpu.matmul %265, %266, %cst_117 {dimension_numbers = #tpu.dot_dimension_numbers<[1], [0], [0], [1], [0, 0, 1, 1], [], []>} : vector<32x36xf32>, vector<36x32xf32>, vector<32x32xf32> -> vector<32x32xf32>
    %c680 = arith.constant 680 : index
    %c0_118 = arith.constant 0 : index
    %268 = vector.load %arg1[%c680, %c0_118] : memref<784x128xf32, #tpu.memory_space<vmem>>, vector<1x32xf32>
    %269 = vector.broadcast %268 : vector<1x32xf32> to vector<32x32xf32>
    %270 = arith.addf %267, %269 : vector<32x32xf32>
    %c688 = arith.constant 688 : index
    %c0_119 = arith.constant 0 : index
    %271 = vector.load %arg1[%c688, %c0_119] : memref<784x128xf32, #tpu.memory_space<vmem>>, vector<32x32xf32>
    %cst_120 = arith.constant dense<0.000000e+00> : vector<32x32xf32>
    %272 = tpu.matmul %270, %271, %cst_120 {dimension_numbers = #tpu.dot_dimension_numbers<[1], [0], [0], [1], [0, 0, 1, 1], [], []>} : vector<32x32xf32>, vector<32x32xf32>, vector<32x32xf32> -> vector<32x32xf32>
    %c720 = arith.constant 720 : index
    %c0_121 = arith.constant 0 : index
    %273 = vector.load %arg1[%c720, %c0_121] : memref<784x128xf32, #tpu.memory_space<vmem>>, vector<1x32xf32>
    %274 = vector.broadcast %273 : vector<1x32xf32> to vector<32x32xf32>
    %275 = arith.addf %272, %274 : vector<32x32xf32>
    %cst_122 = arith.constant 0.000000e+00 : f32
    %276 = vector.broadcast %cst_122 : f32 to vector<32x32xf32>
    %277 = arith.maximumf %275, %276 : vector<32x32xf32>
    %c728 = arith.constant 728 : index
    %c0_123 = arith.constant 0 : index
    %278 = vector.load %arg1[%c728, %c0_123] : memref<784x128xf32, #tpu.memory_space<vmem>>, vector<1x32xf32>
    %c736 = arith.constant 736 : index
    %c0_124 = arith.constant 0 : index
    %279 = vector.load %arg1[%c736, %c0_124] : memref<784x128xf32, #tpu.memory_space<vmem>>, vector<1x32xf32>
    %cst_125 = arith.constant dense<0.000000e+00> : vector<32x32xf32>
    %280 = tpu.matmul %277, %76, %cst_125 {dimension_numbers = #tpu.dot_dimension_numbers<[1], [0], [0], [1], [0, 0, 1, 1], [], []>} : vector<32x32xf32>, vector<32x32xf32>, vector<32x32xf32> -> vector<32x32xf32>
    %281 = arith.subf %277, %280 : vector<32x32xf32>
    %282 = arith.mulf %281, %281 : vector<32x32xf32>
    %cst_126 = arith.constant dense<0.000000e+00> : vector<32x32xf32>
    %283 = tpu.matmul %282, %76, %cst_126 {dimension_numbers = #tpu.dot_dimension_numbers<[1], [0], [0], [1], [0, 0, 1, 1], [], []>} : vector<32x32xf32>, vector<32x32xf32>, vector<32x32xf32> -> vector<32x32xf32>
    %284 = arith.subf %277, %280 : vector<32x32xf32>
    %cst_127 = arith.constant 9.99999974E-6 : f32
    %285 = vector.broadcast %cst_127 : f32 to vector<32x32xf32>
    %286 = arith.addf %283, %285 : vector<32x32xf32>
    %287 = math.rsqrt %286 : vector<32x32xf32>
    %288 = arith.mulf %284, %287 : vector<32x32xf32>
    %289 = vector.broadcast %278 : vector<1x32xf32> to vector<32x32xf32>
    %290 = arith.mulf %288, %289 : vector<32x32xf32>
    %291 = vector.broadcast %279 : vector<1x32xf32> to vector<32x32xf32>
    %292 = arith.addf %290, %291 : vector<32x32xf32>
    %c744 = arith.constant 744 : index
    %c0_128 = arith.constant 0 : index
    %293 = vector.load %arg1[%c744, %c0_128] : memref<784x128xf32, #tpu.memory_space<vmem>>, vector<32x2xf32>
    %cst_129 = arith.constant dense<0.000000e+00> : vector<32x2xf32>
    %294 = tpu.matmul %292, %293, %cst_129 {dimension_numbers = #tpu.dot_dimension_numbers<[1], [0], [0], [1], [0, 0, 1, 1], [], []>} : vector<32x32xf32>, vector<32x2xf32>, vector<32x2xf32> -> vector<32x2xf32>
    %c776 = arith.constant 776 : index
    %c0_130 = arith.constant 0 : index
    %295 = vector.load %arg1[%c776, %c0_130] : memref<784x128xf32, #tpu.memory_space<vmem>>, vector<1x2xf32>
    %296 = vector.broadcast %295 : vector<1x2xf32> to vector<32x2xf32>
    %297 = arith.addf %294, %296 : vector<32x2xf32>
    %298 = arith.negf %297 : vector<32x2xf32>
    %299 = math.exp %298 : vector<32x2xf32>
    %cst_131 = arith.constant 1.000000e+00 : f32
    %300 = vector.broadcast %cst_131 : f32 to vector<32x2xf32>
    %301 = arith.addf %300, %299 : vector<32x2xf32>
    %302 = arith.divf %300, %301 : vector<32x2xf32>
    %cst_132 = arith.constant 0.000000e+00 : f32
    %303 = vector.broadcast %cst_132 : f32 to vector<32x128xf32>
    %c0_133 = arith.constant 0 : index
    %c0_134 = arith.constant 0 : index
    %304 = vector.load %arg2[%c0_133, %c0_134] : memref<32x128xf32, #tpu.memory_space<vmem>>, vector<32x128xf32>
    tpu.vector_store %arg2[%c0_133, %c0_134], %303 {strides = array<i32>} : memref<32x128xf32, #tpu.memory_space<vmem>>, vector<32x128xf32>,
    %c0_135 = arith.constant 0 : index
    %c0_136 = arith.constant 0 : index
    %305 = vector.load %arg2[%c0_135, %c0_136] : memref<32x128xf32, #tpu.memory_space<vmem>>, vector<32x2xf32>
    tpu.vector_store %arg2[%c0_135, %c0_136], %302 {strides = array<i32>} : memref<32x128xf32, #tpu.memory_space<vmem>>, vector<32x2xf32>,
    %c0_137 = arith.constant 0 : index
    %c8_138 = arith.constant 8 : index
    %306 = vector.load %arg2[%c0_137, %c8_138] : memref<32x128xf32, #tpu.memory_space<vmem>>, vector<16x16xf32>
    tpu.vector_store %arg2[%c0_137, %c8_138], %75 {strides = array<i32>} : memref<32x128xf32, #tpu.memory_space<vmem>>, vector<16x16xf32>,
    %c0_139 = arith.constant 0 : index
    %c24_140 = arith.constant 24 : index
    %307 = vector.load %arg2[%c0_139, %c24_140] : memref<32x128xf32, #tpu.memory_space<vmem>>, vector<2x16xf32>
    tpu.vector_store %arg2[%c0_139, %c24_140], %193 {strides = array<i32>} : memref<32x128xf32, #tpu.memory_space<vmem>>, vector<2x16xf32>,
    %c0_141 = arith.constant 0 : index
    %c40 = arith.constant 40 : index
    %308 = vector.load %arg2[%c0_141, %c40] : memref<32x128xf32, #tpu.memory_space<vmem>>, vector<16x8xf32>
    tpu.vector_store %arg2[%c0_141, %c40], %73 {strides = array<i32>} : memref<32x128xf32, #tpu.memory_space<vmem>>, vector<16x8xf32>,
    %c0_142 = arith.constant 0 : index
    %c48 = arith.constant 48 : index
    %309 = vector.load %arg2[%c0_142, %c48] : memref<32x128xf32, #tpu.memory_space<vmem>>, vector<16x8xf32>
    tpu.vector_store %arg2[%c0_142, %c48], %74 {strides = array<i32>} : memref<32x128xf32, #tpu.memory_space<vmem>>, vector<16x8xf32>,
    return
  }
}

</mosaic_0001>

<llo_original>
// kernel: joint_autoencoder_forward.1
$region0: #{joint_autoencoder_forward.1}
  #allocation0 [shape = 'u32[]', space=smem, size = 0x4, offset = 0x4, fixed_abs, tag = 'smem constant byte address 0x4 - core index']
  #allocation1 [shape = 'u32[144,128]{1,0:T(1,128)}', space=vmem, size = 0x12000, scoped, tag = 'internal scratch']
  %s0 = inlined_call_operand.vmem [shape: f32[64,128], index: 0, kind: input, shape index: {}]
  %s1 = inlined_call_operand.hbm [shape: f32[784,128], index: 1, kind: input, shape index: {}]
  %s2 = inlined_call_operand.vmem [shape: f32[32,128], index: 2, kind: output, shape index: {}]
  %s3 = sld [smem:[#allocation0]]
  $region22: #{joint_autoencoder_forward.1} parent=0
    _
  %s5 = ssub.s32 1, %s3
  %s6 = scalar_select 0, %s5, %s3
  $region1: #{joint_autoencoder_forward.1} parent=0
    #allocation2 [shape = 'u8[401408]{0}', space=vmem, size = 0x62000, scoped, tag = 'input window, operand 1, single buffered']
    #allocation3 [shape = 's32[1]{0}', space=sflag, size = 0x4, scoped, tag = 'scoped memory for joint_autoencoder_forward.1']
    %7 = vsyncpa [#allocation3], 0
    // Predicated region
    $region2: #{joint_autoencoder_forward.1} parent=1 // pred_check
      _
    $region3: #{joint_autoencoder_forward.1} parent=1 // pred_check_branch
      %9 = sbr.rel (0) target = $region5
    $region4: #{joint_autoencoder_forward.1} parent=1 // pred_region
      _
    $region5: #{joint_autoencoder_forward.1} parent=1 // pred_fallthru
      _
    // Predicated region
    $region6: #{joint_autoencoder_forward.1} parent=1 // pred_check
      _
    $region7: #{joint_autoencoder_forward.1} parent=1 // pred_check_branch
      %11 = sbr.rel (0) target = $region9
    $region8: #{joint_autoencoder_forward.1} parent=1 // pred_region
      %s13 = ssub.s32 12544, 12544
      %14 = vsyncadd [#allocation3], %s13
      %s15 = sshll.u32 [#allocation2], 4
      %s16 = int_to_ptr.vmem [resolvable:$true] %s15
      %21 = dma.hbm_to_vmem [thread:$0]  %s1, 12544, %s16, [#allocation3], 128, 128, 8
    $region9: #{joint_autoencoder_forward.1} parent=1 // pred_fallthru
      _
    // Predicated region
    $region10: #{joint_autoencoder_forward.1} parent=1 // pred_check
      _
    $region11: #{joint_autoencoder_forward.1} parent=1 // pred_check_branch
      %23 = sbr.rel (0) target = $region13
    $region12: #{joint_autoencoder_forward.1} parent=1 // pred_region
      %24 = dma.done [#allocation3], 12544
    $region13: #{joint_autoencoder_forward.1} parent=1 // pred_fallthru
      _
    %v25 = vld [vmem:[%s0] sm:$0xff]
    %v26 = vld [vmem:[%s0 + $0x8] sm:$0xff]
    %v27 = vld [vmem:[%s0 + $0x10] sm:$0xff]
    %v28 = vld [vmem:[%s0 + $0x18] sm:$0xff]
    %v29 = vld [vmem:[%s0 + $0x20] sm:$0xff]
    %v30 = vld [vmem:[%s0 + $0x28] sm:$0xff]
    %v31 = vld [vmem:[%s0 + $0x30] sm:$0xff]
    %v32 = vld [vmem:[%s0 + $0x38] sm:$0xff]
    %v33 = vld [vmem:[#allocation2] sm:$0xff]
    %vm34 = vcmask 64512
    %v36 = vsel %vm34, %v27, 0
    %v39 = vsel %vm34, %v28, 0
    %41 = vmatprep.subr.mxu0 0.0
    %42 = vmatpush1.msra.mxu0 %v33
    %43 = vmatprep.subr.mxu0 0.0
    %44 = vmatpush1.msra.mxu0 0.0
    %45 = vmatprep.subr.mxu0 0.0
    %46 = vmatpush1.msra.mxu0 0.0
    %47 = vmatprep.subr.mxu0 0.0
    %48 = vmatpush1.msra.mxu0 0.0
    %49 = vmatprep.subr.mxu0 0.0
    %50 = vmatpush1.msra.mxu0 0.0
    %51 = vmatprep.subr.mxu0 0.0
    %52 = vmatpush1.msra.mxu0 0.0
    %53 = vmatprep.subr.mxu0 0.0
    %54 = vmatpush1.msra.mxu0 0.0
    %55 = vmatprep.subr.mxu0 0.0
    %56 = vmatpush1.msra.mxu0 0.0
    %57 = vmatprep.subr.mxu0 0.0
    %58 = vmatpush1.msra.mxu0 0.0
    %59 = vmatprep.subr.mxu0 0.0
    %60 = vmatpush1.msra.mxu0 0.0
    %61 = vmatprep.subr.mxu0 0.0
    %62 = vmatpush1.msra.mxu0 0.0
    %63 = vmatprep.subr.mxu0 0.0
    %64 = vmatpush1.msra.mxu0 0.0
    %65 = vmatprep.subr.mxu0 0.0
    %66 = vmatpush1.msra.mxu0 0.0
    %67 = vmatprep.subr.mxu0 0.0
    %68 = vmatpush1.msra.mxu0 0.0
    %69 = vmatprep.subr.mxu0 0.0
    %70 = vmatpush1.msra.mxu0 0.0
    %71 = vmatprep.subr.mxu0 0.0
    %72 = vmatpush1.msra.mxu0 0.0
    %73 = vmatprep.subr.mxu0 0.0
    %74 = vmatpush1.msra.mxu0 0.0
    %75 = vmatprep.subr.mxu0 0.0
    %76 = vmatpush1.msra.mxu0 0.0
    %77 = vmatprep.subr.mxu0 0.0
    %78 = vmatpush1.msra.mxu0 0.0
    %79 = vmatprep.subr.mxu0 0.0
    %80 = vmatpush1.msra.mxu0 0.0
    %81 = vmatprep.subr.mxu0 0.0
    %82 = vmatpush1.msra.mxu0 0.0
    %83 = vmatprep.subr.mxu0 0.0
    %84 = vmatpush1.msra.mxu0 0.0
    %85 = vmatprep.subr.mxu0 0.0
    %86 = vmatpush1.msra.mxu0 0.0
    %87 = vmatprep.subr.mxu0 0.0
    %88 = vmatpush1.msra.mxu0 0.0
    %89 = vmatprep.subr.mxu0 0.0
    %90 = vmatpush1.msra.mxu0 0.0
    %91 = vmatprep.subr.mxu0 0.0
    %92 = vmatpush1.msra.mxu0 0.0
    %93 = vmatprep.subr.mxu0 0.0
    %94 = vmatpush1.msra.mxu0 0.0
    %95 = vmatprep.subr.mxu0 0.0
    %96 = vmatpush1.msra.mxu0 0.0
    %97 = vmatprep.subr.mxu0 0.0
    %98 = vmatpush1.msra.mxu0 0.0
    %99 = vmatprep.subr.mxu0 0.0
    %100 = vmatpush1.msra.mxu0 0.0
    %101 = vmatprep.subr.mxu0 0.0
    %102 = vmatpush1.msra.mxu0 0.0
    %103 = vmatprep.subr.mxu0 0.0
    %104 = vmatpush1.msra.mxu0 0.0
    %105 = vmatprep.mubr.f32.mxu0 0.0
    %106 = vmatmul.mubr.f32.gmra.mrb[0].mxu0 %v36
    %v107 = vpop.f32.mrb[0].mxu0
    %v108 = vadd.f32 0.0, %v107
    %v109 = vpop.f32.mrb[0].mxu0
    %110 = vmatprep.mubr.f32.mxu0 0.0
    %111 = vmatmul.mubr.f32.gmra.mrb[0].mxu0 %v39
    %v112 = vpop.f32.mrb[0].mxu0
    %v113 = vadd.f32 0.0, %v112
    %v114 = vpop.f32.mrb[0].mxu0
    %115 = vdwg.mxu0
    %v116 = vld [vmem:[#allocation2 + $0x8] sm:$0x1]
    %v117 = vlaneseq
    %v118 = vshrl.u32 %v117, 7
    %v119 = vsub.s32 0, %v118
    %v120 = vrot.slane %v116, %v119
    %vm121 = vcmask 130048
    %v123 = vsel %vm121, %v25, 0
    %v126 = vsel %vm121, %v26, 0
    %128 = vmatprep.subr.mxu0 0.0
    %129 = vmatpush1.msra.mxu0 %v108
    %130 = vmatprep.subr.mxu0 0.0
    %131 = vmatpush1.msra.mxu0 %v113
    %132 = vmatprep.subr.mxu0 0.0
    %133 = vmatpush1.msra.mxu0 0.0
    %134 = vmatprep.subr.mxu0 0.0
    %135 = vmatpush1.msra.mxu0 0.0
    %136 = vmatprep.subr.mxu0 0.0
    %137 = vmatpush1.msra.mxu0 0.0
    %138 = vmatprep.subr.mxu0 0.0
    %139 = vmatpush1.msra.mxu0 0.0
    %140 = vmatprep.subr.mxu0 0.0
    %141 = vmatpush1.msra.mxu0 0.0
    %142 = vmatprep.subr.mxu0 0.0
    %143 = vmatpush1.msra.mxu0 0.0
    %144 = vmatprep.subr.mxu0 0.0
    %145 = vmatpush1.msra.mxu0 0.0
    %146 = vmatprep.subr.mxu0 0.0
    %147 = vmatpush1.msra.mxu0 0.0
    %148 = vmatprep.subr.mxu0 0.0
    %149 = vmatpush1.msra.mxu0 0.0
    %150 = vmatprep.subr.mxu0 0.0
    %151 = vmatpush1.msra.mxu0 0.0
    %152 = vmatprep.subr.mxu0 0.0
    %153 = vmatpush1.msra.mxu0 0.0
    %154 = vmatprep.subr.mxu0 0.0
    %155 = vmatpush1.msra.mxu0 0.0
    %156 = vmatprep.subr.mxu0 0.0
    %157 = vmatpush1.msra.mxu0 0.0
    %158 = vmatprep.subr.mxu0 0.0
    %159 = vmatpush1.msra.mxu0 0.0
    %160 = vmatprep.subr.mxu0 0.0
    %161 = vmatpush1.msra.mxu0 0.0
    %162 = vmatprep.subr.mxu0 0.0
    %163 = vmatpush1.msra.mxu0 0.0
    %164 = vmatprep.subr.mxu0 0.0
    %165 = vmatpush1.msra.mxu0 0.0
    %166 = vmatprep.subr.mxu0 0.0
    %167 = vmatpush1.msra.mxu0 0.0
    %168 = vmatprep.subr.mxu0 0.0
    %169 = vmatpush1.msra.mxu0 0.0
    %170 = vmatprep.subr.mxu0 0.0
    %171 = vmatpush1.msra.mxu0 0.0
    %172 = vmatprep.subr.mxu0 0.0
    %173 = vmatpush1.msra.mxu0 0.0
    %174 = vmatprep.subr.mxu0 0.0
    %175 = vmatpush1.msra.mxu0 0.0
    %176 = vmatprep.subr.mxu0 0.0
    %177 = vmatpush1.msra.mxu0 0.0
    %178 = vmatprep.subr.mxu0 0.0
    %179 = vmatpush1.msra.mxu0 0.0
    %180 = vmatprep.subr.mxu0 0.0
    %181 = vmatpush1.msra.mxu0 0.0
    %182 = vmatprep.subr.mxu0 0.0
    %183 = vmatpush1.msra.mxu0 0.0
    %184 = vmatprep.subr.mxu0 0.0
    %185 = vmatpush1.msra.mxu0 0.0
    %186 = vmatprep.subr.mxu0 0.0
    %187 = vmatpush1.msra.mxu0 0.0
    %188 = vmatprep.subr.mxu0 0.0
    %189 = vmatpush1.msra.mxu0 0.0
    %190 = vmatprep.subr.mxu0 0.0
    %191 = vmatpush1.msra.mxu0 0.0
    %192 = vmatprep.mubr.f32.mxu0 0.0
    %193 = vmatmul.mubr.f32.gmra.mrb[0].mxu0 %v123
    %v194 = vpop.f32.mrb[0].mxu0
    %v195 = vadd.f32 %v120, %v194
    %v196 = vpop.f32.mrb[0].mxu0
    %197 = vmatprep.mubr.f32.mxu0 0.0
    %198 = vmatmul.mubr.f32.gmra.mrb[0].mxu0 %v126
    %v199 = vpop.f32.mrb[0].mxu0
    %v200 = vadd.f32 %v120, %v199
    %v201 = vpop.f32.mrb[0].mxu0
    %202 = vdwg.mxu0
    %v203 = vmax.f32 %v195, 0.0
    %v204 = vmax.f32 %v200, 0.0
    %v205 = vld [vmem:[#allocation2 + $0x10] sm:$0x1]
    %v206 = vld [vmem:[#allocation2 + $0x18] sm:$0x1]
    %vm207 = vcmask 261120
    %v208 = vsel %vm207, %v203, 0.0
    %209 = vadd.xlane.f32.xlu0 %v208
    %v210 = vpop.xlane.xlu0 %209
    %v211 = vsel %vm207, %v204, 0.0
    %212 = vadd.xlane.f32.xlu0 %v211
    %v213 = vpop.xlane.xlu0 %212
    %v214 = vrcp.pop 32.0
    %v215 = vmul.f32 %v210, %v214
    %v216 = vmul.f32 %v213, %v214
    %v217 = vsub.f32 %v203, %v215
    %v218 = vsub.f32 %v204, %v216
    %v219 = vmul.f32 %v217, %v217
    %v220 = vmul.f32 %v218, %v218
    %v221 = vsel %vm207, %v219, 0.0
    %222 = vadd.xlane.f32.xlu0 %v221
    %v223 = vpop.xlane.xlu0 %222
    %v224 = vsel %vm207, %v220, 0.0
    %225 = vadd.xlane.f32.xlu0 %v224
    %v226 = vpop.xlane.xlu0 %225
    %v227 = vmul.f32 %v223, %v214
    %v228 = vmul.f32 %v226, %v214
    %v229 = vadd.f32 %v227, 1e-05
    %v230 = vadd.f32 %v228, 1e-05
    %v231 = vrsqrt.pop %v229
    %v232 = vrsqrt.pop %v230
    %v233 = vmul.f32 %v217, %v231
    %v234 = vmul.f32 %v218, %v232
    %v235 = vlaneseq
    %v236 = vshrl.u32 %v235, 7
    %v237 = vsub.s32 0, %v236
    %v238 = vrot.slane %v205, %v237
    %v239 = vmul.f32 %v233, %v238
    %v240 = vmul.f32 %v234, %v238
    %v241 = vlaneseq
    %v242 = vshrl.u32 %v241, 7
    %v243 = vsub.s32 0, %v242
    %v244 = vrot.slane %v206, %v243
    %v245 = vadd.f32 %v239, %v244
    %v246 = vadd.f32 %v240, %v244
    %v247 = vld [vmem:[#allocation2 + $0x20] sm:$0xff]
    %v248 = vld [vmem:[#allocation2 + $0x28] sm:$0xff]
    %v249 = vld [vmem:[#allocation2 + $0x30] sm:$0xff]
    %v250 = vld [vmem:[#allocation2 + $0x38] sm:$0xff]
    %v252 = vsel %vm207, %v245, 0
    %v255 = vsel %vm207, %v246, 0
    %257 = vmatprep.subr.mxu0 0.0
    %258 = vmatpush1.msra.mxu0 %v247
    %259 = vmatprep.subr.mxu0 0.0
    %260 = vmatpush1.msra.mxu0 %v248
    %261 = vmatprep.subr.mxu0 0.0
    %262 = vmatpush1.msra.mxu0 %v249
    %263 = vmatprep.subr.mxu0 0.0
    %264 = vmatpush1.msra.mxu0 %v250
    %265 = vmatprep.subr.mxu0 0.0
    %266 = vmatpush1.msra.mxu0 0.0
    %267 = vmatprep.subr.mxu0 0.0
    %268 = vmatpush1.msra.mxu0 0.0
    %269 = vmatprep.subr.mxu0 0.0
    %270 = vmatpush1.msra.mxu0 0.0
    %271 = vmatprep.subr.mxu0 0.0
    %272 = vmatpush1.msra.mxu0 0.0
    %273 = vmatprep.subr.mxu0 0.0
    %274 = vmatpush1.msra.mxu0 0.0
    %275 = vmatprep.subr.mxu0 0.0
    %276 = vmatpush1.msra.mxu0 0.0
    %277 = vmatprep.subr.mxu0 0.0
    %278 = vmatpush1.msra.mxu0 0.0
    %279 = vmatprep.subr.mxu0 0.0
    %280 = vmatpush1.msra.mxu0 0.0
    %281 = vmatprep.subr.mxu0 0.0
    %282 = vmatpush1.msra.mxu0 0.0
    %283 = vmatprep.subr.mxu0 0.0
    %284 = vmatpush1.msra.mxu0 0.0
    %285 = vmatprep.subr.mxu0 0.0
    %286 = vmatpush1.msra.mxu0 0.0
    %287 = vmatprep.subr.mxu0 0.0
    %288 = vmatpush1.msra.mxu0 0.0
    %289 = vmatprep.subr.mxu0 0.0
    %290 = vmatpush1.msra.mxu0 0.0
    %291 = vmatprep.subr.mxu0 0.0
    %292 = vmatpush1.msra.mxu0 0.0
    %293 = vmatprep.subr.mxu0 0.0
    %294 = vmatpush1.msra.mxu0 0.0
    %295 = vmatprep.subr.mxu0 0.0
    %296 = vmatpush1.msra.mxu0 0.0
    %297 = vmatprep.subr.mxu0 0.0
    %298 = vmatpush1.msra.mxu0 0.0
    %299 = vmatprep.subr.mxu0 0.0
    %300 = vmatpush1.msra.mxu0 0.0
    %301 = vmatprep.subr.mxu0 0.0
    %302 = vmatpush1.msra.mxu0 0.0
    %303 = vmatprep.subr.mxu0 0.0
    %304 = vmatpush1.msra.mxu0 0.0
    %305 = vmatprep.subr.mxu0 0.0
    %306 = vmatpush1.msra.mxu0 0.0
    %307 = vmatprep.subr.mxu0 0.0
    %308 = vmatpush1.msra.mxu0 0.0
    %309 = vmatprep.subr.mxu0 0.0
    %310 = vmatpush1.msra.mxu0 0.0
    %311 = vmatprep.subr.mxu0 0.0
    %312 = vmatpush1.msra.mxu0 0.0
    %313 = vmatprep.subr.mxu0 0.0
    %314 = vmatpush1.msra.mxu0 0.0
    %315 = vmatprep.subr.mxu0 0.0
    %316 = vmatpush1.msra.mxu0 0.0
    %317 = vmatprep.subr.mxu0 0.0
    %318 = vmatpush1.msra.mxu0 0.0
    %319 = vmatprep.subr.mxu0 0.0
    %320 = vmatpush1.msra.mxu0 0.0
    %321 = vmatprep.mubr.f32.mxu0 0.0
    %322 = vmatmul.mubr.f32.gmra.mrb[0].mxu0 %v252
    %v323 = vpop.f32.mrb[0].mxu0
    %v324 = vadd.f32 0.0, %v323
    %v325 = vpop.f32.mrb[0].mxu0
    %326 = vmatprep.mubr.f32.mxu0 0.0
    %327 = vmatmul.mubr.f32.gmra.mrb[0].mxu0 %v255
    %v328 = vpop.f32.mrb[0].mxu0
    %v329 = vadd.f32 0.0, %v328
    %v330 = vpop.f32.mrb[0].mxu0
    %331 = vdwg.mxu0
    %v332 = vld [vmem:[#allocation2 + $0x40] sm:$0x1]
    %v333 = vlaneseq
    %v334 = vshrl.u32 %v333, 7
    %v335 = vsub.s32 0, %v334
    %v336 = vrot.slane %v332, %v335
    %337 = vmatprep.subr.mxu0 0.0
    %338 = vmatpush1.msra.mxu0 %v324
    %339 = vmatprep.subr.mxu0 0.0
    %340 = vmatpush1.msra.mxu0 %v329
    %341 = vmatprep.subr.mxu0 0.0
    %342 = vmatpush1.msra.mxu0 0.0
    %343 = vmatprep.subr.mxu0 0.0
    %344 = vmatpush1.msra.mxu0 0.0
    %345 = vmatprep.subr.mxu0 0.0
    %346 = vmatpush1.msra.mxu0 0.0
    %347 = vmatprep.subr.mxu0 0.0
    %348 = vmatpush1.msra.mxu0 0.0
    %349 = vmatprep.subr.mxu0 0.0
    %350 = vmatpush1.msra.mxu0 0.0
    %351 = vmatprep.subr.mxu0 0.0
    %352 = vmatpush1.msra.mxu0 0.0
    %353 = vmatprep.subr.mxu0 0.0
    %354 = vmatpush1.msra.mxu0 0.0
    %355 = vmatprep.subr.mxu0 0.0
    %356 = vmatpush1.msra.mxu0 0.0
    %357 = vmatprep.subr.mxu0 0.0
    %358 = vmatpush1.msra.mxu0 0.0
    %359 = vmatprep.subr.mxu0 0.0
    %360 = vmatpush1.msra.mxu0 0.0
    %361 = vmatprep.subr.mxu0 0.0
    %362 = vmatpush1.msra.mxu0 0.0
    %363 = vmatprep.subr.mxu0 0.0
    %364 = vmatpush1.msra.mxu0 0.0
    %365 = vmatprep.subr.mxu0 0.0
    %366 = vmatpush1.msra.mxu0 0.0
    %367 = vmatprep.subr.mxu0 0.0
    %368 = vmatpush1.msra.mxu0 0.0
    %369 = vmatprep.subr.mxu0 0.0
    %370 = vmatpush1.msra.mxu0 0.0
    %371 = vmatprep.subr.mxu0 0.0
    %372 = vmatpush1.msra.mxu0 0.0
    %373 = vmatprep.subr.mxu0 0.0
    %374 = vmatpush1.msra.mxu0 0.0
    %375 = vmatprep.subr.mxu0 0.0
    %376 = vmatpush1.msra.mxu0 0.0
    %377 = vmatprep.subr.mxu0 0.0
    %378 = vmatpush1.msra.mxu0 0.0
    %379 = vmatprep.subr.mxu0 0.0
    %380 = vmatpush1.msra.mxu0 0.0
    %381 = vmatprep.subr.mxu0 0.0
    %382 = vmatpush1.msra.mxu0 0.0
    %383 = vmatprep.subr.mxu0 0.0
    %384 = vmatpush1.msra.mxu0 0.0
    %385 = vmatprep.subr.mxu0 0.0
    %386 = vmatpush1.msra.mxu0 0.0
    %387 = vmatprep.subr.mxu0 0.0
    %388 = vmatpush1.msra.mxu0 0.0
    %389 = vmatprep.subr.mxu0 0.0
    %390 = vmatpush1.msra.mxu0 0.0
    %391 = vmatprep.subr.mxu0 0.0
    %392 = vmatpush1.msra.mxu0 0.0
    %393 = vmatprep.subr.mxu0 0.0
    %394 = vmatpush1.msra.mxu0 0.0
    %395 = vmatprep.subr.mxu0 0.0
    %396 = vmatpush1.msra.mxu0 0.0
    %397 = vmatprep.subr.mxu0 0.0
    %398 = vmatpush1.msra.mxu0 0.0
    %399 = vmatprep.subr.mxu0 0.0
    %400 = vmatpush1.msra.mxu0 0.0
    %401 = vmatprep.mubr.f32.mxu0 0.0
    %402 = vmatmul.mubr.f32.gmra.mrb[0].mxu0 %v123
    %v403 = vpop.f32.mrb[0].mxu0
    %v404 = vadd.f32 %v336, %v403
    %v405 = vpop.f32.mrb[0].mxu0
    %406 = vmatprep.mubr.f32.mxu0 0.0
    %407 = vmatmul.mubr.f32.gmra.mrb[0].mxu0 %v126
    %v408 = vpop.f32.mrb[0].mxu0
    %v409 = vadd.f32 %v336, %v408
    %v410 = vpop.f32.mrb[0].mxu0
    %411 = vdwg.mxu0
    %v412 = vmax.f32 %v404, 0.0
    %v413 = vmax.f32 %v409, 0.0
    %v414 = vld [vmem:[#allocation2 + $0x48] sm:$0x1]
    %v415 = vld [vmem:[#allocation2 + $0x50] sm:$0x1]
    %v416 = vsel %vm121, %v412, 0.0
    %417 = vadd.xlane.f32.xlu0 %v416
    %v418 = vpop.xlane.xlu0 %417
    %v419 = vsel %vm121, %v413, 0.0
    %420 = vadd.xlane.f32.xlu0 %v419
    %v421 = vpop.xlane.xlu0 %420
    %v422 = vrcp.pop 16.0
    %v423 = vmul.f32 %v418, %v422
    %v424 = vmul.f32 %v421, %v422
    %v425 = vsub.f32 %v412, %v423
    %v426 = vsub.f32 %v413, %v424
    %v427 = vmul.f32 %v425, %v425
    %v428 = vmul.f32 %v426, %v426
    %v429 = vsel %vm121, %v427, 0.0
    %430 = vadd.xlane.f32.xlu0 %v429
    %v431 = vpop.xlane.xlu0 %430
    %v432 = vsel %vm121, %v428, 0.0
    %433 = vadd.xlane.f32.xlu0 %v432
    %v434 = vpop.xlane.xlu0 %433
    %v435 = vmul.f32 %v431, %v422
    %v436 = vmul.f32 %v434, %v422
    %v437 = vadd.f32 %v435, 1e-05
    %v438 = vadd.f32 %v436, 1e-05
    %v439 = vrsqrt.pop %v437
    %v440 = vrsqrt.pop %v438
    %v441 = vmul.f32 %v425, %v439
    %v442 = vmul.f32 %v426, %v440
    %v443 = vlaneseq
    %v444 = vshrl.u32 %v443, 7
    %v445 = vsub.s32 0, %v444
    %v446 = vrot.slane %v414, %v445
    %v447 = vmul.f32 %v441, %v446
    %v448 = vmul.f32 %v442, %v446
    %v449 = vlaneseq
    %v450 = vshrl.u32 %v449, 7
    %v451 = vsub.s32 0, %v450
    %v452 = vrot.slane %v415, %v451
    %v453 = vadd.f32 %v447, %v452
    %v454 = vadd.f32 %v448, %v452
    %v455 = vld [vmem:[#allocation2 + $0x58] sm:$0xff]
    %v456 = vld [vmem:[#allocation2 + $0x60] sm:$0xff]
    %v458 = vsel %vm121, %v453, 0
    %v461 = vsel %vm121, %v454, 0
    %463 = vmatprep.subr.mxu0 0.0
    %464 = vmatpush1.msra.mxu0 %v455
    %465 = vmatprep.subr.mxu0 0.0
    %466 = vmatpush1.msra.mxu0 %v456
    %467 = vmatprep.subr.mxu0 0.0
    %468 = vmatpush1.msra.mxu0 0.0
    %469 = vmatprep.subr.mxu0 0.0
    %470 = vmatpush1.msra.mxu0 0.0
    %471 = vmatprep.subr.mxu0 0.0
    %472 = vmatpush1.msra.mxu0 0.0
    %473 = vmatprep.subr.mxu0 0.0
    %474 = vmatpush1.msra.mxu0 0.0
    %475 = vmatprep.subr.mxu0 0.0
    %476 = vmatpush1.msra.mxu0 0.0
    %477 = vmatprep.subr.mxu0 0.0
    %478 = vmatpush1.msra.mxu0 0.0
    %479 = vmatprep.subr.mxu0 0.0
    %480 = vmatpush1.msra.mxu0 0.0
    %481 = vmatprep.subr.mxu0 0.0
    %482 = vmatpush1.msra.mxu0 0.0
    %483 = vmatprep.subr.mxu0 0.0
    %484 = vmatpush1.msra.mxu0 0.0
    %485 = vmatprep.subr.mxu0 0.0
    %486 = vmatpush1.msra.mxu0 0.0
    %487 = vmatprep.subr.mxu0 0.0
    %488 = vmatpush1.msra.mxu0 0.0
    %489 = vmatprep.subr.mxu0 0.0
    %490 = vmatpush1.msra.mxu0 0.0
    %491 = vmatprep.subr.mxu0 0.0
    %492 = vmatpush1.msra.mxu0 0.0
    %493 = vmatprep.subr.mxu0 0.0
    %494 = vmatpush1.msra.mxu0 0.0
    %495 = vmatprep.subr.mxu0 0.0
    %496 = vmatpush1.msra.mxu0 0.0
    %497 = vmatprep.subr.mxu0 0.0
    %498 = vmatpush1.msra.mxu0 0.0
    %499 = vmatprep.subr.mxu0 0.0
    %500 = vmatpush1.msra.mxu0 0.0
    %501 = vmatprep.subr.mxu0 0.0
    %502 = vmatpush1.msra.mxu0 0.0
    %503 = vmatprep.subr.mxu0 0.0
    %504 = vmatpush1.msra.mxu0 0.0
    %505 = vmatprep.subr.mxu0 0.0
    %506 = vmatpush1.msra.mxu0 0.0
    %507 = vmatprep.subr.mxu0 0.0
    %508 = vmatpush1.msra.mxu0 0.0
    %509 = vmatprep.subr.mxu0 0.0
    %510 = vmatpush1.msra.mxu0 0.0
    %511 = vmatprep.subr.mxu0 0.0
    %512 = vmatpush1.msra.mxu0 0.0
    %513 = vmatprep.subr.mxu0 0.0
    %514 = vmatpush1.msra.mxu0 0.0
    %515 = vmatprep.subr.mxu0 0.0
    %516 = vmatpush1.msra.mxu0 0.0
    %517 = vmatprep.subr.mxu0 0.0
    %518 = vmatpush1.msra.mxu0 0.0
    %519 = vmatprep.subr.mxu0 0.0
    %520 = vmatpush1.msra.mxu0 0.0
    %521 = vmatprep.subr.mxu0 0.0
    %522 = vmatpush1.msra.mxu0 0.0
    %523 = vmatprep.subr.mxu0 0.0
    %524 = vmatpush1.msra.mxu0 0.0
    %525 = vmatprep.subr.mxu0 0.0
    %526 = vmatpush1.msra.mxu0 0.0
    %527 = vmatprep.mubr.f32.mxu0 0.0
    %528 = vmatmul.mubr.f32.gmra.mrb[0].mxu0 %v458
    %v529 = vpop.f32.mrb[0].mxu0
    %v530 = vadd.f32 0.0, %v529
    %v531 = vpop.f32.mrb[0].mxu0
    %532 = vmatprep.mubr.f32.mxu0 0.0
    %533 = vmatmul.mubr.f32.gmra.mrb[0].mxu0 %v461
    %v534 = vpop.f32.mrb[0].mxu0
    %v535 = vadd.f32 0.0, %v534
    %v536 = vpop.f32.mrb[0].mxu0
    %537 = vdwg.mxu0
    %v538 = vld [vmem:[#allocation2 + $0x68] sm:$0x1]
    %v539 = vlaneseq
    %v540 = vshrl.u32 %v539, 7
    %v541 = vsub.s32 0, %v540
    %v542 = vrot.slane %v538, %v541
    %543 = vmatprep.subr.mxu0 0.0
    %544 = vmatpush1.msra.mxu0 %v530
    %545 = vmatprep.subr.mxu0 0.0
    %546 = vmatpush1.msra.mxu0 %v535
    %547 = vmatprep.subr.mxu0 0.0
    %548 = vmatpush1.msra.mxu0 0.0
    %549 = vmatprep.subr.mxu0 0.0
    %550 = vmatpush1.msra.mxu0 0.0
    %551 = vmatprep.subr.mxu0 0.0
    %552 = vmatpush1.msra.mxu0 0.0
    %553 = vmatprep.subr.mxu0 0.0
    %554 = vmatpush1.msra.mxu0 0.0
    %555 = vmatprep.subr.mxu0 0.0
    %556 = vmatpush1.msra.mxu0 0.0
    %557 = vmatprep.subr.mxu0 0.0
    %558 = vmatpush1.msra.mxu0 0.0
    %559 = vmatprep.subr.mxu0 0.0
    %560 = vmatpush1.msra.mxu0 0.0
    %561 = vmatprep.subr.mxu0 0.0
    %562 = vmatpush1.msra.mxu0 0.0
    %563 = vmatprep.subr.mxu0 0.0
    %564 = vmatpush1.msra.mxu0 0.0
    %565 = vmatprep.subr.mxu0 0.0
    %566 = vmatpush1.msra.mxu0 0.0
    %567 = vmatprep.subr.mxu0 0.0
    %568 = vmatpush1.msra.mxu0 0.0
    %569 = vmatprep.subr.mxu0 0.0
    %570 = vmatpush1.msra.mxu0 0.0
    %571 = vmatprep.subr.mxu0 0.0
    %572 = vmatpush1.msra.mxu0 0.0
    %573 = vmatprep.subr.mxu0 0.0
    %574 = vmatpush1.msra.mxu0 0.0
    %575 = vmatprep.subr.mxu0 0.0
    %576 = vmatpush1.msra.mxu0 0.0
    %577 = vmatprep.subr.mxu0 0.0
    %578 = vmatpush1.msra.mxu0 0.0
    %579 = vmatprep.subr.mxu0 0.0
    %580 = vmatpush1.msra.mxu0 0.0
    %581 = vmatprep.subr.mxu0 0.0
    %582 = vmatpush1.msra.mxu0 0.0
    %583 = vmatprep.subr.mxu0 0.0
    %584 = vmatpush1.msra.mxu0 0.0
    %585 = vmatprep.subr.mxu0 0.0
    %586 = vmatpush1.msra.mxu0 0.0
    %587 = vmatprep.subr.mxu0 0.0
    %588 = vmatpush1.msra.mxu0 0.0
    %589 = vmatprep.subr.mxu0 0.0
    %590 = vmatpush1.msra.mxu0 0.0
    %591 = vmatprep.subr.mxu0 0.0
    %592 = vmatpush1.msra.mxu0 0.0
    %593 = vmatprep.subr.mxu0 0.0
    %594 = vmatpush1.msra.mxu0 0.0
    %595 = vmatprep.subr.mxu0 0.0
    %596 = vmatpush1.msra.mxu0 0.0
    %597 = vmatprep.subr.mxu0 0.0
    %598 = vmatpush1.msra.mxu0 0.0
    %599 = vmatprep.subr.mxu0 0.0
    %600 = vmatpush1.msra.mxu0 0.0
    %601 = vmatprep.subr.mxu0 0.0
    %602 = vmatpush1.msra.mxu0 0.0
    %603 = vmatprep.subr.mxu0 0.0
    %604 = vmatpush1.msra.mxu0 0.0
    %605 = vmatprep.subr.mxu0 0.0
    %606 = vmatpush1.msra.mxu0 0.0
    %607 = vmatprep.mubr.f32.mxu0 0.0
    %608 = vmatmul.mubr.f32.gmra.mrb[0].mxu0 %v123
    %v609 = vpop.f32.mrb[0].mxu0
    %v610 = vadd.f32 %v542, %v609
    %v611 = vpop.f32.mrb[0].mxu0
    %612 = vmatprep.mubr.f32.mxu0 0.0
    %613 = vmatmul.mubr.f32.gmra.mrb[0].mxu0 %v126
    %v614 = vpop.f32.mrb[0].mxu0
    %v615 = vadd.f32 %v542, %v614
    %v616 = vpop.f32.mrb[0].mxu0
    %617 = vdwg.mxu0
    %v619 = vsel %vm34, %v610, 0
    %v622 = vsel %vm34, %v615, 0
    %624 = vmatprep.subr.mxu0 0.0
    %625 = vmatpush1.xpose.msra.mxu0 %v619
    %626 = vmatprep.subr.mxu0 0.0
    %627 = vmatpush1.xpose.msra.mxu0 %v622
    %628 = vmatprep.subr.mxu0 0.0
    %629 = vmatpush1.xpose.msra.mxu0 0.0
    %630 = vmatprep.subr.mxu0 0.0
    %631 = vmatpush1.xpose.msra.mxu0 0.0
    %632 = vmatprep.subr.mxu0 0.0
    %633 = vmatpush1.xpose.msra.mxu0 0.0
    %634 = vmatprep.subr.mxu0 0.0
    %635 = vmatpush1.xpose.msra.mxu0 0.0
    %636 = vmatprep.subr.mxu0 0.0
    %637 = vmatpush1.xpose.msra.mxu0 0.0
    %638 = vmatprep.subr.mxu0 0.0
    %639 = vmatpush1.xpose.msra.mxu0 0.0
    %640 = vmatprep.subr.mxu0 0.0
    %641 = vmatpush1.xpose.msra.mxu0 0.0
    %642 = vmatprep.subr.mxu0 0.0
    %643 = vmatpush1.xpose.msra.mxu0 0.0
    %644 = vmatprep.subr.mxu0 0.0
    %645 = vmatpush1.xpose.msra.mxu0 0.0
    %646 = vmatprep.subr.mxu0 0.0
    %647 = vmatpush1.xpose.msra.mxu0 0.0
    %648 = vmatprep.subr.mxu0 0.0
    %649 = vmatpush1.xpose.msra.mxu0 0.0
    %650 = vmatprep.subr.mxu0 0.0
    %651 = vmatpush1.xpose.msra.mxu0 0.0
    %652 = vmatprep.subr.mxu0 0.0
    %653 = vmatpush1.xpose.msra.mxu0 0.0
    %654 = vmatprep.subr.mxu0 0.0
    %655 = vmatpush1.xpose.msra.mxu0 0.0
    %656 = vmatprep.subr.mxu0 0.0
    %657 = vmatpush1.xpose.msra.mxu0 0.0
    %658 = vmatprep.subr.mxu0 0.0
    %659 = vmatpush1.xpose.msra.mxu0 0.0
    %660 = vmatprep.subr.mxu0 0.0
    %661 = vmatpush1.xpose.msra.mxu0 0.0
    %662 = vmatprep.subr.mxu0 0.0
    %663 = vmatpush1.xpose.msra.mxu0 0.0
    %664 = vmatprep.subr.mxu0 0.0
    %665 = vmatpush1.xpose.msra.mxu0 0.0
    %666 = vmatprep.subr.mxu0 0.0
    %667 = vmatpush1.xpose.msra.mxu0 0.0
    %668 = vmatprep.subr.mxu0 0.0
    %669 = vmatpush1.xpose.msra.mxu0 0.0
    %670 = vmatprep.subr.mxu0 0.0
    %671 = vmatpush1.xpose.msra.mxu0 0.0
    %672 = vmatprep.subr.mxu0 0.0
    %673 = vmatpush1.xpose.msra.mxu0 0.0
    %674 = vmatprep.subr.mxu0 0.0
    %675 = vmatpush1.xpose.msra.mxu0 0.0
    %676 = vmatprep.subr.mxu0 0.0
    %677 = vmatpush1.xpose.msra.mxu0 0.0
    %678 = vmatprep.subr.mxu0 0.0
    %679 = vmatpush1.xpose.msra.mxu0 0.0
    %680 = vmatprep.subr.mxu0 0.0
    %681 = vmatpush1.xpose.msra.mxu0 0.0
    %682 = vmatprep.subr.mxu0 0.0
    %683 = vmatpush1.xpose.msra.mxu0 0.0
    %684 = vmatprep.subr.mxu0 0.0
    %685 = vmatpush1.xpose.msra.mxu0 0.0
    %686 = vmatprep.subr.mxu0 0.0
    %687 = vmatpush1.xpose.msra.mxu0 0.0
    %688 = vmatprep.mubr.f32.mxu0 0.0
    %689 = vmatmul.mubr.f32.gmra.mrb[0].mxu0 %v619
    %v690 = vpop.f32.mrb[0].mxu0
    %v691 = vadd.f32 0.0, %v690
    %v692 = vpop.f32.mrb[0].mxu0
    %693 = vmatprep.mubr.f32.mxu0 0.0
    %694 = vmatmul.mubr.f32.gmra.mrb[0].mxu0 %v622
    %v695 = vpop.f32.mrb[0].mxu0
    %v696 = vadd.f32 0.0, %v695
    %v697 = vpop.f32.mrb[0].mxu0
    %698 = vdwg.mxu0
    %v699 = vld [vmem:[#allocation2 + $0x90] sm:$0xff]
    %v700 = vld [vmem:[#allocation2 + $0x98] sm:$0xff]
    %v701 = vld [vmem:[#allocation2 + $0xa0] sm:$0xff]
    %v702 = vld [vmem:[#allocation2 + $0xa8] sm:$0xff]
    %v703 = vld [vmem:[#allocation2 + $0x70] sm:$0x3]
    %v704 = vld [vmem:[#allocation2 + $0x78] sm:$0x1]
    %v705 = vlaneseq
    %v706 = vshrl.u32 %v705, 7
    %v707 = vsub.s32 0, %v706
    %v708 = vrot.slane %v704, %v707
    %vm709 = vcmask 15360
    %v711 = vsel %vm709, %v29, 0
    %v714 = vsel %vm709, %v30, 0
    %v717 = vsel %vm709, %v31, 0
    %v720 = vsel %vm709, %v32, 0
    %vm722 = vcmask 1041408
    %v724 = vsel %vm722, %v703, 0
    %726 = vmatprep.subr.mxu0 0.0
    %727 = vmatpush1.msra.mxu0 %v724
    %728 = vmatprep.subr.mxu0 0.0
    %729 = vmatpush1.msra.mxu0 0.0
    %730 = vmatprep.subr.mxu0 0.0
    %731 = vmatpush1.msra.mxu0 0.0
    %732 = vmatprep.subr.mxu0 0.0
    %733 = vmatpush1.msra.mxu0 0.0
    %734 = vmatprep.subr.mxu0 0.0
    %735 = vmatpush1.msra.mxu0 0.0
    %736 = vmatprep.subr.mxu0 0.0
    %737 = vmatpush1.msra.mxu0 0.0
    %738 = vmatprep.subr.mxu0 0.0
    %739 = vmatpush1.msra.mxu0 0.0
    %740 = vmatprep.subr.mxu0 0.0
    %741 = vmatpush1.msra.mxu0 0.0
    %742 = vmatprep.subr.mxu0 0.0
    %743 = vmatpush1.msra.mxu0 0.0
    %744 = vmatprep.subr.mxu0 0.0
    %745 = vmatpush1.msra.mxu0 0.0
    %746 = vmatprep.subr.mxu0 0.0
    %747 = vmatpush1.msra.mxu0 0.0
    %748 = vmatprep.subr.mxu0 0.0
    %749 = vmatpush1.msra.mxu0 0.0
    %750 = vmatprep.subr.mxu0 0.0
    %751 = vmatpush1.msra.mxu0 0.0
    %752 = vmatprep.subr.mxu0 0.0
    %753 = vmatpush1.msra.mxu0 0.0
    %754 = vmatprep.subr.mxu0 0.0
    %755 = vmatpush1.msra.mxu0 0.0
    %756 = vmatprep.subr.mxu0 0.0
    %757 = vmatpush1.msra.mxu0 0.0
    %758 = vmatprep.subr.mxu0 0.0
    %759 = vmatpush1.msra.mxu0 0.0
    %760 = vmatprep.subr.mxu0 0.0
    %761 = vmatpush1.msra.mxu0 0.0
    %762 = vmatprep.subr.mxu0 0.0
    %763 = vmatpush1.msra.mxu0 0.0
    %764 = vmatprep.subr.mxu0 0.0
    %765 = vmatpush1.msra.mxu0 0.0
    %766 = vmatprep.subr.mxu0 0.0
    %767 = vmatpush1.msra.mxu0 0.0
    %768 = vmatprep.subr.mxu0 0.0
    %769 = vmatpush1.msra.mxu0 0.0
    %770 = vmatprep.subr.mxu0 0.0
    %771 = vmatpush1.msra.mxu0 0.0
    %772 = vmatprep.subr.mxu0 0.0
    %773 = vmatpush1.msra.mxu0 0.0
    %774 = vmatprep.subr.mxu0 0.0
    %775 = vmatpush1.msra.mxu0 0.0
    %776 = vmatprep.subr.mxu0 0.0
    %777 = vmatpush1.msra.mxu0 0.0
    %778 = vmatprep.subr.mxu0 0.0
    %779 = vmatpush1.msra.mxu0 0.0
    %780 = vmatprep.subr.mxu0 0.0
    %781 = vmatpush1.msra.mxu0 0.0
    %782 = vmatprep.subr.mxu0 0.0
    %783 = vmatpush1.msra.mxu0 0.0
    %784 = vmatprep.subr.mxu0 0.0
    %785 = vmatpush1.msra.mxu0 0.0
    %786 = vmatprep.subr.mxu0 0.0
    %787 = vmatpush1.msra.mxu0 0.0
    %788 = vmatprep.subr.mxu0 0.0
    %789 = vmatpush1.msra.mxu0 0.0
    %790 = vmatprep.mubr.f32.mxu0 0.0
    %791 = vmatmul.mubr.f32.gmra.mrb[0].mxu0 %v711
    %v792 = vpop.f32.mrb[0].mxu0
    %v793 = vadd.f32 %v708, %v792
    %v794 = vpop.f32.mrb[0].mxu0
    %795 = vmatprep.mubr.f32.mxu0 0.0
    %796 = vmatmul.mubr.f32.gmra.mrb[0].mxu0 %v714
    %v797 = vpop.f32.mrb[0].mxu0
    %v798 = vadd.f32 %v708, %v797
    %v799 = vpop.f32.mrb[0].mxu0
    %800 = vmatprep.mubr.f32.mxu0 0.0
    %801 = vmatmul.mubr.f32.gmra.mrb[0].mxu0 %v717
    %v802 = vpop.f32.mrb[0].mxu0
    %v803 = vadd.f32 %v708, %v802
    %v804 = vpop.f32.mrb[0].mxu0
    %805 = vmatprep.mubr.f32.mxu0 0.0
    %806 = vmatmul.mubr.f32.gmra.mrb[0].mxu0 %v720
    %v807 = vpop.f32.mrb[0].mxu0
    %v808 = vadd.f32 %v708, %v807
    %v809 = vpop.f32.mrb[0].mxu0
    %810 = vdwg.mxu0
    %v811 = vmax.f32 %v793, 0.0
    %v812 = vmax.f32 %v798, 0.0
    %v813 = vmax.f32 %v803, 0.0
    %v814 = vmax.f32 %v808, 0.0
    %v815 = vld [vmem:[#allocation2 + $0x80] sm:$0x1]
    %v816 = vld [vmem:[#allocation2 + $0x88] sm:$0x1]
    %v818 = vsel %vm207, %v811, 0
    %v821 = vsel %vm207, %v812, 0
    %v824 = vsel %vm207, %v813, 0
    %v827 = vsel %vm207, %v814, 0
    %829 = vmatprep.subr.mxu0 0.0
    %830 = vmatpush1.msra.mxu0 %v699
    %831 = vmatprep.subr.mxu0 0.0
    %832 = vmatpush1.msra.mxu0 %v700
    %833 = vmatprep.subr.mxu0 0.0
    %834 = vmatpush1.msra.mxu0 %v701
    %835 = vmatprep.subr.mxu0 0.0
    %836 = vmatpush1.msra.mxu0 %v702
    %837 = vmatprep.subr.mxu0 0.0
    %838 = vmatpush1.msra.mxu0 0.0
    %839 = vmatprep.subr.mxu0 0.0
    %840 = vmatpush1.msra.mxu0 0.0
    %841 = vmatprep.subr.mxu0 0.0
    %842 = vmatpush1.msra.mxu0 0.0
    %843 = vmatprep.subr.mxu0 0.0
    %844 = vmatpush1.msra.mxu0 0.0
    %845 = vmatprep.subr.mxu0 0.0
    %846 = vmatpush1.msra.mxu0 0.0
    %847 = vmatprep.subr.mxu0 0.0
    %848 = vmatpush1.msra.mxu0 0.0
    %849 = vmatprep.subr.mxu0 0.0
    %850 = vmatpush1.msra.mxu0 0.0
    %851 = vmatprep.subr.mxu0 0.0
    %852 = vmatpush1.msra.mxu0 0.0
    %853 = vmatprep.subr.mxu0 0.0
    %854 = vmatpush1.msra.mxu0 0.0
    %855 = vmatprep.subr.mxu0 0.0
    %856 = vmatpush1.msra.mxu0 0.0
    %857 = vmatprep.subr.mxu0 0.0
    %858 = vmatpush1.msra.mxu0 0.0
    %859 = vmatprep.subr.mxu0 0.0
    %860 = vmatpush1.msra.mxu0 0.0
    %861 = vmatprep.subr.mxu0 0.0
    %862 = vmatpush1.msra.mxu0 0.0
    %863 = vmatprep.subr.mxu0 0.0
    %864 = vmatpush1.msra.mxu0 0.0
    %865 = vmatprep.subr.mxu0 0.0
    %866 = vmatpush1.msra.mxu0 0.0
    %867 = vmatprep.subr.mxu0 0.0
    %868 = vmatpush1.msra.mxu0 0.0
    %869 = vmatprep.subr.mxu0 0.0
    %870 = vmatpush1.msra.mxu0 0.0
    %871 = vmatprep.subr.mxu0 0.0
    %872 = vmatpush1.msra.mxu0 0.0
    %873 = vmatprep.subr.mxu0 0.0
    %874 = vmatpush1.msra.mxu0 0.0
    %875 = vmatprep.subr.mxu0 0.0
    %876 = vmatpush1.msra.mxu0 0.0
    %877 = vmatprep.subr.mxu0 0.0
    %878 = vmatpush1.msra.mxu0 0.0
    %879 = vmatprep.subr.mxu0 0.0
    %880 = vmatpush1.msra.mxu0 0.0
    %881 = vmatprep.subr.mxu0 0.0
    %882 = vmatpush1.msra.mxu0 0.0
    %883 = vmatprep.subr.mxu0 0.0
    %884 = vmatpush1.msra.mxu0 0.0
    %885 = vmatprep.subr.mxu0 0.0
    %886 = vmatpush1.msra.mxu0 0.0
    %887 = vmatprep.subr.mxu0 0.0
    %888 = vmatpush1.msra.mxu0 0.0
    %889 = vmatprep.subr.mxu0 0.0
    %890 = vmatpush1.msra.mxu0 0.0
    %891 = vmatprep.subr.mxu0 0.0
    %892 = vmatpush1.msra.mxu0 0.0
    %893 = vmatprep.mubr.f32.mxu0 0.0
    %894 = vmatmul.mubr.f32.gmra.mrb[0].mxu0 %v818
    %v895 = vpop.f32.mrb[0].mxu0
    %v896 = vadd.f32 0.0, %v895
    %v897 = vpop.f32.mrb[0].mxu0
    %898 = vmatprep.mubr.f32.mxu0 0.0
    %899 = vmatmul.mubr.f32.gmra.mrb[0].mxu0 %v821
    %v900 = vpop.f32.mrb[0].mxu0
    %v901 = vadd.f32 0.0, %v900
    %v902 = vpop.f32.mrb[0].mxu0
    %903 = vmatprep.mubr.f32.mxu0 0.0
    %904 = vmatmul.mubr.f32.gmra.mrb[0].mxu0 %v824
    %v905 = vpop.f32.mrb[0].mxu0
    %v906 = vadd.f32 0.0, %v905
    %v907 = vpop.f32.mrb[0].mxu0
    %908 = vmatprep.mubr.f32.mxu0 0.0
    %909 = vmatmul.mubr.f32.gmra.mrb[0].mxu0 %v827
    %v910 = vpop.f32.mrb[0].mxu0
    %v911 = vadd.f32 0.0, %v910
    %v912 = vpop.f32.mrb[0].mxu0
    %913 = vdwg.mxu0
    %v914 = vsub.f32 %v811, %v896
    %v915 = vsub.f32 %v812, %v901
    %v916 = vsub.f32 %v813, %v906
    %v917 = vsub.f32 %v814, %v911
    %v918 = vmul.f32 %v914, %v914
    %v919 = vmul.f32 %v915, %v915
    %v920 = vmul.f32 %v916, %v916
    %v921 = vmul.f32 %v917, %v917
    %v923 = vsel %vm207, %v918, 0
    %v926 = vsel %vm207, %v919, 0
    %v929 = vsel %vm207, %v920, 0
    %v932 = vsel %vm207, %v921, 0
    %934 = vmatprep.subr.mxu0 0.0
    %935 = vmatpush1.msra.mxu0 %v699
    %936 = vmatprep.subr.mxu0 0.0
    %937 = vmatpush1.msra.mxu0 %v700
    %938 = vmatprep.subr.mxu0 0.0
    %939 = vmatpush1.msra.mxu0 %v701
    %940 = vmatprep.subr.mxu0 0.0
    %941 = vmatpush1.msra.mxu0 %v702
    %942 = vmatprep.subr.mxu0 0.0
    %943 = vmatpush1.msra.mxu0 0.0
    %944 = vmatprep.subr.mxu0 0.0
    %945 = vmatpush1.msra.mxu0 0.0
    %946 = vmatprep.subr.mxu0 0.0
    %947 = vmatpush1.msra.mxu0 0.0
    %948 = vmatprep.subr.mxu0 0.0
    %949 = vmatpush1.msra.mxu0 0.0
    %950 = vmatprep.subr.mxu0 0.0
    %951 = vmatpush1.msra.mxu0 0.0
    %952 = vmatprep.subr.mxu0 0.0
    %953 = vmatpush1.msra.mxu0 0.0
    %954 = vmatprep.subr.mxu0 0.0
    %955 = vmatpush1.msra.mxu0 0.0
    %956 = vmatprep.subr.mxu0 0.0
    %957 = vmatpush1.msra.mxu0 0.0
    %958 = vmatprep.subr.mxu0 0.0
    %959 = vmatpush1.msra.mxu0 0.0
    %960 = vmatprep.subr.mxu0 0.0
    %961 = vmatpush1.msra.mxu0 0.0
    %962 = vmatprep.subr.mxu0 0.0
    %963 = vmatpush1.msra.mxu0 0.0
    %964 = vmatprep.subr.mxu0 0.0
    %965 = vmatpush1.msra.mxu0 0.0
    %966 = vmatprep.subr.mxu0 0.0
    %967 = vmatpush1.msra.mxu0 0.0
    %968 = vmatprep.subr.mxu0 0.0
    %969 = vmatpush1.msra.mxu0 0.0
    %970 = vmatprep.subr.mxu0 0.0
    %971 = vmatpush1.msra.mxu0 0.0
    %972 = vmatprep.subr.mxu0 0.0
    %973 = vmatpush1.msra.mxu0 0.0
    %974 = vmatprep.subr.mxu0 0.0
    %975 = vmatpush1.msra.mxu0 0.0
    %976 = vmatprep.subr.mxu0 0.0
    %977 = vmatpush1.msra.mxu0 0.0
    %978 = vmatprep.subr.mxu0 0.0
    %979 = vmatpush1.msra.mxu0 0.0
    %980 = vmatprep.subr.mxu0 0.0
    %981 = vmatpush1.msra.mxu0 0.0
    %982 = vmatprep.subr.mxu0 0.0
    %983 = vmatpush1.msra.mxu0 0.0
    %984 = vmatprep.subr.mxu0 0.0
    %985 = vmatpush1.msra.mxu0 0.0
    %986 = vmatprep.subr.mxu0 0.0
    %987 = vmatpush1.msra.mxu0 0.0
    %988 = vmatprep.subr.mxu0 0.0
    %989 = vmatpush1.msra.mxu0 0.0
    %990 = vmatprep.subr.mxu0 0.0
    %991 = vmatpush1.msra.mxu0 0.0
    %992 = vmatprep.subr.mxu0 0.0
    %993 = vmatpush1.msra.mxu0 0.0
    %994 = vmatprep.subr.mxu0 0.0
    %995 = vmatpush1.msra.mxu0 0.0
    %996 = vmatprep.subr.mxu0 0.0
    %997 = vmatpush1.msra.mxu0 0.0
    %998 = vmatprep.mubr.f32.mxu0 0.0
    %999 = vmatmul.mubr.f32.gmra.mrb[0].mxu0 %v923
    %v1000 = vpop.f32.mrb[0].mxu0
    %v1001 = vadd.f32 1e-05, %v1000
    %v1002 = vpop.f32.mrb[0].mxu0
    %1003 = vmatprep.mubr.f32.mxu0 0.0
    %1004 = vmatmul.mubr.f32.gmra.mrb[0].mxu0 %v926
    %v1005 = vpop.f32.mrb[0].mxu0
    %v1006 = vadd.f32 1e-05, %v1005
    %v1007 = vpop.f32.mrb[0].mxu0
    %1008 = vmatprep.mubr.f32.mxu0 0.0
    %1009 = vmatmul.mubr.f32.gmra.mrb[0].mxu0 %v929
    %v1010 = vpop.f32.mrb[0].mxu0
    %v1011 = vadd.f32 1e-05, %v1010
    %v1012 = vpop.f32.mrb[0].mxu0
    %1013 = vmatprep.mubr.f32.mxu0 0.0
    %1014 = vmatmul.mubr.f32.gmra.mrb[0].mxu0 %v932
    %v1015 = vpop.f32.mrb[0].mxu0
    %v1016 = vadd.f32 1e-05, %v1015
    %v1017 = vpop.f32.mrb[0].mxu0
    %1018 = vdwg.mxu0
    %v1019 = vrsqrt.pop %v1001
    %v1020 = vrsqrt.pop %v1006
    %v1021 = vrsqrt.pop %v1011
    %v1022 = vrsqrt.pop %v1016
    %v1023 = vmul.f32 %v914, %v1019
    %v1024 = vmul.f32 %v915, %v1020
    %v1025 = vmul.f32 %v916, %v1021
    %v1026 = vmul.f32 %v917, %v1022
    %v1027 = vlaneseq
    %v1028 = vshrl.u32 %v1027, 7
    %v1029 = vsub.s32 0, %v1028
    %v1030 = vrot.slane %v815, %v1029
    %v1031 = vmul.f32 %v1023, %v1030
    %v1032 = vmul.f32 %v1024, %v1030
    %v1033 = vmul.f32 %v1025, %v1030
    %v1034 = vmul.f32 %v1026, %v1030
    %v1035 = vlaneseq
    %v1036 = vshrl.u32 %v1035, 7
    %v1037 = vsub.s32 0, %v1036
    %v1038 = vrot.slane %v816, %v1037
    %v1039 = vadd.f32 %v1031, %v1038
    %v1040 = vadd.f32 %v1032, %v1038
    %v1041 = vadd.f32 %v1033, %v1038
    %v1042 = vadd.f32 %v1034, %v1038
    %v1043 = vld [vmem:[#allocation2 + $0xb0] sm:$0xff]
    %v1044 = vld [vmem:[#allocation2 + $0xb8] sm:$0xff]
    %v1045 = vld [vmem:[#allocation2 + $0xc0] sm:$0xff]
    %v1046 = vld [vmem:[#allocation2 + $0xc8] sm:$0xff]
    %v1047 = vld [vmem:[#allocation2 + $0xd0] sm:$0x1]
    %v1048 = vlaneseq
    %v1049 = vshrl.u32 %v1048, 7
    %v1050 = vsub.s32 0, %v1049
    %v1051 = vrot.slane %v1047, %v1050
    %v1053 = vsel %vm207, %v1039, 0
    %v1056 = vsel %vm207, %v1040, 0
    %v1059 = vsel %vm207, %v1041, 0
    %v1062 = vsel %vm207, %v1042, 0
    %1064 = vmatprep.subr.mxu0 0.0
    %1065 = vmatpush1.msra.mxu0 %v1043
    %1066 = vmatprep.subr.mxu0 0.0
    %1067 = vmatpush1.msra.mxu0 %v1044
    %1068 = vmatprep.subr.mxu0 0.0
    %1069 = vmatpush1.msra.mxu0 %v1045
    %1070 = vmatprep.subr.mxu0 0.0
    %1071 = vmatpush1.msra.mxu0 %v1046
    %1072 = vmatprep.subr.mxu0 0.0
    %1073 = vmatpush1.msra.mxu0 0.0
    %1074 = vmatprep.subr.mxu0 0.0
    %1075 = vmatpush1.msra.mxu0 0.0
    %1076 = vmatprep.subr.mxu0 0.0
    %1077 = vmatpush1.msra.mxu0 0.0
    %1078 = vmatprep.subr.mxu0 0.0
    %1079 = vmatpush1.msra.mxu0 0.0
    %1080 = vmatprep.subr.mxu0 0.0
    %1081 = vmatpush1.msra.mxu0 0.0
    %1082 = vmatprep.subr.mxu0 0.0
    %1083 = vmatpush1.msra.mxu0 0.0
    %1084 = vmatprep.subr.mxu0 0.0
    %1085 = vmatpush1.msra.mxu0 0.0
    %1086 = vmatprep.subr.mxu0 0.0
    %1087 = vmatpush1.msra.mxu0 0.0
    %1088 = vmatprep.subr.mxu0 0.0
    %1089 = vmatpush1.msra.mxu0 0.0
    %1090 = vmatprep.subr.mxu0 0.0
    %1091 = vmatpush1.msra.mxu0 0.0
    %1092 = vmatprep.subr.mxu0 0.0
    %1093 = vmatpush1.msra.mxu0 0.0
    %1094 = vmatprep.subr.mxu0 0.0
    %1095 = vmatpush1.msra.mxu0 0.0
    %1096 = vmatprep.subr.mxu0 0.0
    %1097 = vmatpush1.msra.mxu0 0.0
    %1098 = vmatprep.subr.mxu0 0.0
    %1099 = vmatpush1.msra.mxu0 0.0
    %1100 = vmatprep.subr.mxu0 0.0
    %1101 = vmatpush1.msra.mxu0 0.0
    %1102 = vmatprep.subr.mxu0 0.0
    %1103 = vmatpush1.msra.mxu0 0.0
    %1104 = vmatprep.subr.mxu0 0.0
    %1105 = vmatpush1.msra.mxu0 0.0
    %1106 = vmatprep.subr.mxu0 0.0
    %1107 = vmatpush1.msra.mxu0 0.0
    %1108 = vmatprep.subr.mxu0 0.0
    %1109 = vmatpush1.msra.mxu0 0.0
    %1110 = vmatprep.subr.mxu0 0.0
    %1111 = vmatpush1.msra.mxu0 0.0
    %1112 = vmatprep.subr.mxu0 0.0
    %1113 = vmatpush1.msra.mxu0 0.0
    %1114 = vmatprep.subr.mxu0 0.0
    %1115 = vmatpush1.msra.mxu0 0.0
    %1116 = vmatprep.subr.mxu0 0.0
    %1117 = vmatpush1.msra.mxu0 0.0
    %1118 = vmatprep.subr.mxu0 0.0
    %1119 = vmatpush1.msra.mxu0 0.0
    %1120 = vmatprep.subr.mxu0 0.0
    %1121 = vmatpush1.msra.mxu0 0.0
    %1122 = vmatprep.subr.mxu0 0.0
    %1123 = vmatpush1.msra.mxu0 0.0
    %1124 = vmatprep.subr.mxu0 0.0
    %1125 = vmatpush1.msra.mxu0 0.0
    %1126 = vmatprep.subr.mxu0 0.0
    %1127 = vmatpush1.msra.mxu0 0.0
    %1128 = vmatprep.mubr.f32.mxu0 0.0
    %1129 = vmatmul.mubr.f32.gmra.mrb[0].mxu0 %v1053
    %v1130 = vpop.f32.mrb[0].mxu0
    %v1131 = vadd.f32 %v1051, %v1130
    %v1132 = vpop.f32.mrb[0].mxu0
    %1133 = vmatprep.mubr.f32.mxu0 0.0
    %1134 = vmatmul.mubr.f32.gmra.mrb[0].mxu0 %v1056
    %v1135 = vpop.f32.mrb[0].mxu0
    %v1136 = vadd.f32 %v1051, %v1135
    %v1137 = vpop.f32.mrb[0].mxu0
    %1138 = vmatprep.mubr.f32.mxu0 0.0
    %1139 = vmatmul.mubr.f32.gmra.mrb[0].mxu0 %v1059
    %v1140 = vpop.f32.mrb[0].mxu0
    %v1141 = vadd.f32 %v1051, %v1140
    %v1142 = vpop.f32.mrb[0].mxu0
    %1143 = vmatprep.mubr.f32.mxu0 0.0
    %1144 = vmatmul.mubr.f32.gmra.mrb[0].mxu0 %v1062
    %v1145 = vpop.f32.mrb[0].mxu0
    %v1146 = vadd.f32 %v1051, %v1145
    %v1147 = vpop.f32.mrb[0].mxu0
    %1148 = vdwg.mxu0
    %v1149 = vmax.f32 %v1131, 0.0
    %v1150 = vmax.f32 %v1136, 0.0
    %v1151 = vmax.f32 %v1141, 0.0
    %v1152 = vmax.f32 %v1146, 0.0
    %v1153 = vld [vmem:[#allocation2 + $0x200] sm:$0xff]
    %v1154 = vld [vmem:[#allocation2 + $0x208] sm:$0xff]
    %v1155 = vld [vmem:[#allocation2 + $0x210] sm:$0xff]
    %v1156 = vld [vmem:[#allocation2 + $0x218] sm:$0xff]
    %v1158 = vsel %vm121, %v1153, 0
    %v1161 = vsel %vm121, %v1154, 0
    %v1164 = vsel %vm121, %v1155, 0
    %v1167 = vsel %vm121, %v1156, 0
    %1169 = vmatprep.subr.mxu0 0.0
    %1170 = vmatpush1.msra.mxu0 %v610
    %1171 = vmatprep.subr.mxu0 0.0
    %1172 = vmatpush1.msra.mxu0 %v615
    %1173 = vmatprep.subr.mxu0 0.0
    %1174 = vmatpush1.msra.mxu0 0.0
    %1175 = vmatprep.subr.mxu0 0.0
    %1176 = vmatpush1.msra.mxu0 0.0
    %1177 = vmatprep.subr.mxu0 0.0
    %1178 = vmatpush1.msra.mxu0 0.0
    %1179 = vmatprep.subr.mxu0 0.0
    %1180 = vmatpush1.msra.mxu0 0.0
    %1181 = vmatprep.subr.mxu0 0.0
    %1182 = vmatpush1.msra.mxu0 0.0
    %1183 = vmatprep.subr.mxu0 0.0
    %1184 = vmatpush1.msra.mxu0 0.0
    %1185 = vmatprep.subr.mxu0 0.0
    %1186 = vmatpush1.msra.mxu0 0.0
    %1187 = vmatprep.subr.mxu0 0.0
    %1188 = vmatpush1.msra.mxu0 0.0
    %1189 = vmatprep.subr.mxu0 0.0
    %1190 = vmatpush1.msra.mxu0 0.0
    %1191 = vmatprep.subr.mxu0 0.0
    %1192 = vmatpush1.msra.mxu0 0.0
    %1193 = vmatprep.subr.mxu0 0.0
    %1194 = vmatpush1.msra.mxu0 0.0
    %1195 = vmatprep.subr.mxu0 0.0
    %1196 = vmatpush1.msra.mxu0 0.0
    %1197 = vmatprep.subr.mxu0 0.0
    %1198 = vmatpush1.msra.mxu0 0.0
    %1199 = vmatprep.subr.mxu0 0.0
    %1200 = vmatpush1.msra.mxu0 0.0
    %1201 = vmatprep.subr.mxu0 0.0
    %1202 = vmatpush1.msra.mxu0 0.0
    %1203 = vmatprep.subr.mxu0 0.0
    %1204 = vmatpush1.msra.mxu0 0.0
    %1205 = vmatprep.subr.mxu0 0.0
    %1206 = vmatpush1.msra.mxu0 0.0
    %1207 = vmatprep.subr.mxu0 0.0
    %1208 = vmatpush1.msra.mxu0 0.0
    %1209 = vmatprep.subr.mxu0 0.0
    %1210 = vmatpush1.msra.mxu0 0.0
    %1211 = vmatprep.subr.mxu0 0.0
    %1212 = vmatpush1.msra.mxu0 0.0
    %1213 = vmatprep.subr.mxu0 0.0
    %1214 = vmatpush1.msra.mxu0 0.0
    %1215 = vmatprep.subr.mxu0 0.0
    %1216 = vmatpush1.msra.mxu0 0.0
    %1217 = vmatprep.subr.mxu0 0.0
    %1218 = vmatpush1.msra.mxu0 0.0
    %1219 = vmatprep.subr.mxu0 0.0
    %1220 = vmatpush1.msra.mxu0 0.0
    %1221 = vmatprep.subr.mxu0 0.0
    %1222 = vmatpush1.msra.mxu0 0.0
    %1223 = vmatprep.subr.mxu0 0.0
    %1224 = vmatpush1.msra.mxu0 0.0
    %1225 = vmatprep.subr.mxu0 0.0
    %1226 = vmatpush1.msra.mxu0 0.0
    %1227 = vmatprep.subr.mxu0 0.0
    %1228 = vmatpush1.msra.mxu0 0.0
    %1229 = vmatprep.subr.mxu0 0.0
    %1230 = vmatpush1.msra.mxu0 0.0
    %1231 = vmatprep.subr.mxu0 0.0
    %1232 = vmatpush1.msra.mxu0 0.0
    %1233 = vmatprep.mubr.f32.mxu0 0.0
    %1234 = vmatmul.mubr.f32.gmra.mrb[0].mxu0 %v1158
    %v1235 = vpop.f32.mrb[0].mxu0
    %v1236 = vadd.f32 0.0, %v1235
    %v1237 = vpop.f32.mrb[0].mxu0
    %1238 = vmatprep.mubr.f32.mxu0 0.0
    %1239 = vmatmul.mubr.f32.gmra.mrb[0].mxu0 %v1161
    %v1240 = vpop.f32.mrb[0].mxu0
    %v1241 = vadd.f32 0.0, %v1240
    %v1242 = vpop.f32.mrb[0].mxu0
    %1243 = vmatprep.mubr.f32.mxu0 0.0
    %1244 = vmatmul.mubr.f32.gmra.mrb[0].mxu0 %v1164
    %v1245 = vpop.f32.mrb[0].mxu0
    %v1246 = vadd.f32 0.0, %v1245
    %v1247 = vpop.f32.mrb[0].mxu0
    %1248 = vmatprep.mubr.f32.mxu0 0.0
    %1249 = vmatmul.mubr.f32.gmra.mrb[0].mxu0 %v1167
    %v1250 = vpop.f32.mrb[0].mxu0
    %v1251 = vadd.f32 0.0, %v1250
    %v1252 = vpop.f32.mrb[0].mxu0
    %1253 = vdwg.mxu0
    %v1254 = vld [vmem:[#allocation2 + $0xd8] sm:$0xff]
    %v1255 = vld [vmem:[#allocation2 + $0xe0] sm:$0xff]
    %v1256 = vld [vmem:[#allocation2 + $0xe8] sm:$0xff]
    %v1257 = vld [vmem:[#allocation2 + $0xf0] sm:$0xff]
    %v1258 = vld [vmem:[#allocation2 + $0xf8] sm:$0xff]
    %v1260 = vsel %vm34, %v1236, 0
    %v1263 = vsel %vm34, %v1241, 0
    %v1266 = vsel %vm34, %v1246, 0
    %v1269 = vsel %vm34, %v1251, 0
    %1271 = vmatprep.subr.mxu0 0.0
    %1272 = vmatpush1.msra.mxu0 %v1258
    %1273 = vmatprep.subr.mxu0 0.0
    %1274 = vmatpush1.msra.mxu0 0.0
    %1275 = vmatprep.subr.mxu0 0.0
    %1276 = vmatpush1.msra.mxu0 0.0
    %1277 = vmatprep.subr.mxu0 0.0
    %1278 = vmatpush1.msra.mxu0 0.0
    %1279 = vmatprep.subr.mxu0 0.0
    %1280 = vmatpush1.msra.mxu0 0.0
    %1281 = vmatprep.subr.mxu0 0.0
    %1282 = vmatpush1.msra.mxu0 0.0
    %1283 = vmatprep.subr.mxu0 0.0
    %1284 = vmatpush1.msra.mxu0 0.0
    %1285 = vmatprep.subr.mxu0 0.0
    %1286 = vmatpush1.msra.mxu0 0.0
    %1287 = vmatprep.subr.mxu0 0.0
    %1288 = vmatpush1.msra.mxu0 0.0
    %1289 = vmatprep.subr.mxu0 0.0
    %1290 = vmatpush1.msra.mxu0 0.0
    %1291 = vmatprep.subr.mxu0 0.0
    %1292 = vmatpush1.msra.mxu0 0.0
    %1293 = vmatprep.subr.mxu0 0.0
    %1294 = vmatpush1.msra.mxu0 0.0
    %1295 = vmatprep.subr.mxu0 0.0
    %1296 = vmatpush1.msra.mxu0 0.0
    %1297 = vmatprep.subr.mxu0 0.0
    %1298 = vmatpush1.msra.mxu0 0.0
    %1299 = vmatprep.subr.mxu0 0.0
    %1300 = vmatpush1.msra.mxu0 0.0
    %1301 = vmatprep.subr.mxu0 0.0
    %1302 = vmatpush1.msra.mxu0 0.0
    %1303 = vmatprep.subr.mxu0 0.0
    %1304 = vmatpush1.msra.mxu0 0.0
    %1305 = vmatprep.subr.mxu0 0.0
    %1306 = vmatpush1.msra.mxu0 0.0
    %1307 = vmatprep.subr.mxu0 0.0
    %1308 = vmatpush1.msra.mxu0 0.0
    %1309 = vmatprep.subr.mxu0 0.0
    %1310 = vmatpush1.msra.mxu0 0.0
    %1311 = vmatprep.subr.mxu0 0.0
    %1312 = vmatpush1.msra.mxu0 0.0
    %1313 = vmatprep.subr.mxu0 0.0
    %1314 = vmatpush1.msra.mxu0 0.0
    %1315 = vmatprep.subr.mxu0 0.0
    %1316 = vmatpush1.msra.mxu0 0.0
    %1317 = vmatprep.subr.mxu0 0.0
    %1318 = vmatpush1.msra.mxu0 0.0
    %1319 = vmatprep.subr.mxu0 0.0
    %1320 = vmatpush1.msra.mxu0 0.0
    %1321 = vmatprep.subr.mxu0 0.0
    %1322 = vmatpush1.msra.mxu0 0.0
    %1323 = vmatprep.subr.mxu0 0.0
    %1324 = vmatpush1.msra.mxu0 0.0
    %1325 = vmatprep.subr.mxu0 0.0
    %1326 = vmatpush1.msra.mxu0 0.0
    %1327 = vmatprep.subr.mxu0 0.0
    %1328 = vmatpush1.msra.mxu0 0.0
    %1329 = vmatprep.subr.mxu0 0.0
    %1330 = vmatpush1.msra.mxu0 0.0
    %1331 = vmatprep.subr.mxu0 0.0
    %1332 = vmatpush1.msra.mxu0 0.0
    %1333 = vmatprep.subr.mxu0 0.0
    %1334 = vmatpush1.msra.mxu0 0.0
    %1335 = vmatprep.mubr.f32.mxu0 0.0
    %1336 = vmatmul.mubr.f32.gmra.mrb[0].mxu0 %v1260
    %v1337 = vpop.f32.mrb[0].mxu0
    %v1338 = vadd.f32 0.0, %v1337
    %v1339 = vpop.f32.mrb[0].mxu0
    %1340 = vmatprep.mubr.f32.mxu0 0.0
    %1341 = vmatmul.mubr.f32.gmra.mrb[0].mxu0 %v1263
    %v1342 = vpop.f32.mrb[0].mxu0
    %v1343 = vadd.f32 0.0, %v1342
    %v1344 = vpop.f32.mrb[0].mxu0
    %1345 = vmatprep.mubr.f32.mxu0 0.0
    %1346 = vmatmul.mubr.f32.gmra.mrb[0].mxu0 %v1266
    %v1347 = vpop.f32.mrb[0].mxu0
    %v1348 = vadd.f32 0.0, %v1347
    %v1349 = vpop.f32.mrb[0].mxu0
    %1350 = vmatprep.mubr.f32.mxu0 0.0
    %1351 = vmatmul.mubr.f32.gmra.mrb[0].mxu0 %v1269
    %v1352 = vpop.f32.mrb[0].mxu0
    %v1353 = vadd.f32 0.0, %v1352
    %v1354 = vpop.f32.mrb[0].mxu0
    %1355 = vdwg.mxu0
    %v1357 = vsel %vm207, %v1149, 0
    %v1360 = vsel %vm207, %v1150, 0
    %v1363 = vsel %vm207, %v1151, 0
    %v1366 = vsel %vm207, %v1152, 0
    %1368 = vmatprep.subr.mxu0 0.0
    %1369 = vmatpush1.msra.mxu0 %v1254
    %1370 = vmatprep.subr.mxu0 0.0
    %1371 = vmatpush1.msra.mxu0 %v1255
    %1372 = vmatprep.subr.mxu0 0.0
    %1373 = vmatpush1.msra.mxu0 %v1256
    %1374 = vmatprep.subr.mxu0 0.0
    %1375 = vmatpush1.msra.mxu0 %v1257
    %1376 = vmatprep.subr.mxu0 0.0
    %1377 = vmatpush1.msra.mxu0 0.0
    %1378 = vmatprep.subr.mxu0 0.0
    %1379 = vmatpush1.msra.mxu0 0.0
    %1380 = vmatprep.subr.mxu0 0.0
    %1381 = vmatpush1.msra.mxu0 0.0
    %1382 = vmatprep.subr.mxu0 0.0
    %1383 = vmatpush1.msra.mxu0 0.0
    %1384 = vmatprep.subr.mxu0 0.0
    %1385 = vmatpush1.msra.mxu0 0.0
    %1386 = vmatprep.subr.mxu0 0.0
    %1387 = vmatpush1.msra.mxu0 0.0
    %1388 = vmatprep.subr.mxu0 0.0
    %1389 = vmatpush1.msra.mxu0 0.0
    %1390 = vmatprep.subr.mxu0 0.0
    %1391 = vmatpush1.msra.mxu0 0.0
    %1392 = vmatprep.subr.mxu0 0.0
    %1393 = vmatpush1.msra.mxu0 0.0
    %1394 = vmatprep.subr.mxu0 0.0
    %1395 = vmatpush1.msra.mxu0 0.0
    %1396 = vmatprep.subr.mxu0 0.0
    %1397 = vmatpush1.msra.mxu0 0.0
    %1398 = vmatprep.subr.mxu0 0.0
    %1399 = vmatpush1.msra.mxu0 0.0
    %1400 = vmatprep.subr.mxu0 0.0
    %1401 = vmatpush1.msra.mxu0 0.0
    %1402 = vmatprep.subr.mxu0 0.0
    %1403 = vmatpush1.msra.mxu0 0.0
    %1404 = vmatprep.subr.mxu0 0.0
    %1405 = vmatpush1.msra.mxu0 0.0
    %1406 = vmatprep.subr.mxu0 0.0
    %1407 = vmatpush1.msra.mxu0 0.0
    %1408 = vmatprep.subr.mxu0 0.0
    %1409 = vmatpush1.msra.mxu0 0.0
    %1410 = vmatprep.subr.mxu0 0.0
    %1411 = vmatpush1.msra.mxu0 0.0
    %1412 = vmatprep.subr.mxu0 0.0
    %1413 = vmatpush1.msra.mxu0 0.0
    %1414 = vmatprep.subr.mxu0 0.0
    %1415 = vmatpush1.msra.mxu0 0.0
    %1416 = vmatprep.subr.mxu0 0.0
    %1417 = vmatpush1.msra.mxu0 0.0
    %1418 = vmatprep.subr.mxu0 0.0
    %1419 = vmatpush1.msra.mxu0 0.0
    %1420 = vmatprep.subr.mxu0 0.0
    %1421 = vmatpush1.msra.mxu0 0.0
    %1422 = vmatprep.subr.mxu0 0.0
    %1423 = vmatpush1.msra.mxu0 0.0
    %1424 = vmatprep.subr.mxu0 0.0
    %1425 = vmatpush1.msra.mxu0 0.0
    %1426 = vmatprep.subr.mxu0 0.0
    %1427 = vmatpush1.msra.mxu0 0.0
    %1428 = vmatprep.subr.mxu0 0.0
    %1429 = vmatpush1.msra.mxu0 0.0
    %1430 = vmatprep.subr.mxu0 0.0
    %1431 = vmatpush1.msra.mxu0 0.0
    %1432 = vmatprep.mubr.f32.mxu0 0.0
    %1433 = vmatmul.mubr.f32.gmra.mrb[0].mxu0 %v1357
    %v1434 = vpop.f32.mrb[0].mxu0
    %v1435 = vadd.f32 %v1338, %v1434
    %v1436 = vpop.f32.mrb[0].mxu0
    %1437 = vmatprep.mubr.f32.mxu0 0.0
    %1438 = vmatmul.mubr.f32.gmra.mrb[0].mxu0 %v1360
    %v1439 = vpop.f32.mrb[0].mxu0
    %v1440 = vadd.f32 %v1343, %v1439
    %v1441 = vpop.f32.mrb[0].mxu0
    %1442 = vmatprep.mubr.f32.mxu0 0.0
    %1443 = vmatmul.mubr.f32.gmra.mrb[0].mxu0 %v1363
    %v1444 = vpop.f32.mrb[0].mxu0
    %v1445 = vadd.f32 %v1348, %v1444
    %v1446 = vpop.f32.mrb[0].mxu0
    %1447 = vmatprep.mubr.f32.mxu0 0.0
    %1448 = vmatmul.mubr.f32.gmra.mrb[0].mxu0 %v1366
    %v1449 = vpop.f32.mrb[0].mxu0
    %v1450 = vadd.f32 %v1353, %v1449
    %v1451 = vpop.f32.mrb[0].mxu0
    %1452 = vdwg.mxu0
    %v1453 = vld [vmem:[#allocation2 + $0x100] sm:$0x1]
    %v1454 = vlaneseq
    %v1455 = vshrl.u32 %v1454, 7
    %v1456 = vsub.s32 0, %v1455
    %v1457 = vrot.slane %v1453, %v1456
    %v1458 = vadd.f32 %v1435, %v1457
    %v1459 = vadd.f32 %v1440, %v1457
    %v1460 = vadd.f32 %v1445, %v1457
    %v1461 = vadd.f32 %v1450, %v1457
    %v1462 = vmax.f32 %v1458, 0.0
    %v1463 = vmax.f32 %v1459, 0.0
    %v1464 = vmax.f32 %v1460, 0.0
    %v1465 = vmax.f32 %v1461, 0.0
    %v1466 = vld [vmem:[#allocation2 + $0x108] sm:$0x1]
    %v1467 = vld [vmem:[#allocation2 + $0x110] sm:$0x1]
    %vm1468 = vcmask 228352
    %v1469 = vsel %vm1468, %v1462, 0.0
    %1470 = vadd.xlane.f32.xlu0 %v1469
    %v1471 = vpop.xlane.xlu0 %1470
    %v1472 = vsel %vm1468, %v1463, 0.0
    %1473 = vadd.xlane.f32.xlu0 %v1472
    %v1474 = vpop.xlane.xlu0 %1473
    %v1475 = vsel %vm1468, %v1464, 0.0
    %1476 = vadd.xlane.f32.xlu0 %v1475
    %v1477 = vpop.xlane.xlu0 %1476
    %v1478 = vsel %vm1468, %v1465, 0.0
    %1479 = vadd.xlane.f32.xlu0 %v1478
    %v1480 = vpop.xlane.xlu0 %1479
    %v1481 = vrcp.pop 28.0
    %v1482 = vmul.f32 %v1471, %v1481
    %v1483 = vmul.f32 %v1474, %v1481
    %v1484 = vmul.f32 %v1477, %v1481
    %v1485 = vmul.f32 %v1480, %v1481
    %v1486 = vsub.f32 %v1462, %v1482
    %v1487 = vsub.f32 %v1463, %v1483
    %v1488 = vsub.f32 %v1464, %v1484
    %v1489 = vsub.f32 %v1465, %v1485
    %v1490 = vmul.f32 %v1486, %v1486
    %v1491 = vmul.f32 %v1487, %v1487
    %v1492 = vmul.f32 %v1488, %v1488
    %v1493 = vmul.f32 %v1489, %v1489
    %v1494 = vsel %vm1468, %v1490, 0.0
    %1495 = vadd.xlane.f32.xlu0 %v1494
    %v1496 = vpop.xlane.xlu0 %1495
    %v1497 = vsel %vm1468, %v1491, 0.0
    %1498 = vadd.xlane.f32.xlu0 %v1497
    %v1499 = vpop.xlane.xlu0 %1498
    %v1500 = vsel %vm1468, %v1492, 0.0
    %1501 = vadd.xlane.f32.xlu0 %v1500
    %v1502 = vpop.xlane.xlu0 %1501
    %v1503 = vsel %vm1468, %v1493, 0.0
    %1504 = vadd.xlane.f32.xlu0 %v1503
    %v1505 = vpop.xlane.xlu0 %1504
    %v1506 = vmul.f32 %v1496, %v1481
    %v1507 = vmul.f32 %v1499, %v1481
    %v1508 = vmul.f32 %v1502, %v1481
    %v1509 = vmul.f32 %v1505, %v1481
    %v1510 = vadd.f32 %v1506, 1e-05
    %v1511 = vadd.f32 %v1507, 1e-05
    %v1512 = vadd.f32 %v1508, 1e-05
    %v1513 = vadd.f32 %v1509, 1e-05
    %v1514 = vrsqrt.pop %v1510
    %v1515 = vrsqrt.pop %v1511
    %v1516 = vrsqrt.pop %v1512
    %v1517 = vrsqrt.pop %v1513
    %v1518 = vmul.f32 %v1486, %v1514
    %v1519 = vmul.f32 %v1487, %v1515
    %v1520 = vmul.f32 %v1488, %v1516
    %v1521 = vmul.f32 %v1489, %v1517
    %v1522 = vlaneseq
    %v1523 = vshrl.u32 %v1522, 7
    %v1524 = vsub.s32 0, %v1523
    %v1525 = vrot.slane %v1466, %v1524
    %v1526 = vmul.f32 %v1518, %v1525
    %v1527 = vmul.f32 %v1519, %v1525
    %v1528 = vmul.f32 %v1520, %v1525
    %v1529 = vmul.f32 %v1521, %v1525
    %v1530 = vlaneseq
    %v1531 = vshrl.u32 %v1530, 7
    %v1532 = vsub.s32 0, %v1531
    %v1533 = vrot.slane %v1467, %v1532
    %v1534 = vadd.f32 %v1526, %v1533
    %v1535 = vadd.f32 %v1527, %v1533
    %v1536 = vadd.f32 %v1528, %v1533
    %v1537 = vadd.f32 %v1529, %v1533
    %v1538 = vld [vmem:[#allocation2 + $0x118] sm:$0xff]
    %v1539 = vld [vmem:[#allocation2 + $0x120] sm:$0xff]
    %v1540 = vld [vmem:[#allocation2 + $0x128] sm:$0xff]
    %v1541 = vld [vmem:[#allocation2 + $0x130] sm:$0xf]
    %v1542 = vld [vmem:[#allocation2 + $0x138] sm:$0x1]
    %v1543 = vlaneseq
    %v1544 = vshrl.u32 %v1543, 7
    %v1545 = vsub.s32 0, %v1544
    %v1546 = vrot.slane %v1542, %v1545
    %v1548 = vsel %vm1468, %v1534, 0
    %v1551 = vsel %vm1468, %v1535, 0
    %v1554 = vsel %vm1468, %v1536, 0
    %v1557 = vsel %vm1468, %v1537, 0
    %vm1559 = vcmask 1043456
    %v1561 = vsel %vm1559, %v1541, 0
    %1563 = vmatprep.subr.mxu0 0.0
    %1564 = vmatpush1.msra.mxu0 %v1538
    %1565 = vmatprep.subr.mxu0 0.0
    %1566 = vmatpush1.msra.mxu0 %v1539
    %1567 = vmatprep.subr.mxu0 0.0
    %1568 = vmatpush1.msra.mxu0 %v1540
    %1569 = vmatprep.subr.mxu0 0.0
    %1570 = vmatpush1.msra.mxu0 %v1561
    %1571 = vmatprep.subr.mxu0 0.0
    %1572 = vmatpush1.msra.mxu0 0.0
    %1573 = vmatprep.subr.mxu0 0.0
    %1574 = vmatpush1.msra.mxu0 0.0
    %1575 = vmatprep.subr.mxu0 0.0
    %1576 = vmatpush1.msra.mxu0 0.0
    %1577 = vmatprep.subr.mxu0 0.0
    %1578 = vmatpush1.msra.mxu0 0.0
    %1579 = vmatprep.subr.mxu0 0.0
    %1580 = vmatpush1.msra.mxu0 0.0
    %1581 = vmatprep.subr.mxu0 0.0
    %1582 = vmatpush1.msra.mxu0 0.0
    %1583 = vmatprep.subr.mxu0 0.0
    %1584 = vmatpush1.msra.mxu0 0.0
    %1585 = vmatprep.subr.mxu0 0.0
    %1586 = vmatpush1.msra.mxu0 0.0
    %1587 = vmatprep.subr.mxu0 0.0
    %1588 = vmatpush1.msra.mxu0 0.0
    %1589 = vmatprep.subr.mxu0 0.0
    %1590 = vmatpush1.msra.mxu0 0.0
    %1591 = vmatprep.subr.mxu0 0.0
    %1592 = vmatpush1.msra.mxu0 0.0
    %1593 = vmatprep.subr.mxu0 0.0
    %1594 = vmatpush1.msra.mxu0 0.0
    %1595 = vmatprep.subr.mxu0 0.0
    %1596 = vmatpush1.msra.mxu0 0.0
    %1597 = vmatprep.subr.mxu0 0.0
    %1598 = vmatpush1.msra.mxu0 0.0
    %1599 = vmatprep.subr.mxu0 0.0
    %1600 = vmatpush1.msra.mxu0 0.0
    %1601 = vmatprep.subr.mxu0 0.0
    %1602 = vmatpush1.msra.mxu0 0.0
    %1603 = vmatprep.subr.mxu0 0.0
    %1604 = vmatpush1.msra.mxu0 0.0
    %1605 = vmatprep.subr.mxu0 0.0
    %1606 = vmatpush1.msra.mxu0 0.0
    %1607 = vmatprep.subr.mxu0 0.0
    %1608 = vmatpush1.msra.mxu0 0.0
    %1609 = vmatprep.subr.mxu0 0.0
    %1610 = vmatpush1.msra.mxu0 0.0
    %1611 = vmatprep.subr.mxu0 0.0
    %1612 = vmatpush1.msra.mxu0 0.0
    %1613 = vmatprep.subr.mxu0 0.0
    %1614 = vmatpush1.msra.mxu0 0.0
    %1615 = vmatprep.subr.mxu0 0.0
    %1616 = vmatpush1.msra.mxu0 0.0
    %1617 = vmatprep.subr.mxu0 0.0
    %1618 = vmatpush1.msra.mxu0 0.0
    %1619 = vmatprep.subr.mxu0 0.0
    %1620 = vmatpush1.msra.mxu0 0.0
    %1621 = vmatprep.subr.mxu0 0.0
    %1622 = vmatpush1.msra.mxu0 0.0
    %1623 = vmatprep.subr.mxu0 0.0
    %1624 = vmatpush1.msra.mxu0 0.0
    %1625 = vmatprep.subr.mxu0 0.0
    %1626 = vmatpush1.msra.mxu0 0.0
    %1627 = vmatprep.mubr.f32.mxu0 0.0
    %1628 = vmatmul.mubr.f32.gmra.mrb[0].mxu0 %v1548
    %v1629 = vpop.f32.mrb[0].mxu0
    %v1630 = vadd.f32 %v1546, %v1629
    %v1631 = vpop.f32.mrb[0].mxu0
    %1632 = vmatprep.mubr.f32.mxu0 0.0
    %1633 = vmatmul.mubr.f32.gmra.mrb[0].mxu0 %v1551
    %v1634 = vpop.f32.mrb[0].mxu0
    %v1635 = vadd.f32 %v1546, %v1634
    %v1636 = vpop.f32.mrb[0].mxu0
    %1637 = vmatprep.mubr.f32.mxu0 0.0
    %1638 = vmatmul.mubr.f32.gmra.mrb[0].mxu0 %v1554
    %v1639 = vpop.f32.mrb[0].mxu0
    %v1640 = vadd.f32 %v1546, %v1639
    %v1641 = vpop.f32.mrb[0].mxu0
    %1642 = vmatprep.mubr.f32.mxu0 0.0
    %1643 = vmatmul.mubr.f32.gmra.mrb[0].mxu0 %v1557
    %v1644 = vpop.f32.mrb[0].mxu0
    %v1645 = vadd.f32 %v1546, %v1644
    %v1646 = vpop.f32.mrb[0].mxu0
    %1647 = vdwg.mxu0
    %v1648 = vmax.f32 %v1630, 0.0
    %v1649 = vmax.f32 %v1635, 0.0
    %v1650 = vmax.f32 %v1640, 0.0
    %v1651 = vmax.f32 %v1645, 0.0
    %v1652 = vld [vmem:[#allocation2 + $0x140] sm:$0x1]
    %v1653 = vld [vmem:[#allocation2 + $0x148] sm:$0x1]
    %v1654 = vsel %vm207, %v1648, 0.0
    %1655 = vadd.xlane.f32.xlu0 %v1654
    %v1656 = vpop.xlane.xlu0 %1655
    %v1657 = vsel %vm207, %v1649, 0.0
    %1658 = vadd.xlane.f32.xlu0 %v1657
    %v1659 = vpop.xlane.xlu0 %1658
    %v1660 = vsel %vm207, %v1650, 0.0
    %1661 = vadd.xlane.f32.xlu0 %v1660
    %v1662 = vpop.xlane.xlu0 %1661
    %v1663 = vsel %vm207, %v1651, 0.0
    %1664 = vadd.xlane.f32.xlu0 %v1663
    %v1665 = vpop.xlane.xlu0 %1664
    %v1666 = vmul.f32 %v1656, %v214
    %v1667 = vmul.f32 %v1659, %v214
    %v1668 = vmul.f32 %v1662, %v214
    %v1669 = vmul.f32 %v1665, %v214
    %v1670 = vsub.f32 %v1648, %v1666
    %v1671 = vsub.f32 %v1649, %v1667
    %v1672 = vsub.f32 %v1650, %v1668
    %v1673 = vsub.f32 %v1651, %v1669
    %v1674 = vmul.f32 %v1670, %v1670
    %v1675 = vmul.f32 %v1671, %v1671
    %v1676 = vmul.f32 %v1672, %v1672
    %v1677 = vmul.f32 %v1673, %v1673
    %v1678 = vsel %vm207, %v1674, 0.0
    %1679 = vadd.xlane.f32.xlu0 %v1678
    %v1680 = vpop.xlane.xlu0 %1679
    %v1681 = vsel %vm207, %v1675, 0.0
    %1682 = vadd.xlane.f32.xlu0 %v1681
    %v1683 = vpop.xlane.xlu0 %1682
    %v1684 = vsel %vm207, %v1676, 0.0
    %1685 = vadd.xlane.f32.xlu0 %v1684
    %v1686 = vpop.xlane.xlu0 %1685
    %v1687 = vsel %vm207, %v1677, 0.0
    %1688 = vadd.xlane.f32.xlu0 %v1687
    %v1689 = vpop.xlane.xlu0 %1688
    %v1690 = vmul.f32 %v1680, %v214
    %v1691 = vmul.f32 %v1683, %v214
    %v1692 = vmul.f32 %v1686, %v214
    %v1693 = vmul.f32 %v1689, %v214
    %v1694 = vadd.f32 %v1690, 1e-05
    %v1695 = vadd.f32 %v1691, 1e-05
    %v1696 = vadd.f32 %v1692, 1e-05
    %v1697 = vadd.f32 %v1693, 1e-05
    %v1698 = vrsqrt.pop %v1694
    %v1699 = vrsqrt.pop %v1695
    %v1700 = vrsqrt.pop %v1696
    %v1701 = vrsqrt.pop %v1697
    %v1702 = vmul.f32 %v1670, %v1698
    %v1703 = vmul.f32 %v1671, %v1699
    %v1704 = vmul.f32 %v1672, %v1700
    %v1705 = vmul.f32 %v1673, %v1701
    %v1706 = vlaneseq
    %v1707 = vshrl.u32 %v1706, 7
    %v1708 = vsub.s32 0, %v1707
    %v1709 = vrot.slane %v1652, %v1708
    %v1710 = vmul.f32 %v1702, %v1709
    %v1711 = vmul.f32 %v1703, %v1709
    %v1712 = vmul.f32 %v1704, %v1709
    %v1713 = vmul.f32 %v1705, %v1709
    %v1714 = vlaneseq
    %v1715 = vshrl.u32 %v1714, 7
    %v1716 = vsub.s32 0, %v1715
    %v1717 = vrot.slane %v1653, %v1716
    %v1718 = vadd.f32 %v1710, %v1717
    %v1719 = vadd.f32 %v1711, %v1717
    %v1720 = vadd.f32 %v1712, %v1717
    %v1721 = vadd.f32 %v1713, %v1717
    %v1722 = vld [vmem:[#allocation2 + $0x150] sm:$0xff]
    %v1723 = vld [vmem:[#allocation2 + $0x158] sm:$0xff]
    %v1724 = vld [vmem:[#allocation2 + $0x160] sm:$0xff]
    %v1725 = vld [vmem:[#allocation2 + $0x168] sm:$0xff]
    %v1726 = vld [vmem:[#allocation2 + $0x170] sm:$0x1]
    %v1727 = vlaneseq
    %v1728 = vshrl.u32 %v1727, 7
    %v1729 = vsub.s32 0, %v1728
    %v1730 = vrot.slane %v1726, %v1729
    %v1732 = vsel %vm207, %v1718, 0
    %v1735 = vsel %vm207, %v1719, 0
    %v1738 = vsel %vm207, %v1720, 0
    %v1741 = vsel %vm207, %v1721, 0
    %1743 = vmatprep.subr.mxu0 0.0
    %1744 = vmatpush1.msra.mxu0 %v1722
    %1745 = vmatprep.subr.mxu0 0.0
    %1746 = vmatpush1.msra.mxu0 %v1723
    %1747 = vmatprep.subr.mxu0 0.0
    %1748 = vmatpush1.msra.mxu0 %v1724
    %1749 = vmatprep.subr.mxu0 0.0
    %1750 = vmatpush1.msra.mxu0 %v1725
    %1751 = vmatprep.subr.mxu0 0.0
    %1752 = vmatpush1.msra.mxu0 0.0
    %1753 = vmatprep.subr.mxu0 0.0
    %1754 = vmatpush1.msra.mxu0 0.0
    %1755 = vmatprep.subr.mxu0 0.0
    %1756 = vmatpush1.msra.mxu0 0.0
    %1757 = vmatprep.subr.mxu0 0.0
    %1758 = vmatpush1.msra.mxu0 0.0
    %1759 = vmatprep.subr.mxu0 0.0
    %1760 = vmatpush1.msra.mxu0 0.0
    %1761 = vmatprep.subr.mxu0 0.0
    %1762 = vmatpush1.msra.mxu0 0.0
    %1763 = vmatprep.subr.mxu0 0.0
    %1764 = vmatpush1.msra.mxu0 0.0
    %1765 = vmatprep.subr.mxu0 0.0
    %1766 = vmatpush1.msra.mxu0 0.0
    %1767 = vmatprep.subr.mxu0 0.0
    %1768 = vmatpush1.msra.mxu0 0.0
    %1769 = vmatprep.subr.mxu0 0.0
    %1770 = vmatpush1.msra.mxu0 0.0
    %1771 = vmatprep.subr.mxu0 0.0
    %1772 = vmatpush1.msra.mxu0 0.0
    %1773 = vmatprep.subr.mxu0 0.0
    %1774 = vmatpush1.msra.mxu0 0.0
    %1775 = vmatprep.subr.mxu0 0.0
    %1776 = vmatpush1.msra.mxu0 0.0
    %1777 = vmatprep.subr.mxu0 0.0
    %1778 = vmatpush1.msra.mxu0 0.0
    %1779 = vmatprep.subr.mxu0 0.0
    %1780 = vmatpush1.msra.mxu0 0.0
    %1781 = vmatprep.subr.mxu0 0.0
    %1782 = vmatpush1.msra.mxu0 0.0
    %1783 = vmatprep.subr.mxu0 0.0
    %1784 = vmatpush1.msra.mxu0 0.0
    %1785 = vmatprep.subr.mxu0 0.0
    %1786 = vmatpush1.msra.mxu0 0.0
    %1787 = vmatprep.subr.mxu0 0.0
    %1788 = vmatpush1.msra.mxu0 0.0
    %1789 = vmatprep.subr.mxu0 0.0
    %1790 = vmatpush1.msra.mxu0 0.0
    %1791 = vmatprep.subr.mxu0 0.0
    %1792 = vmatpush1.msra.mxu0 0.0
    %1793 = vmatprep.subr.mxu0 0.0
    %1794 = vmatpush1.msra.mxu0 0.0
    %1795 = vmatprep.subr.mxu0 0.0
    %1796 = vmatpush1.msra.mxu0 0.0
    %1797 = vmatprep.subr.mxu0 0.0
    %1798 = vmatpush1.msra.mxu0 0.0
    %1799 = vmatprep.subr.mxu0 0.0
    %1800 = vmatpush1.msra.mxu0 0.0
    %1801 = vmatprep.subr.mxu0 0.0
    %1802 = vmatpush1.msra.mxu0 0.0
    %1803 = vmatprep.subr.mxu0 0.0
    %1804 = vmatpush1.msra.mxu0 0.0
    %1805 = vmatprep.subr.mxu0 0.0
    %1806 = vmatpush1.msra.mxu0 0.0
    %1807 = vmatprep.mubr.f32.mxu0 0.0
    %1808 = vmatmul.mubr.f32.gmra.mrb[0].mxu0 %v1732
    %v1809 = vpop.f32.mrb[0].mxu0
    %v1810 = vadd.f32 %v1730, %v1809
    %v1811 = vpop.f32.mrb[0].mxu0
    %1812 = vmatprep.mubr.f32.mxu0 0.0
    %1813 = vmatmul.mubr.f32.gmra.mrb[0].mxu0 %v1735
    %v1814 = vpop.f32.mrb[0].mxu0
    %v1815 = vadd.f32 %v1730, %v1814
    %v1816 = vpop.f32.mrb[0].mxu0
    %1817 = vmatprep.mubr.f32.mxu0 0.0
    %1818 = vmatmul.mubr.f32.gmra.mrb[0].mxu0 %v1738
    %v1819 = vpop.f32.mrb[0].mxu0
    %v1820 = vadd.f32 %v1730, %v1819
    %v1821 = vpop.f32.mrb[0].mxu0
    %1822 = vmatprep.mubr.f32.mxu0 0.0
    %1823 = vmatmul.mubr.f32.gmra.mrb[0].mxu0 %v1741
    %v1824 = vpop.f32.mrb[0].mxu0
    %v1825 = vadd.f32 %v1730, %v1824
    %v1826 = vpop.f32.mrb[0].mxu0
    %1827 = vdwg.mxu0
    %v1828 = vmax.f32 %v1810, 0.0
    %v1829 = vmax.f32 %v1815, 0.0
    %v1830 = vmax.f32 %v1820, 0.0
    %v1831 = vmax.f32 %v1825, 0.0
    %v1832 = vld [vmem:[#allocation2 + $0x178] sm:$0x3]
    %v1834 = vsel %vm207, %v1832, 0
    %1836 = vmatprep.subr.mxu0 0.0
    %1837 = vmatpush1.msra.mxu0 %v1828
    %1838 = vmatprep.subr.mxu0 0.0
    %1839 = vmatpush1.msra.mxu0 %v1829
    %1840 = vmatprep.subr.mxu0 0.0
    %1841 = vmatpush1.msra.mxu0 %v1830
    %1842 = vmatprep.subr.mxu0 0.0
    %1843 = vmatpush1.msra.mxu0 %v1831
    %1844 = vmatprep.subr.mxu0 0.0
    %1845 = vmatpush1.msra.mxu0 0.0
    %1846 = vmatprep.subr.mxu0 0.0
    %1847 = vmatpush1.msra.mxu0 0.0
    %1848 = vmatprep.subr.mxu0 0.0
    %1849 = vmatpush1.msra.mxu0 0.0
    %1850 = vmatprep.subr.mxu0 0.0
    %1851 = vmatpush1.msra.mxu0 0.0
    %1852 = vmatprep.subr.mxu0 0.0
    %1853 = vmatpush1.msra.mxu0 0.0
    %1854 = vmatprep.subr.mxu0 0.0
    %1855 = vmatpush1.msra.mxu0 0.0
    %1856 = vmatprep.subr.mxu0 0.0
    %1857 = vmatpush1.msra.mxu0 0.0
    %1858 = vmatprep.subr.mxu0 0.0
    %1859 = vmatpush1.msra.mxu0 0.0
    %1860 = vmatprep.subr.mxu0 0.0
    %1861 = vmatpush1.msra.mxu0 0.0
    %1862 = vmatprep.subr.mxu0 0.0
    %1863 = vmatpush1.msra.mxu0 0.0
    %1864 = vmatprep.subr.mxu0 0.0
    %1865 = vmatpush1.msra.mxu0 0.0
    %1866 = vmatprep.subr.mxu0 0.0
    %1867 = vmatpush1.msra.mxu0 0.0
    %1868 = vmatprep.subr.mxu0 0.0
    %1869 = vmatpush1.msra.mxu0 0.0
    %1870 = vmatprep.subr.mxu0 0.0
    %1871 = vmatpush1.msra.mxu0 0.0
    %1872 = vmatprep.subr.mxu0 0.0
    %1873 = vmatpush1.msra.mxu0 0.0
    %1874 = vmatprep.subr.mxu0 0.0
    %1875 = vmatpush1.msra.mxu0 0.0
    %1876 = vmatprep.subr.mxu0 0.0
    %1877 = vmatpush1.msra.mxu0 0.0
    %1878 = vmatprep.subr.mxu0 0.0
    %1879 = vmatpush1.msra.mxu0 0.0
    %1880 = vmatprep.subr.mxu0 0.0
    %1881 = vmatpush1.msra.mxu0 0.0
    %1882 = vmatprep.subr.mxu0 0.0
    %1883 = vmatpush1.msra.mxu0 0.0
    %1884 = vmatprep.subr.mxu0 0.0
    %1885 = vmatpush1.msra.mxu0 0.0
    %1886 = vmatprep.subr.mxu0 0.0
    %1887 = vmatpush1.msra.mxu0 0.0
    %1888 = vmatprep.subr.mxu0 0.0
    %1889 = vmatpush1.msra.mxu0 0.0
    %1890 = vmatprep.subr.mxu0 0.0
    %1891 = vmatpush1.msra.mxu0 0.0
    %1892 = vmatprep.subr.mxu0 0.0
    %1893 = vmatpush1.msra.mxu0 0.0
    %1894 = vmatprep.subr.mxu0 0.0
    %1895 = vmatpush1.msra.mxu0 0.0
    %1896 = vmatprep.subr.mxu0 0.0
    %1897 = vmatpush1.msra.mxu0 0.0
    %1898 = vmatprep.subr.mxu0 0.0
    %1899 = vmatpush1.msra.mxu0 0.0
    %1900 = vmatprep.mubr.f32.mxu0 0.0
    %1901 = vmatmul.mubr.f32.gmra.mrb[0].mxu0 %v1834
    %v1902 = vpop.f32.mrb[0].mxu0
    %v1903 = vadd.f32 0.0, %v1902
    %v1904 = vpop.f32.mrb[0].mxu0
    %1905 = vdwg.mxu0
    %v1906 = vld [vmem:[#allocation2 + $0x180] sm:$0xff]
    %v1907 = vld [vmem:[#allocation2 + $0x188] sm:$0xff]
    %v1908 = vld [vmem:[#allocation2 + $0x190] sm:$0x1]
    %v1909 = vlaneseq
    %v1910 = vshrl.u32 %v1909, 7
    %v1911 = vsub.s32 0, %v1910
    %v1912 = vrot.slane %v1908, %v1911
    %v1914 = vsel %vm121, %v1903, 0
    %1916 = vmatprep.subr.mxu0 0.0
    %1917 = vmatpush1.msra.mxu0 %v1906
    %1918 = vmatprep.subr.mxu0 0.0
    %1919 = vmatpush1.msra.mxu0 %v1907
    %1920 = vmatprep.subr.mxu0 0.0
    %1921 = vmatpush1.msra.mxu0 0.0
    %1922 = vmatprep.subr.mxu0 0.0
    %1923 = vmatpush1.msra.mxu0 0.0
    %1924 = vmatprep.subr.mxu0 0.0
    %1925 = vmatpush1.msra.mxu0 0.0
    %1926 = vmatprep.subr.mxu0 0.0
    %1927 = vmatpush1.msra.mxu0 0.0
    %1928 = vmatprep.subr.mxu0 0.0
    %1929 = vmatpush1.msra.mxu0 0.0
    %1930 = vmatprep.subr.mxu0 0.0
    %1931 = vmatpush1.msra.mxu0 0.0
    %1932 = vmatprep.subr.mxu0 0.0
    %1933 = vmatpush1.msra.mxu0 0.0
    %1934 = vmatprep.subr.mxu0 0.0
    %1935 = vmatpush1.msra.mxu0 0.0
    %1936 = vmatprep.subr.mxu0 0.0
    %1937 = vmatpush1.msra.mxu0 0.0
    %1938 = vmatprep.subr.mxu0 0.0
    %1939 = vmatpush1.msra.mxu0 0.0
    %1940 = vmatprep.subr.mxu0 0.0
    %1941 = vmatpush1.msra.mxu0 0.0
    %1942 = vmatprep.subr.mxu0 0.0
    %1943 = vmatpush1.msra.mxu0 0.0
    %1944 = vmatprep.subr.mxu0 0.0
    %1945 = vmatpush1.msra.mxu0 0.0
    %1946 = vmatprep.subr.mxu0 0.0
    %1947 = vmatpush1.msra.mxu0 0.0
    %1948 = vmatprep.subr.mxu0 0.0
    %1949 = vmatpush1.msra.mxu0 0.0
    %1950 = vmatprep.subr.mxu0 0.0
    %1951 = vmatpush1.msra.mxu0 0.0
    %1952 = vmatprep.subr.mxu0 0.0
    %1953 = vmatpush1.msra.mxu0 0.0
    %1954 = vmatprep.subr.mxu0 0.0
    %1955 = vmatpush1.msra.mxu0 0.0
    %1956 = vmatprep.subr.mxu0 0.0
    %1957 = vmatpush1.msra.mxu0 0.0
    %1958 = vmatprep.subr.mxu0 0.0
    %1959 = vmatpush1.msra.mxu0 0.0
    %1960 = vmatprep.subr.mxu0 0.0
    %1961 = vmatpush1.msra.mxu0 0.0
    %1962 = vmatprep.subr.mxu0 0.0
    %1963 = vmatpush1.msra.mxu0 0.0
    %1964 = vmatprep.subr.mxu0 0.0
    %1965 = vmatpush1.msra.mxu0 0.0
    %1966 = vmatprep.subr.mxu0 0.0
    %1967 = vmatpush1.msra.mxu0 0.0
    %1968 = vmatprep.subr.mxu0 0.0
    %1969 = vmatpush1.msra.mxu0 0.0
    %1970 = vmatprep.subr.mxu0 0.0
    %1971 = vmatpush1.msra.mxu0 0.0
    %1972 = vmatprep.subr.mxu0 0.0
    %1973 = vmatpush1.msra.mxu0 0.0
    %1974 = vmatprep.subr.mxu0 0.0
    %1975 = vmatpush1.msra.mxu0 0.0
    %1976 = vmatprep.subr.mxu0 0.0
    %1977 = vmatpush1.msra.mxu0 0.0
    %1978 = vmatprep.subr.mxu0 0.0
    %1979 = vmatpush1.msra.mxu0 0.0
    %1980 = vmatprep.mubr.f32.mxu0 0.0
    %1981 = vmatmul.mubr.f32.gmra.mrb[0].mxu0 %v1914
    %v1982 = vpop.f32.mrb[0].mxu0
    %v1983 = vadd.f32 %v1912, %v1982
    %v1984 = vpop.f32.mrb[0].mxu0
    %1985 = vdwg.mxu0
    %v1986 = vmax.f32 %v1983, 0.0
    %v1987 = vld [vmem:[#allocation2 + $0x198] sm:$0xff]
    %v1988 = vld [vmem:[#allocation2 + $0x1a0] sm:$0xff]
    %v1989 = vld [vmem:[#allocation2 + $0x1a8] sm:$0x1]
    %v1990 = vlaneseq
    %v1991 = vshrl.u32 %v1990, 7
    %v1992 = vsub.s32 0, %v1991
    %v1993 = vrot.slane %v1989, %v1992
    %v1995 = vsel %vm121, %v1986, 0
    %1997 = vmatprep.subr.mxu0 0.0
    %1998 = vmatpush1.msra.mxu0 %v1987
    %1999 = vmatprep.subr.mxu0 0.0
    %2000 = vmatpush1.msra.mxu0 %v1988
    %2001 = vmatprep.subr.mxu0 0.0
    %2002 = vmatpush1.msra.mxu0 0.0
    %2003 = vmatprep.subr.mxu0 0.0
    %2004 = vmatpush1.msra.mxu0 0.0
    %2005 = vmatprep.subr.mxu0 0.0
    %2006 = vmatpush1.msra.mxu0 0.0
    %2007 = vmatprep.subr.mxu0 0.0
    %2008 = vmatpush1.msra.mxu0 0.0
    %2009 = vmatprep.subr.mxu0 0.0
    %2010 = vmatpush1.msra.mxu0 0.0
    %2011 = vmatprep.subr.mxu0 0.0
    %2012 = vmatpush1.msra.mxu0 0.0
    %2013 = vmatprep.subr.mxu0 0.0
    %2014 = vmatpush1.msra.mxu0 0.0
    %2015 = vmatprep.subr.mxu0 0.0
    %2016 = vmatpush1.msra.mxu0 0.0
    %2017 = vmatprep.subr.mxu0 0.0
    %2018 = vmatpush1.msra.mxu0 0.0
    %2019 = vmatprep.subr.mxu0 0.0
    %2020 = vmatpush1.msra.mxu0 0.0
    %2021 = vmatprep.subr.mxu0 0.0
    %2022 = vmatpush1.msra.mxu0 0.0
    %2023 = vmatprep.subr.mxu0 0.0
    %2024 = vmatpush1.msra.mxu0 0.0
    %2025 = vmatprep.subr.mxu0 0.0
    %2026 = vmatpush1.msra.mxu0 0.0
    %2027 = vmatprep.subr.mxu0 0.0
    %2028 = vmatpush1.msra.mxu0 0.0
    %2029 = vmatprep.subr.mxu0 0.0
    %2030 = vmatpush1.msra.mxu0 0.0
    %2031 = vmatprep.subr.mxu0 0.0
    %2032 = vmatpush1.msra.mxu0 0.0
    %2033 = vmatprep.subr.mxu0 0.0
    %2034 = vmatpush1.msra.mxu0 0.0
    %2035 = vmatprep.subr.mxu0 0.0
    %2036 = vmatpush1.msra.mxu0 0.0
    %2037 = vmatprep.subr.mxu0 0.0
    %2038 = vmatpush1.msra.mxu0 0.0
    %2039 = vmatprep.subr.mxu0 0.0
    %2040 = vmatpush1.msra.mxu0 0.0
    %2041 = vmatprep.subr.mxu0 0.0
    %2042 = vmatpush1.msra.mxu0 0.0
    %2043 = vmatprep.subr.mxu0 0.0
    %2044 = vmatpush1.msra.mxu0 0.0
    %2045 = vmatprep.subr.mxu0 0.0
    %2046 = vmatpush1.msra.mxu0 0.0
    %2047 = vmatprep.subr.mxu0 0.0
    %2048 = vmatpush1.msra.mxu0 0.0
    %2049 = vmatprep.subr.mxu0 0.0
    %2050 = vmatpush1.msra.mxu0 0.0
    %2051 = vmatprep.subr.mxu0 0.0
    %2052 = vmatpush1.msra.mxu0 0.0
    %2053 = vmatprep.subr.mxu0 0.0
    %2054 = vmatpush1.msra.mxu0 0.0
    %2055 = vmatprep.subr.mxu0 0.0
    %2056 = vmatpush1.msra.mxu0 0.0
    %2057 = vmatprep.subr.mxu0 0.0
    %2058 = vmatpush1.msra.mxu0 0.0
    %2059 = vmatprep.subr.mxu0 0.0
    %2060 = vmatpush1.msra.mxu0 0.0
    %2061 = vmatprep.mubr.f32.mxu0 0.0
    %2062 = vmatmul.mubr.f32.gmra.mrb[0].mxu0 %v1995
    %v2063 = vpop.f32.mrb[0].mxu0
    %v2064 = vadd.f32 %v1993, %v2063
    %v2065 = vpop.f32.mrb[0].mxu0
    %2066 = vdwg.mxu0
    %v2067 = vld [vmem:[#allocation2 + $0x1b0] sm:$0xff]
    %v2068 = vld [vmem:[#allocation2 + $0x1b8] sm:$0xff]
    %v2069 = vld [vmem:[#allocation2 + $0x1c0] sm:$0x1]
    %v2070 = vlaneseq
    %v2071 = vshrl.u32 %v2070, 7
    %v2072 = vsub.s32 0, %v2071
    %v2073 = vrot.slane %v2069, %v2072
    %v2075 = vsel %vm121, %v2064, 0
    %2077 = vmatprep.subr.mxu0 0.0
    %2078 = vmatpush1.msra.mxu0 %v2067
    %2079 = vmatprep.subr.mxu0 0.0
    %2080 = vmatpush1.msra.mxu0 %v2068
    %2081 = vmatprep.subr.mxu0 0.0
    %2082 = vmatpush1.msra.mxu0 0.0
    %2083 = vmatprep.subr.mxu0 0.0
    %2084 = vmatpush1.msra.mxu0 0.0
    %2085 = vmatprep.subr.mxu0 0.0
    %2086 = vmatpush1.msra.mxu0 0.0
    %2087 = vmatprep.subr.mxu0 0.0
    %2088 = vmatpush1.msra.mxu0 0.0
    %2089 = vmatprep.subr.mxu0 0.0
    %2090 = vmatpush1.msra.mxu0 0.0
    %2091 = vmatprep.subr.mxu0 0.0
    %2092 = vmatpush1.msra.mxu0 0.0
    %2093 = vmatprep.subr.mxu0 0.0
    %2094 = vmatpush1.msra.mxu0 0.0
    %2095 = vmatprep.subr.mxu0 0.0
    %2096 = vmatpush1.msra.mxu0 0.0
    %2097 = vmatprep.subr.mxu0 0.0
    %2098 = vmatpush1.msra.mxu0 0.0
    %2099 = vmatprep.subr.mxu0 0.0
    %2100 = vmatpush1.msra.mxu0 0.0
    %2101 = vmatprep.subr.mxu0 0.0
    %2102 = vmatpush1.msra.mxu0 0.0
    %2103 = vmatprep.subr.mxu0 0.0
    %2104 = vmatpush1.msra.mxu0 0.0
    %2105 = vmatprep.subr.mxu0 0.0
    %2106 = vmatpush1.msra.mxu0 0.0
    %2107 = vmatprep.subr.mxu0 0.0
    %2108 = vmatpush1.msra.mxu0 0.0
    %2109 = vmatprep.subr.mxu0 0.0
    %2110 = vmatpush1.msra.mxu0 0.0
    %2111 = vmatprep.subr.mxu0 0.0
    %2112 = vmatpush1.msra.mxu0 0.0
    %2113 = vmatprep.subr.mxu0 0.0
    %2114 = vmatpush1.msra.mxu0 0.0
    %2115 = vmatprep.subr.mxu0 0.0
    %2116 = vmatpush1.msra.mxu0 0.0
    %2117 = vmatprep.subr.mxu0 0.0
    %2118 = vmatpush1.msra.mxu0 0.0
    %2119 = vmatprep.subr.mxu0 0.0
    %2120 = vmatpush1.msra.mxu0 0.0
    %2121 = vmatprep.subr.mxu0 0.0
    %2122 = vmatpush1.msra.mxu0 0.0
    %2123 = vmatprep.subr.mxu0 0.0
    %2124 = vmatpush1.msra.mxu0 0.0
    %2125 = vmatprep.subr.mxu0 0.0
    %2126 = vmatpush1.msra.mxu0 0.0
    %2127 = vmatprep.subr.mxu0 0.0
    %2128 = vmatpush1.msra.mxu0 0.0
    %2129 = vmatprep.subr.mxu0 0.0
    %2130 = vmatpush1.msra.mxu0 0.0
    %2131 = vmatprep.subr.mxu0 0.0
    %2132 = vmatpush1.msra.mxu0 0.0
    %2133 = vmatprep.subr.mxu0 0.0
    %2134 = vmatpush1.msra.mxu0 0.0
    %2135 = vmatprep.subr.mxu0 0.0
    %2136 = vmatpush1.msra.mxu0 0.0
    %2137 = vmatprep.subr.mxu0 0.0
    %2138 = vmatpush1.msra.mxu0 0.0
    %2139 = vmatprep.subr.mxu0 0.0
    %2140 = vmatpush1.msra.mxu0 0.0
    %2141 = vmatprep.mubr.f32.mxu0 0.0
    %2142 = vmatmul.mubr.f32.gmra.mrb[0].mxu0 %v2075
    %v2143 = vpop.f32.mrb[0].mxu0
    %v2144 = vadd.f32 %v2073, %v2143
    %v2145 = vpop.f32.mrb[0].mxu0
    %2146 = vdwg.mxu0
    %v2147 = vmax.f32 %v2144, 0.0
    %v2148 = vld [vmem:[#allocation2 + $0x1c8] sm:$0x1]
    %v2149 = vld [vmem:[#allocation2 + $0x1d0] sm:$0x1]
    %vm2150 = vcmask 254976
    %v2151 = vsel %vm2150, %v2147, 0.0
    %2152 = vadd.xlane.f32.xlu0 %v2151
    %v2153 = vpop.xlane.xlu0 %2152
    %v2154 = vmul.f32 %v2153, %v214
    %v2155 = vsub.f32 %v2147, %v2154
    %v2156 = vmul.f32 %v2155, %v2155
    %v2157 = vsel %vm2150, %v2156, 0.0
    %2158 = vadd.xlane.f32.xlu0 %v2157
    %v2159 = vpop.xlane.xlu0 %2158
    %v2160 = vmul.f32 %v2159, %v214
    %v2161 = vadd.f32 %v2160, 1e-05
    %v2162 = vrsqrt.pop %v2161
    %v2163 = vmul.f32 %v2155, %v2162
    %v2164 = vlaneseq
    %v2165 = vshrl.u32 %v2164, 7
    %v2166 = vsub.s32 0, %v2165
    %v2167 = vrot.slane %v2148, %v2166
    %v2168 = vmul.f32 %v2163, %v2167
    %v2169 = vlaneseq
    %v2170 = vshrl.u32 %v2169, 7
    %v2171 = vsub.s32 0, %v2170
    %v2172 = vrot.slane %v2149, %v2171
    %v2173 = vadd.f32 %v2168, %v2172
    %v2174 = vld [vmem:[#allocation2 + $0x1d8] sm:$0xff]
    %v2175 = vld [vmem:[#allocation2 + $0x1e0] sm:$0xff]
    %v2176 = vld [vmem:[#allocation2 + $0x1e8] sm:$0xff]
    %v2177 = vld [vmem:[#allocation2 + $0x1f0] sm:$0xff]
    %v2178 = vld [vmem:[#allocation2 + $0x1f8] sm:$0x1]
    %v2179 = vlaneseq
    %v2180 = vshrl.u32 %v2179, 7
    %v2181 = vsub.s32 0, %v2180
    %v2182 = vrot.slane %v2178, %v2181
    %v2184 = vsel %vm207, %v2173, 0
    %2186 = vmatprep.subr.mxu0 0.0
    %2187 = vmatpush1.msra.mxu0 %v2174
    %2188 = vmatprep.subr.mxu0 0.0
    %2189 = vmatpush1.msra.mxu0 %v2175
    %2190 = vmatprep.subr.mxu0 0.0
    %2191 = vmatpush1.msra.mxu0 %v2176
    %2192 = vmatprep.subr.mxu0 0.0
    %2193 = vmatpush1.msra.mxu0 %v2177
    %2194 = vmatprep.subr.mxu0 0.0
    %2195 = vmatpush1.msra.mxu0 0.0
    %2196 = vmatprep.subr.mxu0 0.0
    %2197 = vmatpush1.msra.mxu0 0.0
    %2198 = vmatprep.subr.mxu0 0.0
    %2199 = vmatpush1.msra.mxu0 0.0
    %2200 = vmatprep.subr.mxu0 0.0
    %2201 = vmatpush1.msra.mxu0 0.0
    %2202 = vmatprep.subr.mxu0 0.0
    %2203 = vmatpush1.msra.mxu0 0.0
    %2204 = vmatprep.subr.mxu0 0.0
    %2205 = vmatpush1.msra.mxu0 0.0
    %2206 = vmatprep.subr.mxu0 0.0
    %2207 = vmatpush1.msra.mxu0 0.0
    %2208 = vmatprep.subr.mxu0 0.0
    %2209 = vmatpush1.msra.mxu0 0.0
    %2210 = vmatprep.subr.mxu0 0.0
    %2211 = vmatpush1.msra.mxu0 0.0
    %2212 = vmatprep.subr.mxu0 0.0
    %2213 = vmatpush1.msra.mxu0 0.0
    %2214 = vmatprep.subr.mxu0 0.0
    %2215 = vmatpush1.msra.mxu0 0.0
    %2216 = vmatprep.subr.mxu0 0.0
    %2217 = vmatpush1.msra.mxu0 0.0
    %2218 = vmatprep.subr.mxu0 0.0
    %2219 = vmatpush1.msra.mxu0 0.0
    %2220 = vmatprep.subr.mxu0 0.0
    %2221 = vmatpush1.msra.mxu0 0.0
    %2222 = vmatprep.subr.mxu0 0.0
    %2223 = vmatpush1.msra.mxu0 0.0
    %2224 = vmatprep.subr.mxu0 0.0
    %2225 = vmatpush1.msra.mxu0 0.0
    %2226 = vmatprep.subr.mxu0 0.0
    %2227 = vmatpush1.msra.mxu0 0.0
    %2228 = vmatprep.subr.mxu0 0.0
    %2229 = vmatpush1.msra.mxu0 0.0
    %2230 = vmatprep.subr.mxu0 0.0
    %2231 = vmatpush1.msra.mxu0 0.0
    %2232 = vmatprep.subr.mxu0 0.0
    %2233 = vmatpush1.msra.mxu0 0.0
    %2234 = vmatprep.subr.mxu0 0.0
    %2235 = vmatpush1.msra.mxu0 0.0
    %2236 = vmatprep.subr.mxu0 0.0
    %2237 = vmatpush1.msra.mxu0 0.0
    %2238 = vmatprep.subr.mxu0 0.0
    %2239 = vmatpush1.msra.mxu0 0.0
    %2240 = vmatprep.subr.mxu0 0.0
    %2241 = vmatpush1.msra.mxu0 0.0
    %2242 = vmatprep.subr.mxu0 0.0
    %2243 = vmatpush1.msra.mxu0 0.0
    %2244 = vmatprep.subr.mxu0 0.0
    %2245 = vmatpush1.msra.mxu0 0.0
    %2246 = vmatprep.subr.mxu0 0.0
    %2247 = vmatpush1.msra.mxu0 0.0
    %2248 = vmatprep.subr.mxu0 0.0
    %2249 = vmatpush1.msra.mxu0 0.0
    %2250 = vmatprep.mubr.f32.mxu0 0.0
    %2251 = vmatmul.mubr.f32.gmra.mrb[0].mxu0 %v2184
    %v2252 = vpop.f32.mrb[0].mxu0
    %v2253 = vadd.f32 %v2182, %v2252
    %v2254 = vpop.f32.mrb[0].mxu0
    %2255 = vdwg.mxu0
    %v2256 = vld [vmem:[#allocation2 + $0x220] sm:$0xff]
    %v2257 = vld [vmem:[#allocation2 + $0x228] sm:$0xff]
    %v2258 = vld [vmem:[#allocation2 + $0x230] sm:$0xff]
    %v2259 = vld [vmem:[#allocation2 + $0x238] sm:$0xff]
    %v2261 = vsel %vm709, %v2256, 0
    %v2264 = vsel %vm709, %v2257, 0
    %v2267 = vsel %vm709, %v2258, 0
    %v2270 = vsel %vm709, %v2259, 0
    %v2273 = vsel %vm722, %v2253, 0
    %2275 = vmatprep.subr.mxu0 0.0
    %2276 = vmatpush1.msra.mxu0 %v2273
    %2277 = vmatprep.subr.mxu0 0.0
    %2278 = vmatpush1.msra.mxu0 0.0
    %2279 = vmatprep.subr.mxu0 0.0
    %2280 = vmatpush1.msra.mxu0 0.0
    %2281 = vmatprep.subr.mxu0 0.0
    %2282 = vmatpush1.msra.mxu0 0.0
    %2283 = vmatprep.subr.mxu0 0.0
    %2284 = vmatpush1.msra.mxu0 0.0
    %2285 = vmatprep.subr.mxu0 0.0
    %2286 = vmatpush1.msra.mxu0 0.0
    %2287 = vmatprep.subr.mxu0 0.0
    %2288 = vmatpush1.msra.mxu0 0.0
    %2289 = vmatprep.subr.mxu0 0.0
    %2290 = vmatpush1.msra.mxu0 0.0
    %2291 = vmatprep.subr.mxu0 0.0
    %2292 = vmatpush1.msra.mxu0 0.0
    %2293 = vmatprep.subr.mxu0 0.0
    %2294 = vmatpush1.msra.mxu0 0.0
    %2295 = vmatprep.subr.mxu0 0.0
    %2296 = vmatpush1.msra.mxu0 0.0
    %2297 = vmatprep.subr.mxu0 0.0
    %2298 = vmatpush1.msra.mxu0 0.0
    %2299 = vmatprep.subr.mxu0 0.0
    %2300 = vmatpush1.msra.mxu0 0.0
    %2301 = vmatprep.subr.mxu0 0.0
    %2302 = vmatpush1.msra.mxu0 0.0
    %2303 = vmatprep.subr.mxu0 0.0
    %2304 = vmatpush1.msra.mxu0 0.0
    %2305 = vmatprep.subr.mxu0 0.0
    %2306 = vmatpush1.msra.mxu0 0.0
    %2307 = vmatprep.subr.mxu0 0.0
    %2308 = vmatpush1.msra.mxu0 0.0
    %2309 = vmatprep.subr.mxu0 0.0
    %2310 = vmatpush1.msra.mxu0 0.0
    %2311 = vmatprep.subr.mxu0 0.0
    %2312 = vmatpush1.msra.mxu0 0.0
    %2313 = vmatprep.subr.mxu0 0.0
    %2314 = vmatpush1.msra.mxu0 0.0
    %2315 = vmatprep.subr.mxu0 0.0
    %2316 = vmatpush1.msra.mxu0 0.0
    %2317 = vmatprep.subr.mxu0 0.0
    %2318 = vmatpush1.msra.mxu0 0.0
    %2319 = vmatprep.subr.mxu0 0.0
    %2320 = vmatpush1.msra.mxu0 0.0
    %2321 = vmatprep.subr.mxu0 0.0
    %2322 = vmatpush1.msra.mxu0 0.0
    %2323 = vmatprep.subr.mxu0 0.0
    %2324 = vmatpush1.msra.mxu0 0.0
    %2325 = vmatprep.subr.mxu0 0.0
    %2326 = vmatpush1.msra.mxu0 0.0
    %2327 = vmatprep.subr.mxu0 0.0
    %2328 = vmatpush1.msra.mxu0 0.0
    %2329 = vmatprep.subr.mxu0 0.0
    %2330 = vmatpush1.msra.mxu0 0.0
    %2331 = vmatprep.subr.mxu0 0.0
    %2332 = vmatpush1.msra.mxu0 0.0
    %2333 = vmatprep.subr.mxu0 0.0
    %2334 = vmatpush1.msra.mxu0 0.0
    %2335 = vmatprep.subr.mxu0 0.0
    %2336 = vmatpush1.msra.mxu0 0.0
    %2337 = vmatprep.subr.mxu0 0.0
    %2338 = vmatpush1.msra.mxu0 0.0
    %2339 = vmatprep.mubr.f32.mxu0 0.0
    %2340 = vmatmul.mubr.f32.gmra.mrb[0].mxu0 %v2261
    %v2341 = vpop.f32.mrb[0].mxu0
    %v2342 = vadd.f32 0.0, %v2341
    %v2343 = vpop.f32.mrb[0].mxu0
    %2344 = vmatprep.mubr.f32.mxu0 0.0
    %2345 = vmatmul.mubr.f32.gmra.mrb[0].mxu0 %v2264
    %v2346 = vpop.f32.mrb[0].mxu0
    %v2347 = vadd.f32 0.0, %v2346
    %v2348 = vpop.f32.mrb[0].mxu0
    %2349 = vmatprep.mubr.f32.mxu0 0.0
    %2350 = vmatmul.mubr.f32.gmra.mrb[0].mxu0 %v2267
    %v2351 = vpop.f32.mrb[0].mxu0
    %v2352 = vadd.f32 0.0, %v2351
    %v2353 = vpop.f32.mrb[0].mxu0
    %2354 = vmatprep.mubr.f32.mxu0 0.0
    %2355 = vmatmul.mubr.f32.gmra.mrb[0].mxu0 %v2270
    %v2356 = vpop.f32.mrb[0].mxu0
    %v2357 = vadd.f32 0.0, %v2356
    %v2358 = vpop.f32.mrb[0].mxu0
    %2359 = vdwg.mxu0
    %v2360 = vld [vmem:[#allocation2 + $0x240] sm:$0xff]
    %v2361 = vld [vmem:[#allocation2 + $0x248] sm:$0xff]
    %v2362 = vld [vmem:[#allocation2 + $0x250] sm:$0xff]
    %v2363 = vld [vmem:[#allocation2 + $0x258] sm:$0xff]
    %v2364 = vld [vmem:[#allocation2 + $0x260] sm:$0xff]
    %2365 = vmatprep.subr.mxu0 0.0
    %2366 = vmatpush1.msra.mxu0 %v2364
    %2367 = vmatprep.subr.mxu0 0.0
    %2368 = vmatpush1.msra.mxu0 0.0
    %2369 = vmatprep.subr.mxu0 0.0
    %2370 = vmatpush1.msra.mxu0 0.0
    %2371 = vmatprep.subr.mxu0 0.0
    %2372 = vmatpush1.msra.mxu0 0.0
    %2373 = vmatprep.subr.mxu0 0.0
    %2374 = vmatpush1.msra.mxu0 0.0
    %2375 = vmatprep.subr.mxu0 0.0
    %2376 = vmatpush1.msra.mxu0 0.0
    %2377 = vmatprep.subr.mxu0 0.0
    %2378 = vmatpush1.msra.mxu0 0.0
    %2379 = vmatprep.subr.mxu0 0.0
    %2380 = vmatpush1.msra.mxu0 0.0
    %2381 = vmatprep.subr.mxu0 0.0
    %2382 = vmatpush1.msra.mxu0 0.0
    %2383 = vmatprep.subr.mxu0 0.0
    %2384 = vmatpush1.msra.mxu0 0.0
    %2385 = vmatprep.subr.mxu0 0.0
    %2386 = vmatpush1.msra.mxu0 0.0
    %2387 = vmatprep.subr.mxu0 0.0
    %2388 = vmatpush1.msra.mxu0 0.0
    %2389 = vmatprep.subr.mxu0 0.0
    %2390 = vmatpush1.msra.mxu0 0.0
    %2391 = vmatprep.subr.mxu0 0.0
    %2392 = vmatpush1.msra.mxu0 0.0
    %2393 = vmatprep.subr.mxu0 0.0
    %2394 = vmatpush1.msra.mxu0 0.0
    %2395 = vmatprep.subr.mxu0 0.0
    %2396 = vmatpush1.msra.mxu0 0.0
    %2397 = vmatprep.subr.mxu0 0.0
    %2398 = vmatpush1.msra.mxu0 0.0
    %2399 = vmatprep.subr.mxu0 0.0
    %2400 = vmatpush1.msra.mxu0 0.0
    %2401 = vmatprep.subr.mxu0 0.0
    %2402 = vmatpush1.msra.mxu0 0.0
    %2403 = vmatprep.subr.mxu0 0.0
    %2404 = vmatpush1.msra.mxu0 0.0
    %2405 = vmatprep.subr.mxu0 0.0
    %2406 = vmatpush1.msra.mxu0 0.0
    %2407 = vmatprep.subr.mxu0 0.0
    %2408 = vmatpush1.msra.mxu0 0.0
    %2409 = vmatprep.subr.mxu0 0.0
    %2410 = vmatpush1.msra.mxu0 0.0
    %2411 = vmatprep.subr.mxu0 0.0
    %2412 = vmatpush1.msra.mxu0 0.0
    %2413 = vmatprep.subr.mxu0 0.0
    %2414 = vmatpush1.msra.mxu0 0.0
    %2415 = vmatprep.subr.mxu0 0.0
    %2416 = vmatpush1.msra.mxu0 0.0
    %2417 = vmatprep.subr.mxu0 0.0
    %2418 = vmatpush1.msra.mxu0 0.0
    %2419 = vmatprep.subr.mxu0 0.0
    %2420 = vmatpush1.msra.mxu0 0.0
    %2421 = vmatprep.subr.mxu0 0.0
    %2422 = vmatpush1.msra.mxu0 0.0
    %2423 = vmatprep.subr.mxu0 0.0
    %2424 = vmatpush1.msra.mxu0 0.0
    %2425 = vmatprep.subr.mxu0 0.0
    %2426 = vmatpush1.msra.mxu0 0.0
    %2427 = vmatprep.subr.mxu0 0.0
    %2428 = vmatpush1.msra.mxu0 0.0
    %2429 = vmatprep.mubr.f32.mxu0 0.0
    %2430 = vmatmul.mubr.f32.gmra.mrb[0].mxu0 %v1260
    %v2431 = vpop.f32.mrb[0].mxu0
    %v2432 = vadd.f32 0.0, %v2431
    %v2433 = vpop.f32.mrb[0].mxu0
    %2434 = vmatprep.mubr.f32.mxu0 0.0
    %2435 = vmatmul.mubr.f32.gmra.mrb[0].mxu0 %v1263
    %v2436 = vpop.f32.mrb[0].mxu0
    %v2437 = vadd.f32 0.0, %v2436
    %v2438 = vpop.f32.mrb[0].mxu0
    %2439 = vmatprep.mubr.f32.mxu0 0.0
    %2440 = vmatmul.mubr.f32.gmra.mrb[0].mxu0 %v1266
    %v2441 = vpop.f32.mrb[0].mxu0
    %v2442 = vadd.f32 0.0, %v2441
    %v2443 = vpop.f32.mrb[0].mxu0
    %2444 = vmatprep.mubr.f32.mxu0 0.0
    %2445 = vmatmul.mubr.f32.gmra.mrb[0].mxu0 %v1269
    %v2446 = vpop.f32.mrb[0].mxu0
    %v2447 = vadd.f32 0.0, %v2446
    %v2448 = vpop.f32.mrb[0].mxu0
    %2449 = vdwg.mxu0
    %v2451 = vsel %vm207, %v2342, 0
    %v2454 = vsel %vm207, %v2347, 0
    %v2457 = vsel %vm207, %v2352, 0
    %v2460 = vsel %vm207, %v2357, 0
    %2462 = vmatprep.subr.mxu0 0.0
    %2463 = vmatpush1.msra.mxu0 %v2360
    %2464 = vmatprep.subr.mxu0 0.0
    %2465 = vmatpush1.msra.mxu0 %v2361
    %2466 = vmatprep.subr.mxu0 0.0
    %2467 = vmatpush1.msra.mxu0 %v2362
    %2468 = vmatprep.subr.mxu0 0.0
    %2469 = vmatpush1.msra.mxu0 %v2363
    %2470 = vmatprep.subr.mxu0 0.0
    %2471 = vmatpush1.msra.mxu0 0.0
    %2472 = vmatprep.subr.mxu0 0.0
    %2473 = vmatpush1.msra.mxu0 0.0
    %2474 = vmatprep.subr.mxu0 0.0
    %2475 = vmatpush1.msra.mxu0 0.0
    %2476 = vmatprep.subr.mxu0 0.0
    %2477 = vmatpush1.msra.mxu0 0.0
    %2478 = vmatprep.subr.mxu0 0.0
    %2479 = vmatpush1.msra.mxu0 0.0
    %2480 = vmatprep.subr.mxu0 0.0
    %2481 = vmatpush1.msra.mxu0 0.0
    %2482 = vmatprep.subr.mxu0 0.0
    %2483 = vmatpush1.msra.mxu0 0.0
    %2484 = vmatprep.subr.mxu0 0.0
    %2485 = vmatpush1.msra.mxu0 0.0
    %2486 = vmatprep.subr.mxu0 0.0
    %2487 = vmatpush1.msra.mxu0 0.0
    %2488 = vmatprep.subr.mxu0 0.0
    %2489 = vmatpush1.msra.mxu0 0.0
    %2490 = vmatprep.subr.mxu0 0.0
    %2491 = vmatpush1.msra.mxu0 0.0
    %2492 = vmatprep.subr.mxu0 0.0
    %2493 = vmatpush1.msra.mxu0 0.0
    %2494 = vmatprep.subr.mxu0 0.0
    %2495 = vmatpush1.msra.mxu0 0.0
    %2496 = vmatprep.subr.mxu0 0.0
    %2497 = vmatpush1.msra.mxu0 0.0
    %2498 = vmatprep.subr.mxu0 0.0
    %2499 = vmatpush1.msra.mxu0 0.0
    %2500 = vmatprep.subr.mxu0 0.0
    %2501 = vmatpush1.msra.mxu0 0.0
    %2502 = vmatprep.subr.mxu0 0.0
    %2503 = vmatpush1.msra.mxu0 0.0
    %2504 = vmatprep.subr.mxu0 0.0
    %2505 = vmatpush1.msra.mxu0 0.0
    %2506 = vmatprep.subr.mxu0 0.0
    %2507 = vmatpush1.msra.mxu0 0.0
    %2508 = vmatprep.subr.mxu0 0.0
    %2509 = vmatpush1.msra.mxu0 0.0
    %2510 = vmatprep.subr.mxu0 0.0
    %2511 = vmatpush1.msra.mxu0 0.0
    %2512 = vmatprep.subr.mxu0 0.0
    %2513 = vmatpush1.msra.mxu0 0.0
    %2514 = vmatprep.subr.mxu0 0.0
    %2515 = vmatpush1.msra.mxu0 0.0
    %2516 = vmatprep.subr.mxu0 0.0
    %2517 = vmatpush1.msra.mxu0 0.0
    %2518 = vmatprep.subr.mxu0 0.0
    %2519 = vmatpush1.msra.mxu0 0.0
    %2520 = vmatprep.subr.mxu0 0.0
    %2521 = vmatpush1.msra.mxu0 0.0
    %2522 = vmatprep.subr.mxu0 0.0
    %2523 = vmatpush1.msra.mxu0 0.0
    %2524 = vmatprep.subr.mxu0 0.0
    %2525 = vmatpush1.msra.mxu0 0.0
    %2526 = vmatprep.mubr.f32.mxu0 0.0
    %2527 = vmatmul.mubr.f32.gmra.mrb[0].mxu0 %v2451
    %v2528 = vpop.f32.mrb[0].mxu0
    %v2529 = vadd.f32 %v2432, %v2528
    %v2530 = vpop.f32.mrb[0].mxu0
    %2531 = vmatprep.mubr.f32.mxu0 0.0
    %2532 = vmatmul.mubr.f32.gmra.mrb[0].mxu0 %v2454
    %v2533 = vpop.f32.mrb[0].mxu0
    %v2534 = vadd.f32 %v2437, %v2533
    %v2535 = vpop.f32.mrb[0].mxu0
    %2536 = vmatprep.mubr.f32.mxu0 0.0
    %2537 = vmatmul.mubr.f32.gmra.mrb[0].mxu0 %v2457
    %v2538 = vpop.f32.mrb[0].mxu0
    %v2539 = vadd.f32 %v2442, %v2538
    %v2540 = vpop.f32.mrb[0].mxu0
    %2541 = vmatprep.mubr.f32.mxu0 0.0
    %2542 = vmatmul.mubr.f32.gmra.mrb[0].mxu0 %v2460
    %v2543 = vpop.f32.mrb[0].mxu0
    %v2544 = vadd.f32 %v2447, %v2543
    %v2545 = vpop.f32.mrb[0].mxu0
    %2546 = vdwg.mxu0
    %v2547 = vld [vmem:[#allocation2 + $0x268] sm:$0x1]
    %v2548 = vlaneseq
    %v2549 = vshrl.u32 %v2548, 7
    %v2550 = vsub.s32 0, %v2549
    %v2551 = vrot.slane %v2547, %v2550
    %v2552 = vadd.f32 %v2529, %v2551
    %v2553 = vadd.f32 %v2534, %v2551
    %v2554 = vadd.f32 %v2539, %v2551
    %v2555 = vadd.f32 %v2544, %v2551
    %v2556 = vmax.f32 %v2552, 0.0
    %v2557 = vmax.f32 %v2553, 0.0
    %v2558 = vmax.f32 %v2554, 0.0
    %v2559 = vmax.f32 %v2555, 0.0
    %v2560 = vld [vmem:[#allocation2 + $0x270] sm:$0x1]
    %v2561 = vld [vmem:[#allocation2 + $0x278] sm:$0x1]
    %vm2562 = vcmask 293888
    %v2563 = vsel %vm2562, %v2556, 0.0
    %2564 = vadd.xlane.f32.xlu0 %v2563
    %v2565 = vpop.xlane.xlu0 %2564
    %v2566 = vsel %vm2562, %v2557, 0.0
    %2567 = vadd.xlane.f32.xlu0 %v2566
    %v2568 = vpop.xlane.xlu0 %2567
    %v2569 = vsel %vm2562, %v2558, 0.0
    %2570 = vadd.xlane.f32.xlu0 %v2569
    %v2571 = vpop.xlane.xlu0 %2570
    %v2572 = vsel %vm2562, %v2559, 0.0
    %2573 = vadd.xlane.f32.xlu0 %v2572
    %v2574 = vpop.xlane.xlu0 %2573
    %v2575 = vrcp.pop 36.0
    %v2576 = vmul.f32 %v2565, %v2575
    %v2577 = vmul.f32 %v2568, %v2575
    %v2578 = vmul.f32 %v2571, %v2575
    %v2579 = vmul.f32 %v2574, %v2575
    %v2580 = vsub.f32 %v2556, %v2576
    %v2581 = vsub.f32 %v2557, %v2577
    %v2582 = vsub.f32 %v2558, %v2578
    %v2583 = vsub.f32 %v2559, %v2579
    %v2584 = vmul.f32 %v2580, %v2580
    %v2585 = vmul.f32 %v2581, %v2581
    %v2586 = vmul.f32 %v2582, %v2582
    %v2587 = vmul.f32 %v2583, %v2583
    %v2588 = vsel %vm2562, %v2584, 0.0
    %2589 = vadd.xlane.f32.xlu0 %v2588
    %v2590 = vpop.xlane.xlu0 %2589
    %v2591 = vsel %vm2562, %v2585, 0.0
    %2592 = vadd.xlane.f32.xlu0 %v2591
    %v2593 = vpop.xlane.xlu0 %2592
    %v2594 = vsel %vm2562, %v2586, 0.0
    %2595 = vadd.xlane.f32.xlu0 %v2594
    %v2596 = vpop.xlane.xlu0 %2595
    %v2597 = vsel %vm2562, %v2587, 0.0
    %2598 = vadd.xlane.f32.xlu0 %v2597
    %v2599 = vpop.xlane.xlu0 %2598
    %v2600 = vmul.f32 %v2590, %v2575
    %v2601 = vmul.f32 %v2593, %v2575
    %v2602 = vmul.f32 %v2596, %v2575
    %v2603 = vmul.f32 %v2599, %v2575
    %v2604 = vadd.f32 %v2600, 1e-05
    %v2605 = vadd.f32 %v2601, 1e-05
    %v2606 = vadd.f32 %v2602, 1e-05
    %v2607 = vadd.f32 %v2603, 1e-05
    %v2608 = vrsqrt.pop %v2604
    %v2609 = vrsqrt.pop %v2605
    %v2610 = vrsqrt.pop %v2606
    %v2611 = vrsqrt.pop %v2607
    %v2612 = vmul.f32 %v2580, %v2608
    %v2613 = vmul.f32 %v2581, %v2609
    %v2614 = vmul.f32 %v2582, %v2610
    %v2615 = vmul.f32 %v2583, %v2611
    %v2616 = vlaneseq
    %v2617 = vshrl.u32 %v2616, 7
    %v2618 = vsub.s32 0, %v2617
    %v2619 = vrot.slane %v2560, %v2618
    %v2620 = vmul.f32 %v2612, %v2619
    %v2621 = vmul.f32 %v2613, %v2619
    %v2622 = vmul.f32 %v2614, %v2619
    %v2623 = vmul.f32 %v2615, %v2619
    %v2624 = vlaneseq
    %v2625 = vshrl.u32 %v2624, 7
    %v2626 = vsub.s32 0, %v2625
    %v2627 = vrot.slane %v2561, %v2626
    %v2628 = vadd.f32 %v2620, %v2627
    %v2629 = vadd.f32 %v2621, %v2627
    %v2630 = vadd.f32 %v2622, %v2627
    %v2631 = vadd.f32 %v2623, %v2627
    %v2632 = vld [vmem:[#allocation2 + $0x280] sm:$0xff]
    %v2633 = vld [vmem:[#allocation2 + $0x288] sm:$0xff]
    %v2634 = vld [vmem:[#allocation2 + $0x290] sm:$0xff]
    %v2635 = vld [vmem:[#allocation2 + $0x298] sm:$0xff]
    %v2636 = vld [vmem:[#allocation2 + $0x2a0] sm:$0xf]
    %v2637 = vld [vmem:[#allocation2 + $0x2a8] sm:$0x1]
    %v2638 = vlaneseq
    %v2639 = vshrl.u32 %v2638, 7
    %v2640 = vsub.s32 0, %v2639
    %v2641 = vrot.slane %v2637, %v2640
    %v2643 = vsel %vm2562, %v2628, 0
    %v2646 = vsel %vm2562, %v2629, 0
    %v2649 = vsel %vm2562, %v2630, 0
    %v2652 = vsel %vm2562, %v2631, 0
    %v2655 = vsel %vm1559, %v2636, 0
    %2657 = vmatprep.subr.mxu0 0.0
    %2658 = vmatpush1.msra.mxu0 %v2632
    %2659 = vmatprep.subr.mxu0 0.0
    %2660 = vmatpush1.msra.mxu0 %v2633
    %2661 = vmatprep.subr.mxu0 0.0
    %2662 = vmatpush1.msra.mxu0 %v2634
    %2663 = vmatprep.subr.mxu0 0.0
    %2664 = vmatpush1.msra.mxu0 %v2635
    %2665 = vmatprep.subr.mxu0 0.0
    %2666 = vmatpush1.msra.mxu0 %v2655
    %2667 = vmatprep.subr.mxu0 0.0
    %2668 = vmatpush1.msra.mxu0 0.0
    %2669 = vmatprep.subr.mxu0 0.0
    %2670 = vmatpush1.msra.mxu0 0.0
    %2671 = vmatprep.subr.mxu0 0.0
    %2672 = vmatpush1.msra.mxu0 0.0
    %2673 = vmatprep.subr.mxu0 0.0
    %2674 = vmatpush1.msra.mxu0 0.0
    %2675 = vmatprep.subr.mxu0 0.0
    %2676 = vmatpush1.msra.mxu0 0.0
    %2677 = vmatprep.subr.mxu0 0.0
    %2678 = vmatpush1.msra.mxu0 0.0
    %2679 = vmatprep.subr.mxu0 0.0
    %2680 = vmatpush1.msra.mxu0 0.0
    %2681 = vmatprep.subr.mxu0 0.0
    %2682 = vmatpush1.msra.mxu0 0.0
    %2683 = vmatprep.subr.mxu0 0.0
    %2684 = vmatpush1.msra.mxu0 0.0
    %2685 = vmatprep.subr.mxu0 0.0
    %2686 = vmatpush1.msra.mxu0 0.0
    %2687 = vmatprep.subr.mxu0 0.0
    %2688 = vmatpush1.msra.mxu0 0.0
    %2689 = vmatprep.subr.mxu0 0.0
    %2690 = vmatpush1.msra.mxu0 0.0
    %2691 = vmatprep.subr.mxu0 0.0
    %2692 = vmatpush1.msra.mxu0 0.0
    %2693 = vmatprep.subr.mxu0 0.0
    %2694 = vmatpush1.msra.mxu0 0.0
    %2695 = vmatprep.subr.mxu0 0.0
    %2696 = vmatpush1.msra.mxu0 0.0
    %2697 = vmatprep.subr.mxu0 0.0
    %2698 = vmatpush1.msra.mxu0 0.0
    %2699 = vmatprep.subr.mxu0 0.0
    %2700 = vmatpush1.msra.mxu0 0.0
    %2701 = vmatprep.subr.mxu0 0.0
    %2702 = vmatpush1.msra.mxu0 0.0
    %2703 = vmatprep.subr.mxu0 0.0
    %2704 = vmatpush1.msra.mxu0 0.0
    %2705 = vmatprep.subr.mxu0 0.0
    %2706 = vmatpush1.msra.mxu0 0.0
    %2707 = vmatprep.subr.mxu0 0.0
    %2708 = vmatpush1.msra.mxu0 0.0
    %2709 = vmatprep.subr.mxu0 0.0
    %2710 = vmatpush1.msra.mxu0 0.0
    %2711 = vmatprep.subr.mxu0 0.0
    %2712 = vmatpush1.msra.mxu0 0.0
    %2713 = vmatprep.subr.mxu0 0.0
    %2714 = vmatpush1.msra.mxu0 0.0
    %2715 = vmatprep.subr.mxu0 0.0
    %2716 = vmatpush1.msra.mxu0 0.0
    %2717 = vmatprep.subr.mxu0 0.0
    %2718 = vmatpush1.msra.mxu0 0.0
    %2719 = vmatprep.subr.mxu0 0.0
    %2720 = vmatpush1.msra.mxu0 0.0
    %2721 = vmatprep.mubr.f32.mxu0 0.0
    %2722 = vmatmul.mubr.f32.gmra.mrb[0].mxu0 %v2643
    %v2723 = vpop.f32.mrb[0].mxu0
    %v2724 = vadd.f32 %v2641, %v2723
    %v2725 = vpop.f32.mrb[0].mxu0
    %2726 = vmatprep.mubr.f32.mxu0 0.0
    %2727 = vmatmul.mubr.f32.gmra.mrb[0].mxu0 %v2646
    %v2728 = vpop.f32.mrb[0].mxu0
    %v2729 = vadd.f32 %v2641, %v2728
    %v2730 = vpop.f32.mrb[0].mxu0
    %2731 = vmatprep.mubr.f32.mxu0 0.0
    %2732 = vmatmul.mubr.f32.gmra.mrb[0].mxu0 %v2649
    %v2733 = vpop.f32.mrb[0].mxu0
    %v2734 = vadd.f32 %v2641, %v2733
    %v2735 = vpop.f32.mrb[0].mxu0
    %2736 = vmatprep.mubr.f32.mxu0 0.0
    %2737 = vmatmul.mubr.f32.gmra.mrb[0].mxu0 %v2652
    %v2738 = vpop.f32.mrb[0].mxu0
    %v2739 = vadd.f32 %v2641, %v2738
    %v2740 = vpop.f32.mrb[0].mxu0
    %2741 = vdwg.mxu0
    %v2742 = vld [vmem:[#allocation2 + $0x2b0] sm:$0xff]
    %v2743 = vld [vmem:[#allocation2 + $0x2b8] sm:$0xff]
    %v2744 = vld [vmem:[#allocation2 + $0x2c0] sm:$0xff]
    %v2745 = vld [vmem:[#allocation2 + $0x2c8] sm:$0xff]
    %v2746 = vld [vmem:[#allocation2 + $0x2d0] sm:$0x1]
    %v2747 = vlaneseq
    %v2748 = vshrl.u32 %v2747, 7
    %v2749 = vsub.s32 0, %v2748
    %v2750 = vrot.slane %v2746, %v2749
    %v2752 = vsel %vm207, %v2724, 0
    %v2755 = vsel %vm207, %v2729, 0
    %v2758 = vsel %vm207, %v2734, 0
    %v2761 = vsel %vm207, %v2739, 0
    %2763 = vmatprep.subr.mxu0 0.0
    %2764 = vmatpush1.msra.mxu0 %v2742
    %2765 = vmatprep.subr.mxu0 0.0
    %2766 = vmatpush1.msra.mxu0 %v2743
    %2767 = vmatprep.subr.mxu0 0.0
    %2768 = vmatpush1.msra.mxu0 %v2744
    %2769 = vmatprep.subr.mxu0 0.0
    %2770 = vmatpush1.msra.mxu0 %v2745
    %2771 = vmatprep.subr.mxu0 0.0
    %2772 = vmatpush1.msra.mxu0 0.0
    %2773 = vmatprep.subr.mxu0 0.0
    %2774 = vmatpush1.msra.mxu0 0.0
    %2775 = vmatprep.subr.mxu0 0.0
    %2776 = vmatpush1.msra.mxu0 0.0
    %2777 = vmatprep.subr.mxu0 0.0
    %2778 = vmatpush1.msra.mxu0 0.0
    %2779 = vmatprep.subr.mxu0 0.0
    %2780 = vmatpush1.msra.mxu0 0.0
    %2781 = vmatprep.subr.mxu0 0.0
    %2782 = vmatpush1.msra.mxu0 0.0
    %2783 = vmatprep.subr.mxu0 0.0
    %2784 = vmatpush1.msra.mxu0 0.0
    %2785 = vmatprep.subr.mxu0 0.0
    %2786 = vmatpush1.msra.mxu0 0.0
    %2787 = vmatprep.subr.mxu0 0.0
    %2788 = vmatpush1.msra.mxu0 0.0
    %2789 = vmatprep.subr.mxu0 0.0
    %2790 = vmatpush1.msra.mxu0 0.0
    %2791 = vmatprep.subr.mxu0 0.0
    %2792 = vmatpush1.msra.mxu0 0.0
    %2793 = vmatprep.subr.mxu0 0.0
    %2794 = vmatpush1.msra.mxu0 0.0
    %2795 = vmatprep.subr.mxu0 0.0
    %2796 = vmatpush1.msra.mxu0 0.0
    %2797 = vmatprep.subr.mxu0 0.0
    %2798 = vmatpush1.msra.mxu0 0.0
    %2799 = vmatprep.subr.mxu0 0.0
    %2800 = vmatpush1.msra.mxu0 0.0
    %2801 = vmatprep.subr.mxu0 0.0
    %2802 = vmatpush1.msra.mxu0 0.0
    %2803 = vmatprep.subr.mxu0 0.0
    %2804 = vmatpush1.msra.mxu0 0.0
    %2805 = vmatprep.subr.mxu0 0.0
    %2806 = vmatpush1.msra.mxu0 0.0
    %2807 = vmatprep.subr.mxu0 0.0
    %2808 = vmatpush1.msra.mxu0 0.0
    %2809 = vmatprep.subr.mxu0 0.0
    %2810 = vmatpush1.msra.mxu0 0.0
    %2811 = vmatprep.subr.mxu0 0.0
    %2812 = vmatpush1.msra.mxu0 0.0
    %2813 = vmatprep.subr.mxu0 0.0
    %2814 = vmatpush1.msra.mxu0 0.0
    %2815 = vmatprep.subr.mxu0 0.0
    %2816 = vmatpush1.msra.mxu0 0.0
    %2817 = vmatprep.subr.mxu0 0.0
    %2818 = vmatpush1.msra.mxu0 0.0
    %2819 = vmatprep.subr.mxu0 0.0
    %2820 = vmatpush1.msra.mxu0 0.0
    %2821 = vmatprep.subr.mxu0 0.0
    %2822 = vmatpush1.msra.mxu0 0.0
    %2823 = vmatprep.subr.mxu0 0.0
    %2824 = vmatpush1.msra.mxu0 0.0
    %2825 = vmatprep.subr.mxu0 0.0
    %2826 = vmatpush1.msra.mxu0 0.0
    %2827 = vmatprep.mubr.f32.mxu0 0.0
    %2828 = vmatmul.mubr.f32.gmra.mrb[0].mxu0 %v2752
    %v2829 = vpop.f32.mrb[0].mxu0
    %v2830 = vadd.f32 %v2750, %v2829
    %v2831 = vpop.f32.mrb[0].mxu0
    %2832 = vmatprep.mubr.f32.mxu0 0.0
    %2833 = vmatmul.mubr.f32.gmra.mrb[0].mxu0 %v2755
    %v2834 = vpop.f32.mrb[0].mxu0
    %v2835 = vadd.f32 %v2750, %v2834
    %v2836 = vpop.f32.mrb[0].mxu0
    %2837 = vmatprep.mubr.f32.mxu0 0.0
    %2838 = vmatmul.mubr.f32.gmra.mrb[0].mxu0 %v2758
    %v2839 = vpop.f32.mrb[0].mxu0
    %v2840 = vadd.f32 %v2750, %v2839
    %v2841 = vpop.f32.mrb[0].mxu0
    %2842 = vmatprep.mubr.f32.mxu0 0.0
    %2843 = vmatmul.mubr.f32.gmra.mrb[0].mxu0 %v2761
    %v2844 = vpop.f32.mrb[0].mxu0
    %v2845 = vadd.f32 %v2750, %v2844
    %v2846 = vpop.f32.mrb[0].mxu0
    %2847 = vdwg.mxu0
    %v2848 = vmax.f32 %v2830, 0.0
    %v2849 = vmax.f32 %v2835, 0.0
    %v2850 = vmax.f32 %v2840, 0.0
    %v2851 = vmax.f32 %v2845, 0.0
    %v2852 = vld [vmem:[#allocation2 + $0x2d8] sm:$0x1]
    %v2853 = vld [vmem:[#allocation2 + $0x2e0] sm:$0x1]
    %v2855 = vsel %vm207, %v2848, 0
    %v2858 = vsel %vm207, %v2849, 0
    %v2861 = vsel %vm207, %v2850, 0
    %v2864 = vsel %vm207, %v2851, 0
    %2866 = vmatprep.subr.mxu0 0.0
    %2867 = vmatpush1.msra.mxu0 %v699
    %2868 = vmatprep.subr.mxu0 0.0
    %2869 = vmatpush1.msra.mxu0 %v700
    %2870 = vmatprep.subr.mxu0 0.0
    %2871 = vmatpush1.msra.mxu0 %v701
    %2872 = vmatprep.subr.mxu0 0.0
    %2873 = vmatpush1.msra.mxu0 %v702
    %2874 = vmatprep.subr.mxu0 0.0
    %2875 = vmatpush1.msra.mxu0 0.0
    %2876 = vmatprep.subr.mxu0 0.0
    %2877 = vmatpush1.msra.mxu0 0.0
    %2878 = vmatprep.subr.mxu0 0.0
    %2879 = vmatpush1.msra.mxu0 0.0
    %2880 = vmatprep.subr.mxu0 0.0
    %2881 = vmatpush1.msra.mxu0 0.0
    %2882 = vmatprep.subr.mxu0 0.0
    %2883 = vmatpush1.msra.mxu0 0.0
    %2884 = vmatprep.subr.mxu0 0.0
    %2885 = vmatpush1.msra.mxu0 0.0
    %2886 = vmatprep.subr.mxu0 0.0
    %2887 = vmatpush1.msra.mxu0 0.0
    %2888 = vmatprep.subr.mxu0 0.0
    %2889 = vmatpush1.msra.mxu0 0.0
    %2890 = vmatprep.subr.mxu0 0.0
    %2891 = vmatpush1.msra.mxu0 0.0
    %2892 = vmatprep.subr.mxu0 0.0
    %2893 = vmatpush1.msra.mxu0 0.0
    %2894 = vmatprep.subr.mxu0 0.0
    %2895 = vmatpush1.msra.mxu0 0.0
    %2896 = vmatprep.subr.mxu0 0.0
    %2897 = vmatpush1.msra.mxu0 0.0
    %2898 = vmatprep.subr.mxu0 0.0
    %2899 = vmatpush1.msra.mxu0 0.0
    %2900 = vmatprep.subr.mxu0 0.0
    %2901 = vmatpush1.msra.mxu0 0.0
    %2902 = vmatprep.subr.mxu0 0.0
    %2903 = vmatpush1.msra.mxu0 0.0
    %2904 = vmatprep.subr.mxu0 0.0
    %2905 = vmatpush1.msra.mxu0 0.0
    %2906 = vmatprep.subr.mxu0 0.0
    %2907 = vmatpush1.msra.mxu0 0.0
    %2908 = vmatprep.subr.mxu0 0.0
    %2909 = vmatpush1.msra.mxu0 0.0
    %2910 = vmatprep.subr.mxu0 0.0
    %2911 = vmatpush1.msra.mxu0 0.0
    %2912 = vmatprep.subr.mxu0 0.0
    %2913 = vmatpush1.msra.mxu0 0.0
    %2914 = vmatprep.subr.mxu0 0.0
    %2915 = vmatpush1.msra.mxu0 0.0
    %2916 = vmatprep.subr.mxu0 0.0
    %2917 = vmatpush1.msra.mxu0 0.0
    %2918 = vmatprep.subr.mxu0 0.0
    %2919 = vmatpush1.msra.mxu0 0.0
    %2920 = vmatprep.subr.mxu0 0.0
    %2921 = vmatpush1.msra.mxu0 0.0
    %2922 = vmatprep.subr.mxu0 0.0
    %2923 = vmatpush1.msra.mxu0 0.0
    %2924 = vmatprep.subr.mxu0 0.0
    %2925 = vmatpush1.msra.mxu0 0.0
    %2926 = vmatprep.subr.mxu0 0.0
    %2927 = vmatpush1.msra.mxu0 0.0
    %2928 = vmatprep.subr.mxu0 0.0
    %2929 = vmatpush1.msra.mxu0 0.0
    %2930 = vmatprep.mubr.f32.mxu0 0.0
    %2931 = vmatmul.mubr.f32.gmra.mrb[0].mxu0 %v2855
    %v2932 = vpop.f32.mrb[0].mxu0
    %v2933 = vadd.f32 0.0, %v2932
    %v2934 = vpop.f32.mrb[0].mxu0
    %2935 = vmatprep.mubr.f32.mxu0 0.0
    %2936 = vmatmul.mubr.f32.gmra.mrb[0].mxu0 %v2858
    %v2937 = vpop.f32.mrb[0].mxu0
    %v2938 = vadd.f32 0.0, %v2937
    %v2939 = vpop.f32.mrb[0].mxu0
    %2940 = vmatprep.mubr.f32.mxu0 0.0
    %2941 = vmatmul.mubr.f32.gmra.mrb[0].mxu0 %v2861
    %v2942 = vpop.f32.mrb[0].mxu0
    %v2943 = vadd.f32 0.0, %v2942
    %v2944 = vpop.f32.mrb[0].mxu0
    %2945 = vmatprep.mubr.f32.mxu0 0.0
    %2946 = vmatmul.mubr.f32.gmra.mrb[0].mxu0 %v2864
    %v2947 = vpop.f32.mrb[0].mxu0
    %v2948 = vadd.f32 0.0, %v2947
    %v2949 = vpop.f32.mrb[0].mxu0
    %2950 = vdwg.mxu0
    %v2951 = vsub.f32 %v2848, %v2933
    %v2952 = vsub.f32 %v2849, %v2938
    %v2953 = vsub.f32 %v2850, %v2943
    %v2954 = vsub.f32 %v2851, %v2948
    %v2955 = vmul.f32 %v2951, %v2951
    %v2956 = vmul.f32 %v2952, %v2952
    %v2957 = vmul.f32 %v2953, %v2953
    %v2958 = vmul.f32 %v2954, %v2954
    %v2960 = vsel %vm207, %v2955, 0
    %v2963 = vsel %vm207, %v2956, 0
    %v2966 = vsel %vm207, %v2957, 0
    %v2969 = vsel %vm207, %v2958, 0
    %2971 = vmatprep.subr.mxu0 0.0
    %2972 = vmatpush1.msra.mxu0 %v699
    %2973 = vmatprep.subr.mxu0 0.0
    %2974 = vmatpush1.msra.mxu0 %v700
    %2975 = vmatprep.subr.mxu0 0.0
    %2976 = vmatpush1.msra.mxu0 %v701
    %2977 = vmatprep.subr.mxu0 0.0
    %2978 = vmatpush1.msra.mxu0 %v702
    %2979 = vmatprep.subr.mxu0 0.0
    %2980 = vmatpush1.msra.mxu0 0.0
    %2981 = vmatprep.subr.mxu0 0.0
    %2982 = vmatpush1.msra.mxu0 0.0
    %2983 = vmatprep.subr.mxu0 0.0
    %2984 = vmatpush1.msra.mxu0 0.0
    %2985 = vmatprep.subr.mxu0 0.0
    %2986 = vmatpush1.msra.mxu0 0.0
    %2987 = vmatprep.subr.mxu0 0.0
    %2988 = vmatpush1.msra.mxu0 0.0
    %2989 = vmatprep.subr.mxu0 0.0
    %2990 = vmatpush1.msra.mxu0 0.0
    %2991 = vmatprep.subr.mxu0 0.0
    %2992 = vmatpush1.msra.mxu0 0.0
    %2993 = vmatprep.subr.mxu0 0.0
    %2994 = vmatpush1.msra.mxu0 0.0
    %2995 = vmatprep.subr.mxu0 0.0
    %2996 = vmatpush1.msra.mxu0 0.0
    %2997 = vmatprep.subr.mxu0 0.0
    %2998 = vmatpush1.msra.mxu0 0.0
    %2999 = vmatprep.subr.mxu0 0.0
    %3000 = vmatpush1.msra.mxu0 0.0
    %3001 = vmatprep.subr.mxu0 0.0
    %3002 = vmatpush1.msra.mxu0 0.0
    %3003 = vmatprep.subr.mxu0 0.0
    %3004 = vmatpush1.msra.mxu0 0.0
    %3005 = vmatprep.subr.mxu0 0.0
    %3006 = vmatpush1.msra.mxu0 0.0
    %3007 = vmatprep.subr.mxu0 0.0
    %3008 = vmatpush1.msra.mxu0 0.0
    %3009 = vmatprep.subr.mxu0 0.0
    %3010 = vmatpush1.msra.mxu0 0.0
    %3011 = vmatprep.subr.mxu0 0.0
    %3012 = vmatpush1.msra.mxu0 0.0
    %3013 = vmatprep.subr.mxu0 0.0
    %3014 = vmatpush1.msra.mxu0 0.0
    %3015 = vmatprep.subr.mxu0 0.0
    %3016 = vmatpush1.msra.mxu0 0.0
    %3017 = vmatprep.subr.mxu0 0.0
    %3018 = vmatpush1.msra.mxu0 0.0
    %3019 = vmatprep.subr.mxu0 0.0
    %3020 = vmatpush1.msra.mxu0 0.0
    %3021 = vmatprep.subr.mxu0 0.0
    %3022 = vmatpush1.msra.mxu0 0.0
    %3023 = vmatprep.subr.mxu0 0.0
    %3024 = vmatpush1.msra.mxu0 0.0
    %3025 = vmatprep.subr.mxu0 0.0
    %3026 = vmatpush1.msra.mxu0 0.0
    %3027 = vmatprep.subr.mxu0 0.0
    %3028 = vmatpush1.msra.mxu0 0.0
    %3029 = vmatprep.subr.mxu0 0.0
    %3030 = vmatpush1.msra.mxu0 0.0
    %3031 = vmatprep.subr.mxu0 0.0
    %3032 = vmatpush1.msra.mxu0 0.0
    %3033 = vmatprep.subr.mxu0 0.0
    %3034 = vmatpush1.msra.mxu0 0.0
    %3035 = vmatprep.mubr.f32.mxu0 0.0
    %3036 = vmatmul.mubr.f32.gmra.mrb[0].mxu0 %v2960
    %v3037 = vpop.f32.mrb[0].mxu0
    %v3038 = vadd.f32 1e-05, %v3037
    %v3039 = vpop.f32.mrb[0].mxu0
    %3040 = vmatprep.mubr.f32.mxu0 0.0
    %3041 = vmatmul.mubr.f32.gmra.mrb[0].mxu0 %v2963
    %v3042 = vpop.f32.mrb[0].mxu0
    %v3043 = vadd.f32 1e-05, %v3042
    %v3044 = vpop.f32.mrb[0].mxu0
    %3045 = vmatprep.mubr.f32.mxu0 0.0
    %3046 = vmatmul.mubr.f32.gmra.mrb[0].mxu0 %v2966
    %v3047 = vpop.f32.mrb[0].mxu0
    %v3048 = vadd.f32 1e-05, %v3047
    %v3049 = vpop.f32.mrb[0].mxu0
    %3050 = vmatprep.mubr.f32.mxu0 0.0
    %3051 = vmatmul.mubr.f32.gmra.mrb[0].mxu0 %v2969
    %v3052 = vpop.f32.mrb[0].mxu0
    %v3053 = vadd.f32 1e-05, %v3052
    %v3054 = vpop.f32.mrb[0].mxu0
    %3055 = vdwg.mxu0
    %v3056 = vrsqrt.pop %v3038
    %v3057 = vrsqrt.pop %v3043
    %v3058 = vrsqrt.pop %v3048
    %v3059 = vrsqrt.pop %v3053
    %v3060 = vmul.f32 %v2951, %v3056
    %v3061 = vmul.f32 %v2952, %v3057
    %v3062 = vmul.f32 %v2953, %v3058
    %v3063 = vmul.f32 %v2954, %v3059
    %v3064 = vlaneseq
    %v3065 = vshrl.u32 %v3064, 7
    %v3066 = vsub.s32 0, %v3065
    %v3067 = vrot.slane %v2852, %v3066
    %v3068 = vmul.f32 %v3060, %v3067
    %v3069 = vmul.f32 %v3061, %v3067
    %v3070 = vmul.f32 %v3062, %v3067
    %v3071 = vmul.f32 %v3063, %v3067
    %v3072 = vlaneseq
    %v3073 = vshrl.u32 %v3072, 7
    %v3074 = vsub.s32 0, %v3073
    %v3075 = vrot.slane %v2853, %v3074
    %v3076 = vadd.f32 %v3068, %v3075
    %v3077 = vadd.f32 %v3069, %v3075
    %v3078 = vadd.f32 %v3070, %v3075
    %v3079 = vadd.f32 %v3071, %v3075
    %v3080 = vld [vmem:[#allocation2 + $0x2e8] sm:$0xff]
    %v3081 = vld [vmem:[#allocation2 + $0x2f0] sm:$0xff]
    %v3082 = vld [vmem:[#allocation2 + $0x2f8] sm:$0xff]
    %v3083 = vld [vmem:[#allocation2 + $0x300] sm:$0xff]
    %v3084 = vld [vmem:[#allocation2 + $0x308] sm:$0x1]
    %v3085 = vlaneseq
    %v3086 = vshrl.u32 %v3085, 7
    %v3087 = vsub.s32 0, %v3086
    %v3088 = vrot.slane %v3084, %v3087
    %v3090 = vsel %vm207, %v3076, 0
    %v3093 = vsel %vm207, %v3077, 0
    %v3096 = vsel %vm207, %v3078, 0
    %v3099 = vsel %vm207, %v3079, 0
    %3101 = vmatprep.subr.mxu0 0.0
    %3102 = vmatpush1.msra.mxu0 %v3080
    %3103 = vmatprep.subr.mxu0 0.0
    %3104 = vmatpush1.msra.mxu0 %v3081
    %3105 = vmatprep.subr.mxu0 0.0
    %3106 = vmatpush1.msra.mxu0 %v3082
    %3107 = vmatprep.subr.mxu0 0.0
    %3108 = vmatpush1.msra.mxu0 %v3083
    %3109 = vmatprep.subr.mxu0 0.0
    %3110 = vmatpush1.msra.mxu0 0.0
    %3111 = vmatprep.subr.mxu0 0.0
    %3112 = vmatpush1.msra.mxu0 0.0
    %3113 = vmatprep.subr.mxu0 0.0
    %3114 = vmatpush1.msra.mxu0 0.0
    %3115 = vmatprep.subr.mxu0 0.0
    %3116 = vmatpush1.msra.mxu0 0.0
    %3117 = vmatprep.subr.mxu0 0.0
    %3118 = vmatpush1.msra.mxu0 0.0
    %3119 = vmatprep.subr.mxu0 0.0
    %3120 = vmatpush1.msra.mxu0 0.0
    %3121 = vmatprep.subr.mxu0 0.0
    %3122 = vmatpush1.msra.mxu0 0.0
    %3123 = vmatprep.subr.mxu0 0.0
    %3124 = vmatpush1.msra.mxu0 0.0
    %3125 = vmatprep.subr.mxu0 0.0
    %3126 = vmatpush1.msra.mxu0 0.0
    %3127 = vmatprep.subr.mxu0 0.0
    %3128 = vmatpush1.msra.mxu0 0.0
    %3129 = vmatprep.subr.mxu0 0.0
    %3130 = vmatpush1.msra.mxu0 0.0
    %3131 = vmatprep.subr.mxu0 0.0
    %3132 = vmatpush1.msra.mxu0 0.0
    %3133 = vmatprep.subr.mxu0 0.0
    %3134 = vmatpush1.msra.mxu0 0.0
    %3135 = vmatprep.subr.mxu0 0.0
    %3136 = vmatpush1.msra.mxu0 0.0
    %3137 = vmatprep.subr.mxu0 0.0
    %3138 = vmatpush1.msra.mxu0 0.0
    %3139 = vmatprep.subr.mxu0 0.0
    %3140 = vmatpush1.msra.mxu0 0.0
    %3141 = vmatprep.subr.mxu0 0.0
    %3142 = vmatpush1.msra.mxu0 0.0
    %3143 = vmatprep.subr.mxu0 0.0
    %3144 = vmatpush1.msra.mxu0 0.0
    %3145 = vmatprep.subr.mxu0 0.0
    %3146 = vmatpush1.msra.mxu0 0.0
    %3147 = vmatprep.subr.mxu0 0.0
    %3148 = vmatpush1.msra.mxu0 0.0
    %3149 = vmatprep.subr.mxu0 0.0
    %3150 = vmatpush1.msra.mxu0 0.0
    %3151 = vmatprep.subr.mxu0 0.0
    %3152 = vmatpush1.msra.mxu0 0.0
    %3153 = vmatprep.subr.mxu0 0.0
    %3154 = vmatpush1.msra.mxu0 0.0
    %3155 = vmatprep.subr.mxu0 0.0
    %3156 = vmatpush1.msra.mxu0 0.0
    %3157 = vmatprep.subr.mxu0 0.0
    %3158 = vmatpush1.msra.mxu0 0.0
    %3159 = vmatprep.subr.mxu0 0.0
    %3160 = vmatpush1.msra.mxu0 0.0
    %3161 = vmatprep.subr.mxu0 0.0
    %3162 = vmatpush1.msra.mxu0 0.0
    %3163 = vmatprep.subr.mxu0 0.0
    %3164 = vmatpush1.msra.mxu0 0.0
    %3165 = vmatprep.mubr.f32.mxu0 0.0
    %3166 = vmatmul.mubr.f32.gmra.mrb[0].mxu0 %v3090
    %v3167 = vpop.f32.mrb[0].mxu0
    %v3168 = vadd.f32 %v3088, %v3167
    %v3169 = vpop.f32.mrb[0].mxu0
    %3170 = vmatprep.mubr.f32.mxu0 0.0
    %3171 = vmatmul.mubr.f32.gmra.mrb[0].mxu0 %v3093
    %v3172 = vpop.f32.mrb[0].mxu0
    %v3173 = vadd.f32 %v3088, %v3172
    %v3174 = vpop.f32.mrb[0].mxu0
    %3175 = vmatprep.mubr.f32.mxu0 0.0
    %3176 = vmatmul.mubr.f32.gmra.mrb[0].mxu0 %v3096
    %v3177 = vpop.f32.mrb[0].mxu0
    %v3178 = vadd.f32 %v3088, %v3177
    %v3179 = vpop.f32.mrb[0].mxu0
    %3180 = vmatprep.mubr.f32.mxu0 0.0
    %3181 = vmatmul.mubr.f32.gmra.mrb[0].mxu0 %v3099
    %v3182 = vpop.f32.mrb[0].mxu0
    %v3183 = vadd.f32 %v3088, %v3182
    %v3184 = vpop.f32.mrb[0].mxu0
    %3185 = vdwg.mxu0
    %v3186 = vxor.u32 %v3168, 2147483648
    %v3187 = vxor.u32 %v3173, 2147483648
    %v3188 = vxor.u32 %v3178, 2147483648
    %v3189 = vxor.u32 %v3183, 2147483648
    %v3190 = vmul.f32 %v3186, 1.442695
    %v3191 = vpow.pop %v3190
    %v3192 = vmul.f32 %v3187, 1.442695
    %v3193 = vpow.pop %v3192
    %v3194 = vmul.f32 %v3188, 1.442695
    %v3195 = vpow.pop %v3194
    %v3196 = vmul.f32 %v3189, 1.442695
    %v3197 = vpow.pop %v3196
    %v3198 = vadd.f32 %v3191, 1.0
    %v3199 = vadd.f32 %v3193, 1.0
    %v3200 = vadd.f32 %v3195, 1.0
    %v3201 = vadd.f32 %v3197, 1.0
    %v3202 = vrcp.pop %v3198
    %v3203 = vmul.f32 1.0, %v3202
    %v3204 = vrcp.pop %v3199
    %v3205 = vmul.f32 1.0, %v3204
    %v3206 = vrcp.pop %v3200
    %v3207 = vmul.f32 1.0, %v3206
    %v3208 = vrcp.pop %v3201
    %v3209 = vmul.f32 1.0, %v3208
    %3210 = vst [vmem:[%s2] sm:$0xff] 0.0
    %3211 = vst [vmem:[%s2 + $0x8] sm:$0xff] 0.0
    %3212 = vst [vmem:[%s2 + $0x10] sm:$0xff] 0.0
    %3213 = vst [vmem:[%s2 + $0x18] sm:$0xff] 0.0
    %3214 = vst.msk [vmem:[%s2] sm:$0xff] %vm709, %v3203
    %3215 = vst.msk [vmem:[%s2 + $0x8] sm:$0xff] %vm709, %v3205
    %3216 = vst.msk [vmem:[%s2 + $0x10] sm:$0xff] %vm709, %v3207
    %3217 = vst.msk [vmem:[%s2 + $0x18] sm:$0xff] %vm709, %v3209
    %3220 = vrot.lane.b32.xlu0 %v691, 8
    %v3221 = vpop.permute.xlu0 %3220
    %3222 = vrot.lane.b32.xlu0 %v696, 8
    %v3223 = vpop.permute.xlu0 %3222
    %vm3226 = vcmask 195648
    %3227 = vst.msk [vmem:[%s2] sm:$0xff] %vm3226, %v3221
    %3228 = vst.msk [vmem:[%s2 + $0x8] sm:$0xff] %vm3226, %v3223
    %3229 = vrot.lane.b32.xlu0 %v2064, 24
    %v3230 = vpop.permute.xlu0 %3229
    %vm3232 = vcmask 320704
    %3233 = vst.msk [vmem:[%s2] sm:$0x3] %vm3232, %v3230
    %3234 = vrot.lane.b32.xlu0 %v610, 40
    %v3235 = vpop.permute.xlu0 %3234
    %3236 = vrot.lane.b32.xlu0 %v615, 40
    %v3237 = vpop.permute.xlu0 %3236
    %vm3240 = vcmask 392512
    %3241 = vst.msk [vmem:[%s2] sm:$0xff] %vm3240, %v3235
    %3242 = vst.msk [vmem:[%s2 + $0x8] sm:$0xff] %vm3240, %v3237
    %vm3243 = vcmask 458112
    %3244 = vst.msk [vmem:[%s2] sm:$0xff] %vm3243, %v3235
    %3245 = vst.msk [vmem:[%s2 + $0x8] sm:$0xff] %vm3243, %v3237
    // Predicated region
    $region14: #{joint_autoencoder_forward.1} parent=1 // pred_check
      _
    $region15: #{joint_autoencoder_forward.1} parent=1 // pred_check_branch
      %3247 = sbr.rel (0) target = $region17
    $region16: #{joint_autoencoder_forward.1} parent=1 // pred_region
      _
    $region17: #{joint_autoencoder_forward.1} parent=1 // pred_fallthru
      _
    // Predicated region
    $region18: #{joint_autoencoder_forward.1} parent=1 // pred_check
      _
    $region19: #{joint_autoencoder_forward.1} parent=1 // pred_check_branch
      %3249 = sbr.rel (0) target = $region21
    $region20: #{joint_autoencoder_forward.1} parent=1 // pred_region
      _
    $region21: #{joint_autoencoder_forward.1} parent=1 // pred_fallthru
      _
    %3250 = vsyncpa [#allocation3], 1

</llo_original>
